<compile_context>
chip_gen: v6e
topology: v6e:2x2x1
jax: 0.10.0
libtpu: 0.0.40
codegen_flags: <defaults>
</compile_context>

<pallas_src>
import functools

import jax
import jax.numpy as jnp
from jax.experimental import pallas as pl
from jax.experimental.pallas import tpu as pltpu


_LANE = 128
_TAPS_3X3 = [(dy, dx) for dy in range(3) for dx in range(3)]


# ------------------------------ small helpers ---------------------------------

def _round_up(x, m):
    return (x + m - 1) // m * m


def _vmem_limit_bytes():
    """Scoped-VMEM limit sized from the actual chip (64 MiB v7x, 128 MiB v5e/v6e)."""
    try:
        cap = int(pltpu.get_tpu_info().vmem_capacity_bytes)
    except Exception:
        cap = 64 * 1024 * 1024
    return max(32 * 1024 * 1024, min(cap * 3 // 4, 96 * 1024 * 1024))


def _pick_row_tile(m, cap=2048):
    """Largest row tile <= cap that divides m (multiple of 8 when tiled)."""
    if m <= cap:
        return m
    for t in range(cap - cap % 8, 7, -8):
        if m % t == 0:
            return t
    return m


def _pad_channels(x, cp):
    c = x.shape[-1]
    if c == cp:
        return x
    return jnp.pad(x, [(0, 0)] * (x.ndim - 1) + [(0, cp - c)])


# ------------------------------ Pallas kernels ---------------------------------

def _conv_taps_stats_kernel(x_ref, w_ref, y_ref, stats_ref, *, taps, hph, ho, wo):
    """Direct conv as a static list of tap matmuls + fused per-channel BN stats.

    x_ref:     (1, P*Hph, Wph, Cp)  bf16  phased / halo-padded input, one image
    w_ref:     (T, Cp, Cop)         bf16  per-tap weights (VMEM resident)
    y_ref:     (1, Ho*Wo, Cop)      bf16  raw conv output
    stats_ref: (1, 2, Cop)          f32   per-image [sum, sum-of-squares]
    """
    x = x_ref[0]
    acc = None
    for t, (p, oy, ox) in enumerate(taps):
        r0 = p * hph + oy
        slab = x[r0:r0 + ho, ox:ox + wo, :]                # (Ho, Wo, Cp)
        lhs = slab.reshape(ho * wo, slab.shape[-1])
        part = jnp.dot(lhs, w_ref[t], preferred_element_type=jnp.float32)
        acc = part if acc is None else acc + part
    y_ref[0] = acc.astype(y_ref.dtype)
    stats_ref[0, 0:1, :] = jnp.sum(acc, axis=0, keepdims=True)
    stats_ref[0, 1:2, :] = jnp.sum(acc * acc, axis=0, keepdims=True)


def _conv3x3_bnrelu_stats_kernel(x_ref, w_ref, s_ref, b_ref, y_ref, stats_ref,
                                 xpad_ref, *, ho, wo):
    """3x3 / stride-1 conv with BN+ReLU of its *input* fused as a prologue.

    x_ref:    (1, Ho, Wo, Cp) bf16  raw conv1 output (pre-BN1)
    s_ref:    (1, Cp) f32           BN1 folded scale
    b_ref:    (1, Cp) f32           BN1 folded bias
    xpad_ref: VMEM (Ho+2, Wo+2, Cp) bf16 scratch — zero ring == conv padding
    """
    act = jnp.maximum(x_ref[0].astype(jnp.float32) * s_ref[...] + b_ref[...], 0.0)
    xpad_ref[...] = jnp.zeros_like(xpad_ref)
    xpad_ref[1:ho + 1, 1:wo + 1, :] = act.astype(xpad_ref.dtype)
    xp = xpad_ref[...]
    acc = None
    for t, (dy, dx) in enumerate(_TAPS_3X3):
        slab = xp[dy:dy + ho, dx:dx + wo, :]               # (Ho, Wo, Cp)
        lhs = slab.reshape(ho * wo, slab.shape[-1])
        part = jnp.dot(lhs, w_ref[t], preferred_element_type=jnp.float32)
        acc = part if acc is None else acc + part
    y_ref[0] = acc.astype(y_ref.dtype)
    stats_ref[0, 0:1, :] = jnp.sum(acc, axis=0, keepdims=True)
    stats_ref[0, 1:2, :] = jnp.sum(acc * acc, axis=0, keepdims=True)


def _bn_residual_relu_kernel(y_ref, r_ref, s_ref, b_ref, rs_ref, rb_ref, o_ref):
    """BN2(y) + BN_sc(shortcut) + residual add + ReLU in one fused pass."""
    y = y_ref[...].astype(jnp.float32) * s_ref[...] + b_ref[...]
    r = r_ref[...].astype(jnp.float32) * rs_ref[...] + rb_ref[...]
    o_ref[...] = jnp.maximum(y + r, 0.0).astype(o_ref.dtype)


# ------------------------------ Pallas wrappers ---------------------------------

def conv_taps_stats(x_ph, w_taps, *, ho, wo, hph, taps, vmem_limit):
    """Direct conv (per-tap matmuls) + fused BN statistics.  Grid over batch."""
    n = x_ph.shape[0]
    cp = x_ph.shape[-1]
    n_taps, _, cop = w_taps.shape
    m_img = ho * wo
    kern = functools.partial(_conv_taps_stats_kernel,
                             taps=taps, hph=hph, ho=ho, wo=wo)
    y, stats = pl.pallas_call(
        kern,
        out_shape=(jax.ShapeDtypeStruct((n, m_img, cop), jnp.bfloat16),
                   jax.ShapeDtypeStruct((n, 2, cop), jnp.float32)),
        grid=(n,),
        in_specs=[pl.BlockSpec((1,) + x_ph.shape[1:], lambda i: (i, 0, 0, 0)),
                  pl.BlockSpec(w_taps.shape, lambda i: (0, 0, 0))],
        out_specs=(pl.BlockSpec((1, m_img, cop), lambda i: (i, 0, 0)),
                   pl.BlockSpec((1, 2, cop), lambda i: (i, 0, 0))),
        compiler_params=pltpu.CompilerParams(
            dimension_semantics=("parallel",), vmem_limit_bytes=vmem_limit),
        cost_estimate=pl.CostEstimate(
            flops=2 * n * m_img * cp * cop * n_taps,
            transcendentals=0,
            bytes_accessed=int(x_ph.size) * 2 + int(w_taps.size) * 2
                           + n * m_img * cop * 2 + n * 2 * cop * 4),
    )(x_ph, w_taps)
    return y, jnp.sum(stats, axis=0)


def conv3x3_bnrelu_stats(x, w_taps, scale, bias, *, vmem_limit):
    """3x3/stride-1 conv with fused input BN+ReLU prologue + BN-stats epilogue."""
    n, ho, wo, cp = x.shape
    cop = w_taps.shape[-1]
    m_img = ho * wo
    kern = functools.partial(_conv3x3_bnrelu_stats_kernel, ho=ho, wo=wo)
    y, stats = pl.pallas_call(
        kern,
        out_shape=(jax.ShapeDtypeStruct((n, m_img, cop), jnp.bfloat16),
                   jax.ShapeDtypeStruct((n, 2, cop), jnp.float32)),
        grid=(n,),
        in_specs=[pl.BlockSpec((1, ho, wo, cp), lambda i: (i, 0, 0, 0)),
                  pl.BlockSpec(w_taps.shape, lambda i: (0, 0, 0)),
                  pl.BlockSpec(scale.shape, lambda i: (0, 0)),
                  pl.BlockSpec(bias.shape, lambda i: (0, 0))],
        out_specs=(pl.BlockSpec((1, m_img, cop), lambda i: (i, 0, 0)),
                   pl.BlockSpec((1, 2, cop), lambda i: (i, 0, 0))),
        scratch_shapes=[pltpu.VMEM((ho + 2, wo + 2, cp), jnp.bfloat16)],
        compiler_params=pltpu.CompilerParams(
            dimension_semantics=("parallel",), vmem_limit_bytes=vmem_limit),
        cost_estimate=pl.CostEstimate(
            flops=2 * n * m_img * cp * cop * 9,
            transcendentals=0,
            bytes_accessed=int(x.size) * 2 + int(w_taps.size) * 2
                           + n * m_img * cop * 2 + n * 2 * cop * 4),
    )(x, w_taps, scale, bias)
    return y, jnp.sum(stats, axis=0)


def bn_residual_relu(y2d, r2d, s, b, rs, rb, *, out_dtype, vmem_limit):
    m, cp = y2d.shape
    tm = _pick_row_tile(m)
    return pl.pallas_call(
        _bn_residual_relu_kernel,
        out_shape=jax.ShapeDtypeStruct((m, cp), out_dtype),
        grid=(m // tm,),
        in_specs=[pl.BlockSpec((tm, cp), lambda i: (i, 0)),
                  pl.BlockSpec((tm, cp), lambda i: (i, 0)),
                  pl.BlockSpec((1, cp), lambda i: (0, 0)),
                  pl.BlockSpec((1, cp), lambda i: (0, 0)),
                  pl.BlockSpec((1, cp), lambda i: (0, 0)),
                  pl.BlockSpec((1, cp), lambda i: (0, 0))],
        out_specs=pl.BlockSpec((tm, cp), lambda i: (i, 0)),
        compiler_params=pltpu.CompilerParams(
            dimension_semantics=("parallel",), vmem_limit_bytes=vmem_limit),
    )(y2d, r2d, s, b, rs, rb)


# --------------------------------- glue (JAX) -----------------------------------

def _conv_w_taps(w_oihw, cp_in, cp_out):
    """PyTorch (O, I, kh, kw) -> (kh*kw, Cp_in, Cp_out) bf16, tap-major order."""
    o, i, kh, kw = w_oihw.shape
    w = jnp.transpose(w_oihw, (2, 3, 1, 0)).reshape(kh * kw, i, o)
    w = jnp.pad(w, ((0, 0), (0, cp_in - i), (0, cp_out - o)))
    return w.astype(jnp.bfloat16)


def _bn_scale_bias(stats, m_true, gamma, beta, cp, eps):
    """Fold batch statistics into a per-channel affine (scale, bias)."""
    g = jnp.pad(gamma.astype(jnp.float32), (0, cp - gamma.shape[0]))
    b = jnp.pad(beta.astype(jnp.float32), (0, cp - beta.shape[0]))
    mean = stats[0] / m_true
    var = jnp.maximum(stats[1] / m_true - mean * mean, 0.0)
    scale = g * jax.lax.rsqrt(var + eps)
    bias = b - mean * scale
    return scale.reshape(1, cp), bias.reshape(1, cp)


def basic_block_forward(x_nchw, params, stride, eps=1e-5):
    n, cin, h, w = x_nchw.shape
    planes = params["w_conv1"].shape[0]
    assert stride in (1, 2)
    if stride == 2:
        assert h % 2 == 0 and w % 2 == 0

    cp_in = _round_up(cin, _LANE)
    cp_mid = _round_up(planes, _LANE)
    vmem_limit = _vmem_limit_bytes()

    ho = (h + 2 - 3) // stride + 1
    wo = (w + 2 - 3) // stride + 1
    m_true = n * ho * wo

    # NHWC, bf16, channel-padded once (NCHW <-> NHWC only at block boundaries).
    x_nhwc = jnp.transpose(x_nchw, (0, 2, 3, 1))
    x_bf = _pad_channels(x_nhwc.astype(jnp.bfloat16), cp_in)          # (N,H,W,Cp_in)

    # ---- conv1 (3x3, stride) with fused BN1 statistics ------------------------
    xp = jnp.pad(x_bf, ((0, 0), (1, 1), (1, 1), (0, 0)))              # spatial halo
    if stride == 1:
        x_ph, hph = xp, h + 2
        taps1 = [(0, dy, dx) for dy, dx in _TAPS_3X3]
    else:
        hph = ho + 1
        phases = [xp[:, py::2, px::2, :] for py in range(2) for px in range(2)]
        x_ph = jnp.stack(phases, axis=1).reshape(n, 4 * hph, wo + 1, cp_in)
        taps1 = [((dy % 2) * 2 + (dx % 2), dy // 2, dx // 2) for dy, dx in _TAPS_3X3]
    w1 = _conv_w_taps(params["w_conv1"], cp_in, cp_mid)               # (9,Cp_in,Cp_mid)
    y1, st1 = conv_taps_stats(x_ph, w1, ho=ho, wo=wo, hph=hph, taps=taps1,
                              vmem_limit=vmem_limit)
    s1, b1 = _bn_scale_bias(st1, m_true, params["g1"], params["b1"], cp_mid, eps)

    # ---- conv2 (3x3, stride 1) with BN1+ReLU fused into its input prologue ----
    y1_img = y1.reshape(n, ho, wo, cp_mid)                            # free reshape
    w2 = _conv_w_taps(params["w_conv2"], cp_mid, cp_mid)
    y2, st2 = conv3x3_bnrelu_stats(y1_img, w2, s1, b1, vmem_limit=vmem_limit)
    s2, b2 = _bn_scale_bias(st2, m_true, params["g2"], params["b2"], cp_mid, eps)

    # ---- shortcut --------------------------------------------------------------
    if stride != 1 or cin != planes:
        xs = x_bf[:, ::stride, ::stride, :]                           # (N,Ho,Wo,Cp_in)
        w_sc = _conv_w_taps(params["w_sc"], cp_in, cp_mid)            # (1,Cp_in,Cp_mid)
        rsd, st_sc = conv_taps_stats(xs, w_sc, ho=ho, wo=wo, hph=ho,
                                     taps=[(0, 0, 0)], vmem_limit=vmem_limit)
        rs, rb = _bn_scale_bias(st_sc, m_true, params["g_sc"], params["b_sc"],
                                cp_mid, eps)
        rsd2d = rsd.reshape(m_true, cp_mid)
    else:
        rsd2d = x_bf.reshape(m_true, cp_in)                           # identity, bf16
        rs = jnp.ones((1, cp_mid), jnp.float32)
        rb = jnp.zeros((1, cp_mid), jnp.float32)

    # ---- BN2(conv2) + BN_sc(shortcut) + residual add + ReLU, one fused pass ----
    out2d = bn_residual_relu(y2.reshape(m_true, cp_mid), rsd2d, s2, b2, rs, rb,
                             out_dtype=jnp.float32, vmem_limit=vmem_limit)
    out = out2d[:, :planes].reshape(n, ho, wo, planes)
    return jnp.transpose(out, (0, 3, 1, 2))


# ------------------------------ pure-JAX reference -------------------------------

def _ref_conv(x, w, stride, padding):
    return jax.lax.conv_general_dilated(
        x, w, (stride, stride), [(padding, padding)] * 2,
        dimension_numbers=("NCHW", "OIHW", "NCHW"))


def _ref_bn(x, g, b, eps=1e-5):
    mean = jnp.mean(x, axis=(0, 2, 3), keepdims=True)
    var = jnp.mean(jnp.square(x - mean), axis=(0, 2, 3), keepdims=True)
    return (x - mean) * jax.lax.rsqrt(var + eps) * g.reshape(1, -1, 1, 1) \
        + b.reshape(1, -1, 1, 1)


def ref_basic_block(x, p, stride):
    cin, planes = p["w_conv1"].shape[1], p["w_conv1"].shape[0]
    out = jax.nn.relu(_ref_bn(_ref_conv(x, p["w_conv1"], stride, 1), p["g1"], p["b1"]))
    out = _ref_bn(_ref_conv(out, p["w_conv2"], 1, 1), p["g2"], p["b2"])
    if stride != 1 or cin != planes:
        sc = _ref_bn(_ref_conv(x, p["w_sc"], stride, 0), p["g_sc"], p["b_sc"])
    else:
        sc = x
    return jax.nn.relu(out + sc)


# ------------------------------------ main ----------------------------------------

if __name__ == "__main__":
    key = jax.random.PRNGKey(0)
    N, IN_PLANES, PLANES, H, W, STRIDE = 2, 4, 8, 16, 16, 2

    ks = jax.random.split(key, 8)
    params = {
        "w_conv1": 0.1 * jax.random.normal(ks[0], (PLANES, IN_PLANES, 3, 3), jnp.float32),
        "w_conv2": 0.1 * jax.random.normal(ks[1], (PLANES, PLANES, 3, 3), jnp.float32),
        "w_sc":    0.1 * jax.random.normal(ks[2], (PLANES, IN_PLANES, 1, 1), jnp.float32),
        "g1": 1.0 + 0.1 * jax.random.normal(ks[3], (PLANES,), jnp.float32),
        "b1": 0.1 * jax.random.normal(ks[4], (PLANES,), jnp.float32),
        "g2": 1.0 + 0.1 * jax.random.normal(ks[5], (PLANES,), jnp.float32),
        "b2": 0.1 * jax.random.normal(ks[6], (PLANES,), jnp.float32),
        "g_sc": jnp.ones((PLANES,), jnp.float32),
        "b_sc": jnp.zeros((PLANES,), jnp.float32),
    }

    x = jax.random.normal(ks[7], (N, IN_PLANES, H, W), jnp.float32)

    fwd = jax.jit(functools.partial(basic_block_forward, stride=STRIDE))
    out = jax.block_until_ready(fwd(x, params))

    ref = jax.block_until_ready(ref_basic_block(x, params, STRIDE))
    assert out.shape == ref.shape == (N, PLANES, H // STRIDE, W // STRIDE)
    max_err = float(jnp.max(jnp.abs(out - ref)))
    # bf16 MXU inputs + bf16 intermediate activations (f32 accumulation) -> relaxed tol.
    assert jnp.allclose(out, ref, rtol=3e-2, atol=3e-2), f"max abs err = {max_err}"

    print("KERNEL_OK")
</pallas_src>

<mosaic_0001>
module attributes {stable_mosaic.version = 11 : i64} {
  func.func @_conv_taps_stats_kernel(%arg0: i32, %arg1: memref<1x36x9x128xbf16, #tpu.memory_space<vmem>>, %arg2: memref<9x128x128xbf16, #tpu.memory_space<vmem>>, %arg3: memref<1x64x128xbf16, #tpu.memory_space<vmem>>, %arg4: memref<1x2x128xf32, #tpu.memory_space<vmem>>) attributes {dimension_semantics = [#tpu.dimension_semantics<parallel>], iteration_bounds = array<i64: 2>, scalar_prefetch = 0 : i64, scratch_operands = 0 : i64, tpu.core_type = #tpu.core_type<tc>, window_params = [{transform_indices = @transform_0, window_bounds = array<i64: 1, 36, 9, 128>}, {pipeline_mode = #tpu.pipeline_mode<synchronous>, transform_indices = @transform_1, window_bounds = array<i64: 9, 128, 128>}, {transform_indices = @transform_2, window_bounds = array<i64: 1, 64, 128>}, {transform_indices = @transform_3, window_bounds = array<i64: 1, 2, 128>}]} {
    %c0 = arith.constant 0 : index
    %c0_0 = arith.constant 0 : index
    %c0_1 = arith.constant 0 : index
    %c0_2 = arith.constant 0 : index
    %0 = vector.load %arg1[%c0, %c0_0, %c0_1, %c0_2] : memref<1x36x9x128xbf16, #tpu.memory_space<vmem>>, vector<1x36x9x128xbf16>
    %1 = vector.shape_cast %0 : vector<1x36x9x128xbf16> to vector<36x9x128xbf16>
    %2 = vector.extract_strided_slice %1 {offsets = [0, 0, 0], sizes = [8, 8, 128], strides = [1, 1, 1]} : vector<36x9x128xbf16> to vector<8x8x128xbf16>
    %3 = vector.shape_cast %2 : vector<8x8x128xbf16> to vector<64x128xbf16>
    %c0_3 = arith.constant 0 : index
    %c0_4 = arith.constant 0 : index
    %c0_5 = arith.constant 0 : index
    %4 = vector.load %arg2[%c0_3, %c0_4, %c0_5] : memref<9x128x128xbf16, #tpu.memory_space<vmem>>, vector<1x128x128xbf16>
    %5 = vector.shape_cast %4 : vector<1x128x128xbf16> to vector<128x128xbf16>
    %cst = arith.constant dense<0.000000e+00> : vector<64x128xf32>
    %6 = tpu.matmul %3, %5, %cst {dimension_numbers = #tpu.dot_dimension_numbers<[1], [0], [0], [1], [0, 0, 1, 1], [], []>} : vector<64x128xbf16>, vector<128x128xbf16>, vector<64x128xf32> -> vector<64x128xf32>
    %7 = vector.extract_strided_slice %1 {offsets = [9, 0, 0], sizes = [8, 8, 128], strides = [1, 1, 1]} : vector<36x9x128xbf16> to vector<8x8x128xbf16>
    %8 = vector.shape_cast %7 : vector<8x8x128xbf16> to vector<64x128xbf16>
    %c1 = arith.constant 1 : index
    %c0_6 = arith.constant 0 : index
    %c0_7 = arith.constant 0 : index
    %9 = vector.load %arg2[%c1, %c0_6, %c0_7] : memref<9x128x128xbf16, #tpu.memory_space<vmem>>, vector<1x128x128xbf16>
    %10 = vector.shape_cast %9 : vector<1x128x128xbf16> to vector<128x128xbf16>
    %cst_8 = arith.constant dense<0.000000e+00> : vector<64x128xf32>
    %11 = tpu.matmul %8, %10, %cst_8 {dimension_numbers = #tpu.dot_dimension_numbers<[1], [0], [0], [1], [0, 0, 1, 1], [], []>} : vector<64x128xbf16>, vector<128x128xbf16>, vector<64x128xf32> -> vector<64x128xf32>
    %12 = arith.addf %6, %11 : vector<64x128xf32>
    %13 = vector.extract_strided_slice %1 {offsets = [0, 1, 0], sizes = [8, 8, 128], strides = [1, 1, 1]} : vector<36x9x128xbf16> to vector<8x8x128xbf16>
    %14 = vector.shape_cast %13 : vector<8x8x128xbf16> to vector<64x128xbf16>
    %c2 = arith.constant 2 : index
    %c0_9 = arith.constant 0 : index
    %c0_10 = arith.constant 0 : index
    %15 = vector.load %arg2[%c2, %c0_9, %c0_10] : memref<9x128x128xbf16, #tpu.memory_space<vmem>>, vector<1x128x128xbf16>
    %16 = vector.shape_cast %15 : vector<1x128x128xbf16> to vector<128x128xbf16>
    %cst_11 = arith.constant dense<0.000000e+00> : vector<64x128xf32>
    %17 = tpu.matmul %14, %16, %cst_11 {dimension_numbers = #tpu.dot_dimension_numbers<[1], [0], [0], [1], [0, 0, 1, 1], [], []>} : vector<64x128xbf16>, vector<128x128xbf16>, vector<64x128xf32> -> vector<64x128xf32>
    %18 = arith.addf %12, %17 : vector<64x128xf32>
    %19 = vector.extract_strided_slice %1 {offsets = [18, 0, 0], sizes = [8, 8, 128], strides = [1, 1, 1]} : vector<36x9x128xbf16> to vector<8x8x128xbf16>
    %20 = vector.shape_cast %19 : vector<8x8x128xbf16> to vector<64x128xbf16>
    %c3 = arith.constant 3 : index
    %c0_12 = arith.constant 0 : index
    %c0_13 = arith.constant 0 : index
    %21 = vector.load %arg2[%c3, %c0_12, %c0_13] : memref<9x128x128xbf16, #tpu.memory_space<vmem>>, vector<1x128x128xbf16>
    %22 = vector.shape_cast %21 : vector<1x128x128xbf16> to vector<128x128xbf16>
    %cst_14 = arith.constant dense<0.000000e+00> : vector<64x128xf32>
    %23 = tpu.matmul %20, %22, %cst_14 {dimension_numbers = #tpu.dot_dimension_numbers<[1], [0], [0], [1], [0, 0, 1, 1], [], []>} : vector<64x128xbf16>, vector<128x128xbf16>, vector<64x128xf32> -> vector<64x128xf32>
    %24 = arith.addf %18, %23 : vector<64x128xf32>
    %25 = vector.extract_strided_slice %1 {offsets = [27, 0, 0], sizes = [8, 8, 128], strides = [1, 1, 1]} : vector<36x9x128xbf16> to vector<8x8x128xbf16>
    %26 = vector.shape_cast %25 : vector<8x8x128xbf16> to vector<64x128xbf16>
    %c4 = arith.constant 4 : index
    %c0_15 = arith.constant 0 : index
    %c0_16 = arith.constant 0 : index
    %27 = vector.load %arg2[%c4, %c0_15, %c0_16] : memref<9x128x128xbf16, #tpu.memory_space<vmem>>, vector<1x128x128xbf16>
    %28 = vector.shape_cast %27 : vector<1x128x128xbf16> to vector<128x128xbf16>
    %cst_17 = arith.constant dense<0.000000e+00> : vector<64x128xf32>
    %29 = tpu.matmul %26, %28, %cst_17 {dimension_numbers = #tpu.dot_dimension_numbers<[1], [0], [0], [1], [0, 0, 1, 1], [], []>} : vector<64x128xbf16>, vector<128x128xbf16>, vector<64x128xf32> -> vector<64x128xf32>
    %30 = arith.addf %24, %29 : vector<64x128xf32>
    %31 = vector.extract_strided_slice %1 {offsets = [18, 1, 0], sizes = [8, 8, 128], strides = [1, 1, 1]} : vector<36x9x128xbf16> to vector<8x8x128xbf16>
    %32 = vector.shape_cast %31 : vector<8x8x128xbf16> to vector<64x128xbf16>
    %c5 = arith.constant 5 : index
    %c0_18 = arith.constant 0 : index
    %c0_19 = arith.constant 0 : index
    %33 = vector.load %arg2[%c5, %c0_18, %c0_19] : memref<9x128x128xbf16, #tpu.memory_space<vmem>>, vector<1x128x128xbf16>
    %34 = vector.shape_cast %33 : vector<1x128x128xbf16> to vector<128x128xbf16>
    %cst_20 = arith.constant dense<0.000000e+00> : vector<64x128xf32>
    %35 = tpu.matmul %32, %34, %cst_20 {dimension_numbers = #tpu.dot_dimension_numbers<[1], [0], [0], [1], [0, 0, 1, 1], [], []>} : vector<64x128xbf16>, vector<128x128xbf16>, vector<64x128xf32> -> vector<64x128xf32>
    %36 = arith.addf %30, %35 : vector<64x128xf32>
    %37 = vector.extract_strided_slice %1 {offsets = [1, 0, 0], sizes = [8, 8, 128], strides = [1, 1, 1]} : vector<36x9x128xbf16> to vector<8x8x128xbf16>
    %38 = vector.shape_cast %37 : vector<8x8x128xbf16> to vector<64x128xbf16>
    %c6 = arith.constant 6 : index
    %c0_21 = arith.constant 0 : index
    %c0_22 = arith.constant 0 : index
    %39 = vector.load %arg2[%c6, %c0_21, %c0_22] : memref<9x128x128xbf16, #tpu.memory_space<vmem>>, vector<1x128x128xbf16>
    %40 = vector.shape_cast %39 : vector<1x128x128xbf16> to vector<128x128xbf16>
    %cst_23 = arith.constant dense<0.000000e+00> : vector<64x128xf32>
    %41 = tpu.matmul %38, %40, %cst_23 {dimension_numbers = #tpu.dot_dimension_numbers<[1], [0], [0], [1], [0, 0, 1, 1], [], []>} : vector<64x128xbf16>, vector<128x128xbf16>, vector<64x128xf32> -> vector<64x128xf32>
    %42 = arith.addf %36, %41 : vector<64x128xf32>
    %43 = vector.extract_strided_slice %1 {offsets = [10, 0, 0], sizes = [8, 8, 128], strides = [1, 1, 1]} : vector<36x9x128xbf16> to vector<8x8x128xbf16>
    %44 = vector.shape_cast %43 : vector<8x8x128xbf16> to vector<64x128xbf16>
    %c7 = arith.constant 7 : index
    %c0_24 = arith.constant 0 : index
    %c0_25 = arith.constant 0 : index
    %45 = vector.load %arg2[%c7, %c0_24, %c0_25] : memref<9x128x128xbf16, #tpu.memory_space<vmem>>, vector<1x128x128xbf16>
    %46 = vector.shape_cast %45 : vector<1x128x128xbf16> to vector<128x128xbf16>
    %cst_26 = arith.constant dense<0.000000e+00> : vector<64x128xf32>
    %47 = tpu.matmul %44, %46, %cst_26 {dimension_numbers = #tpu.dot_dimension_numbers<[1], [0], [0], [1], [0, 0, 1, 1], [], []>} : vector<64x128xbf16>, vector<128x128xbf16>, vector<64x128xf32> -> vector<64x128xf32>
    %48 = arith.addf %42, %47 : vector<64x128xf32>
    %49 = vector.extract_strided_slice %1 {offsets = [1, 1, 0], sizes = [8, 8, 128], strides = [1, 1, 1]} : vector<36x9x128xbf16> to vector<8x8x128xbf16>
    %50 = vector.shape_cast %49 : vector<8x8x128xbf16> to vector<64x128xbf16>
    %c8 = arith.constant 8 : index
    %c0_27 = arith.constant 0 : index
    %c0_28 = arith.constant 0 : index
    %51 = vector.load %arg2[%c8, %c0_27, %c0_28] : memref<9x128x128xbf16, #tpu.memory_space<vmem>>, vector<1x128x128xbf16>
    %52 = vector.shape_cast %51 : vector<1x128x128xbf16> to vector<128x128xbf16>
    %cst_29 = arith.constant dense<0.000000e+00> : vector<64x128xf32>
    %53 = tpu.matmul %50, %52, %cst_29 {dimension_numbers = #tpu.dot_dimension_numbers<[1], [0], [0], [1], [0, 0, 1, 1], [], []>} : vector<64x128xbf16>, vector<128x128xbf16>, vector<64x128xf32> -> vector<64x128xf32>
    %54 = arith.addf %48, %53 : vector<64x128xf32>
    %55 = arith.truncf %54 : vector<64x128xf32> to vector<64x128xbf16>
    %c0_30 = arith.constant 0 : index
    %c0_31 = arith.constant 0 : index
    %c0_32 = arith.constant 0 : index
    %56 = vector.load %arg3[%c0_30, %c0_31, %c0_32] : memref<1x64x128xbf16, #tpu.memory_space<vmem>>, vector<1x64x128xbf16>
    %57 = vector.shape_cast %56 : vector<1x64x128xbf16> to vector<64x128xbf16>
    %58 = vector.shape_cast %55 : vector<64x128xbf16> to vector<1x64x128xbf16>
    tpu.vector_store %arg3[%c0_30, %c0_31, %c0_32], %58 {strides = array<i32>} : memref<1x64x128xbf16, #tpu.memory_space<vmem>>, vector<1x64x128xbf16>,
    %cst_33 = arith.constant dense<0.000000e+00> : vector<128xf32>
    %59 = vector.multi_reduction <add>, %54, %cst_33 [0] : vector<64x128xf32> to vector<128xf32>
    %60 = vector.shape_cast %59 : vector<128xf32> to vector<1x128xf32>
    %c0_34 = arith.constant 0 : index
    %c0_35 = arith.constant 0 : index
    %c0_36 = arith.constant 0 : index
    %61 = vector.load %arg4[%c0_34, %c0_35, %c0_36] : memref<1x2x128xf32, #tpu.memory_space<vmem>>, vector<1x1x128xf32>
    %62 = vector.shape_cast %61 : vector<1x1x128xf32> to vector<1x128xf32>
    %63 = vector.shape_cast %60 : vector<1x128xf32> to vector<1x1x128xf32>
    tpu.vector_store %arg4[%c0_34, %c0_35, %c0_36], %63 {strides = array<i32>} : memref<1x2x128xf32, #tpu.memory_space<vmem>>, vector<1x1x128xf32>,
    %64 = arith.mulf %54, %54 : vector<64x128xf32>
    %cst_37 = arith.constant dense<0.000000e+00> : vector<128xf32>
    %65 = vector.multi_reduction <add>, %64, %cst_37 [0] : vector<64x128xf32> to vector<128xf32>
    %66 = vector.shape_cast %65 : vector<128xf32> to vector<1x128xf32>
    %c0_38 = arith.constant 0 : index
    %c1_39 = arith.constant 1 : index
    %c0_40 = arith.constant 0 : index
    %67 = vector.load %arg4[%c0_38, %c1_39, %c0_40] : memref<1x2x128xf32, #tpu.memory_space<vmem>>, vector<1x1x128xf32>
    %68 = vector.shape_cast %67 : vector<1x1x128xf32> to vector<1x128xf32>
    %69 = vector.shape_cast %66 : vector<1x128xf32> to vector<1x1x128xf32>
    tpu.vector_store %arg4[%c0_38, %c1_39, %c0_40], %69 {strides = array<i32>} : memref<1x2x128xf32, #tpu.memory_space<vmem>>, vector<1x1x128xf32>,
    return
  }
  func.func @transform_0(%arg0: i32) -> (i32, i32, i32, i32) {
    %c0_i32 = arith.constant 0 : i32
    %c0_i32_0 = arith.constant 0 : i32
    %c0_i32_1 = arith.constant 0 : i32
    %c0_i32_2 = arith.constant 0 : i32
    return %arg0, %c0_i32, %c0_i32_0, %c0_i32_1 : i32, i32, i32, i32
  }
  func.func @transform_1(%arg0: i32) -> (i32, i32, i32) {
    %c0_i32 = arith.constant 0 : i32
    %c0_i32_0 = arith.constant 0 : i32
    %c0_i32_1 = arith.constant 0 : i32
    %c0_i32_2 = arith.constant 0 : i32
    return %c0_i32, %c0_i32_0, %c0_i32_1 : i32, i32, i32
  }
  func.func @transform_2(%arg0: i32) -> (i32, i32, i32) {
    %c0_i32 = arith.constant 0 : i32
    %c0_i32_0 = arith.constant 0 : i32
    %c0_i32_1 = arith.constant 0 : i32
    return %arg0, %c0_i32, %c0_i32_0 : i32, i32, i32
  }
  func.func @transform_3(%arg0: i32) -> (i32, i32, i32) {
    %c0_i32 = arith.constant 0 : i32
    %c0_i32_0 = arith.constant 0 : i32
    %c0_i32_1 = arith.constant 0 : i32
    return %arg0, %c0_i32, %c0_i32_0 : i32, i32, i32
  }
}

module attributes {stable_mosaic.version = 11 : i64} {
  func.func @_conv3x3_bnrelu_stats_kernel(%arg0: i32, %arg1: memref<1x8x8x128xbf16, #tpu.memory_space<vmem>>, %arg2: memref<9x128x128xbf16, #tpu.memory_space<vmem>>, %arg3: memref<1x128xf32, #tpu.memory_space<vmem>>, %arg4: memref<1x128xf32, #tpu.memory_space<vmem>>, %arg5: memref<1x64x128xbf16, #tpu.memory_space<vmem>>, %arg6: memref<1x2x128xf32, #tpu.memory_space<vmem>>, %arg7: memref<10x10x128xbf16, #tpu.memory_space<vmem>>) attributes {dimension_semantics = [#tpu.dimension_semantics<parallel>], iteration_bounds = array<i64: 2>, scalar_prefetch = 0 : i64, scratch_operands = 1 : i64, tpu.core_type = #tpu.core_type<tc>, window_params = [{transform_indices = @transform_0, window_bounds = array<i64: 1, 8, 8, 128>}, {pipeline_mode = #tpu.pipeline_mode<synchronous>, transform_indices = @transform_1, window_bounds = array<i64: 9, 128, 128>}, {pipeline_mode = #tpu.pipeline_mode<synchronous>, transform_indices = @transform_2, window_bounds = array<i64: 1, 128>}, {pipeline_mode = #tpu.pipeline_mode<synchronous>, transform_indices = @transform_3, window_bounds = array<i64: 1, 128>}, {transform_indices = @transform_4, window_bounds = array<i64: 1, 64, 128>}, {transform_indices = @transform_5, window_bounds = array<i64: 1, 2, 128>}]} {
    %c0 = arith.constant 0 : index
    %c0_0 = arith.constant 0 : index
    %c0_1 = arith.constant 0 : index
    %c0_2 = arith.constant 0 : index
    %0 = vector.load %arg1[%c0, %c0_0, %c0_1, %c0_2] : memref<1x8x8x128xbf16, #tpu.memory_space<vmem>>, vector<1x8x8x128xbf16>
    %1 = vector.shape_cast %0 : vector<1x8x8x128xbf16> to vector<8x8x128xbf16>
    %2 = arith.extf %1 : vector<8x8x128xbf16> to vector<8x8x128xf32>
    %c0_3 = arith.constant 0 : index
    %c0_4 = arith.constant 0 : index
    %3 = vector.load %arg3[%c0_3, %c0_4] : memref<1x128xf32, #tpu.memory_space<vmem>>, vector<1x128xf32>
    %4 = vector.shape_cast %3 : vector<1x128xf32> to vector<1x1x128xf32>
    %5 = vector.broadcast %4 : vector<1x1x128xf32> to vector<8x8x128xf32>
    %6 = arith.mulf %2, %5 : vector<8x8x128xf32>
    %c0_5 = arith.constant 0 : index
    %c0_6 = arith.constant 0 : index
    %7 = vector.load %arg4[%c0_5, %c0_6] : memref<1x128xf32, #tpu.memory_space<vmem>>, vector<1x128xf32>
    %8 = vector.shape_cast %7 : vector<1x128xf32> to vector<1x1x128xf32>
    %9 = vector.broadcast %8 : vector<1x1x128xf32> to vector<8x8x128xf32>
    %10 = arith.addf %6, %9 : vector<8x8x128xf32>
    %cst = arith.constant 0.000000e+00 : f32
    %11 = vector.broadcast %cst : f32 to vector<8x8x128xf32>
    %12 = arith.maximumf %10, %11 : vector<8x8x128xf32>
    %cst_7 = arith.constant 0.000000e+00 : bf16
    %13 = vector.broadcast %cst_7 : bf16 to vector<10x10x128xbf16>
    %c0_8 = arith.constant 0 : index
    %c0_9 = arith.constant 0 : index
    %c0_10 = arith.constant 0 : index
    %14 = vector.load %arg7[%c0_8, %c0_9, %c0_10] : memref<10x10x128xbf16, #tpu.memory_space<vmem>>, vector<10x10x128xbf16>
    tpu.vector_store %arg7[%c0_8, %c0_9, %c0_10], %13 {strides = array<i32>} : memref<10x10x128xbf16, #tpu.memory_space<vmem>>, vector<10x10x128xbf16>,
    %15 = arith.truncf %12 : vector<8x8x128xf32> to vector<8x8x128xbf16>
    %c1 = arith.constant 1 : index
    %c1_11 = arith.constant 1 : index
    %c0_12 = arith.constant 0 : index
    %16 = vector.load %arg7[%c1, %c1_11, %c0_12] : memref<10x10x128xbf16, #tpu.memory_space<vmem>>, vector<8x8x128xbf16>
    tpu.vector_store %arg7[%c1, %c1_11, %c0_12], %15 {strides = array<i32>} : memref<10x10x128xbf16, #tpu.memory_space<vmem>>, vector<8x8x128xbf16>,
    %c0_13 = arith.constant 0 : index
    %c0_14 = arith.constant 0 : index
    %c0_15 = arith.constant 0 : index
    %17 = vector.load %arg7[%c0_13, %c0_14, %c0_15] : memref<10x10x128xbf16, #tpu.memory_space<vmem>>, vector<10x10x128xbf16>
    %18 = vector.extract_strided_slice %17 {offsets = [0, 0, 0], sizes = [8, 8, 128], strides = [1, 1, 1]} : vector<10x10x128xbf16> to vector<8x8x128xbf16>
    %19 = vector.shape_cast %18 : vector<8x8x128xbf16> to vector<64x128xbf16>
    %c0_16 = arith.constant 0 : index
    %c0_17 = arith.constant 0 : index
    %c0_18 = arith.constant 0 : index
    %20 = vector.load %arg2[%c0_16, %c0_17, %c0_18] : memref<9x128x128xbf16, #tpu.memory_space<vmem>>, vector<1x128x128xbf16>
    %21 = vector.shape_cast %20 : vector<1x128x128xbf16> to vector<128x128xbf16>
    %cst_19 = arith.constant dense<0.000000e+00> : vector<64x128xf32>
    %22 = tpu.matmul %19, %21, %cst_19 {dimension_numbers = #tpu.dot_dimension_numbers<[1], [0], [0], [1], [0, 0, 1, 1], [], []>} : vector<64x128xbf16>, vector<128x128xbf16>, vector<64x128xf32> -> vector<64x128xf32>
    %23 = vector.extract_strided_slice %17 {offsets = [0, 1, 0], sizes = [8, 8, 128], strides = [1, 1, 1]} : vector<10x10x128xbf16> to vector<8x8x128xbf16>
    %24 = vector.shape_cast %23 : vector<8x8x128xbf16> to vector<64x128xbf16>
    %c1_20 = arith.constant 1 : index
    %c0_21 = arith.constant 0 : index
    %c0_22 = arith.constant 0 : index
    %25 = vector.load %arg2[%c1_20, %c0_21, %c0_22] : memref<9x128x128xbf16, #tpu.memory_space<vmem>>, vector<1x128x128xbf16>
    %26 = vector.shape_cast %25 : vector<1x128x128xbf16> to vector<128x128xbf16>
    %cst_23 = arith.constant dense<0.000000e+00> : vector<64x128xf32>
    %27 = tpu.matmul %24, %26, %cst_23 {dimension_numbers = #tpu.dot_dimension_numbers<[1], [0], [0], [1], [0, 0, 1, 1], [], []>} : vector<64x128xbf16>, vector<128x128xbf16>, vector<64x128xf32> -> vector<64x128xf32>
    %28 = arith.addf %22, %27 : vector<64x128xf32>
    %29 = vector.extract_strided_slice %17 {offsets = [0, 2, 0], sizes = [8, 8, 128], strides = [1, 1, 1]} : vector<10x10x128xbf16> to vector<8x8x128xbf16>
    %30 = vector.shape_cast %29 : vector<8x8x128xbf16> to vector<64x128xbf16>
    %c2 = arith.constant 2 : index
    %c0_24 = arith.constant 0 : index
    %c0_25 = arith.constant 0 : index
    %31 = vector.load %arg2[%c2, %c0_24, %c0_25] : memref<9x128x128xbf16, #tpu.memory_space<vmem>>, vector<1x128x128xbf16>
    %32 = vector.shape_cast %31 : vector<1x128x128xbf16> to vector<128x128xbf16>
    %cst_26 = arith.constant dense<0.000000e+00> : vector<64x128xf32>
    %33 = tpu.matmul %30, %32, %cst_26 {dimension_numbers = #tpu.dot_dimension_numbers<[1], [0], [0], [1], [0, 0, 1, 1], [], []>} : vector<64x128xbf16>, vector<128x128xbf16>, vector<64x128xf32> -> vector<64x128xf32>
    %34 = arith.addf %28, %33 : vector<64x128xf32>
    %35 = vector.extract_strided_slice %17 {offsets = [1, 0, 0], sizes = [8, 8, 128], strides = [1, 1, 1]} : vector<10x10x128xbf16> to vector<8x8x128xbf16>
    %36 = vector.shape_cast %35 : vector<8x8x128xbf16> to vector<64x128xbf16>
    %c3 = arith.constant 3 : index
    %c0_27 = arith.constant 0 : index
    %c0_28 = arith.constant 0 : index
    %37 = vector.load %arg2[%c3, %c0_27, %c0_28] : memref<9x128x128xbf16, #tpu.memory_space<vmem>>, vector<1x128x128xbf16>
    %38 = vector.shape_cast %37 : vector<1x128x128xbf16> to vector<128x128xbf16>
    %cst_29 = arith.constant dense<0.000000e+00> : vector<64x128xf32>
    %39 = tpu.matmul %36, %38, %cst_29 {dimension_numbers = #tpu.dot_dimension_numbers<[1], [0], [0], [1], [0, 0, 1, 1], [], []>} : vector<64x128xbf16>, vector<128x128xbf16>, vector<64x128xf32> -> vector<64x128xf32>
    %40 = arith.addf %34, %39 : vector<64x128xf32>
    %41 = vector.extract_strided_slice %17 {offsets = [1, 1, 0], sizes = [8, 8, 128], strides = [1, 1, 1]} : vector<10x10x128xbf16> to vector<8x8x128xbf16>
    %42 = vector.shape_cast %41 : vector<8x8x128xbf16> to vector<64x128xbf16>
    %c4 = arith.constant 4 : index
    %c0_30 = arith.constant 0 : index
    %c0_31 = arith.constant 0 : index
    %43 = vector.load %arg2[%c4, %c0_30, %c0_31] : memref<9x128x128xbf16, #tpu.memory_space<vmem>>, vector<1x128x128xbf16>
    %44 = vector.shape_cast %43 : vector<1x128x128xbf16> to vector<128x128xbf16>
    %cst_32 = arith.constant dense<0.000000e+00> : vector<64x128xf32>
    %45 = tpu.matmul %42, %44, %cst_32 {dimension_numbers = #tpu.dot_dimension_numbers<[1], [0], [0], [1], [0, 0, 1, 1], [], []>} : vector<64x128xbf16>, vector<128x128xbf16>, vector<64x128xf32> -> vector<64x128xf32>
    %46 = arith.addf %40, %45 : vector<64x128xf32>
    %47 = vector.extract_strided_slice %17 {offsets = [1, 2, 0], sizes = [8, 8, 128], strides = [1, 1, 1]} : vector<10x10x128xbf16> to vector<8x8x128xbf16>
    %48 = vector.shape_cast %47 : vector<8x8x128xbf16> to vector<64x128xbf16>
    %c5 = arith.constant 5 : index
    %c0_33 = arith.constant 0 : index
    %c0_34 = arith.constant 0 : index
    %49 = vector.load %arg2[%c5, %c0_33, %c0_34] : memref<9x128x128xbf16, #tpu.memory_space<vmem>>, vector<1x128x128xbf16>
    %50 = vector.shape_cast %49 : vector<1x128x128xbf16> to vector<128x128xbf16>
    %cst_35 = arith.constant dense<0.000000e+00> : vector<64x128xf32>
    %51 = tpu.matmul %48, %50, %cst_35 {dimension_numbers = #tpu.dot_dimension_numbers<[1], [0], [0], [1], [0, 0, 1, 1], [], []>} : vector<64x128xbf16>, vector<128x128xbf16>, vector<64x128xf32> -> vector<64x128xf32>
    %52 = arith.addf %46, %51 : vector<64x128xf32>
    %53 = vector.extract_strided_slice %17 {offsets = [2, 0, 0], sizes = [8, 8, 128], strides = [1, 1, 1]} : vector<10x10x128xbf16> to vector<8x8x128xbf16>
    %54 = vector.shape_cast %53 : vector<8x8x128xbf16> to vector<64x128xbf16>
    %c6 = arith.constant 6 : index
    %c0_36 = arith.constant 0 : index
    %c0_37 = arith.constant 0 : index
    %55 = vector.load %arg2[%c6, %c0_36, %c0_37] : memref<9x128x128xbf16, #tpu.memory_space<vmem>>, vector<1x128x128xbf16>
    %56 = vector.shape_cast %55 : vector<1x128x128xbf16> to vector<128x128xbf16>
    %cst_38 = arith.constant dense<0.000000e+00> : vector<64x128xf32>
    %57 = tpu.matmul %54, %56, %cst_38 {dimension_numbers = #tpu.dot_dimension_numbers<[1], [0], [0], [1], [0, 0, 1, 1], [], []>} : vector<64x128xbf16>, vector<128x128xbf16>, vector<64x128xf32> -> vector<64x128xf32>
    %58 = arith.addf %52, %57 : vector<64x128xf32>
    %59 = vector.extract_strided_slice %17 {offsets = [2, 1, 0], sizes = [8, 8, 128], strides = [1, 1, 1]} : vector<10x10x128xbf16> to vector<8x8x128xbf16>
    %60 = vector.shape_cast %59 : vector<8x8x128xbf16> to vector<64x128xbf16>
    %c7 = arith.constant 7 : index
    %c0_39 = arith.constant 0 : index
    %c0_40 = arith.constant 0 : index
    %61 = vector.load %arg2[%c7, %c0_39, %c0_40] : memref<9x128x128xbf16, #tpu.memory_space<vmem>>, vector<1x128x128xbf16>
    %62 = vector.shape_cast %61 : vector<1x128x128xbf16> to vector<128x128xbf16>
    %cst_41 = arith.constant dense<0.000000e+00> : vector<64x128xf32>
    %63 = tpu.matmul %60, %62, %cst_41 {dimension_numbers = #tpu.dot_dimension_numbers<[1], [0], [0], [1], [0, 0, 1, 1], [], []>} : vector<64x128xbf16>, vector<128x128xbf16>, vector<64x128xf32> -> vector<64x128xf32>
    %64 = arith.addf %58, %63 : vector<64x128xf32>
    %65 = vector.extract_strided_slice %17 {offsets = [2, 2, 0], sizes = [8, 8, 128], strides = [1, 1, 1]} : vector<10x10x128xbf16> to vector<8x8x128xbf16>
    %66 = vector.shape_cast %65 : vector<8x8x128xbf16> to vector<64x128xbf16>
    %c8 = arith.constant 8 : index
    %c0_42 = arith.constant 0 : index
    %c0_43 = arith.constant 0 : index
    %67 = vector.load %arg2[%c8, %c0_42, %c0_43] : memref<9x128x128xbf16, #tpu.memory_space<vmem>>, vector<1x128x128xbf16>
    %68 = vector.shape_cast %67 : vector<1x128x128xbf16> to vector<128x128xbf16>
    %cst_44 = arith.constant dense<0.000000e+00> : vector<64x128xf32>
    %69 = tpu.matmul %66, %68, %cst_44 {dimension_numbers = #tpu.dot_dimension_numbers<[1], [0], [0], [1], [0, 0, 1, 1], [], []>} : vector<64x128xbf16>, vector<128x128xbf16>, vector<64x128xf32> -> vector<64x128xf32>
    %70 = arith.addf %64, %69 : vector<64x128xf32>
    %71 = arith.truncf %70 : vector<64x128xf32> to vector<64x128xbf16>
    %c0_45 = arith.constant 0 : index
    %c0_46 = arith.constant 0 : index
    %c0_47 = arith.constant 0 : index
    %72 = vector.load %arg5[%c0_45, %c0_46, %c0_47] : memref<1x64x128xbf16, #tpu.memory_space<vmem>>, vector<1x64x128xbf16>
    %73 = vector.shape_cast %72 : vector<1x64x128xbf16> to vector<64x128xbf16>
    %74 = vector.shape_cast %71 : vector<64x128xbf16> to vector<1x64x128xbf16>
    tpu.vector_store %arg5[%c0_45, %c0_46, %c0_47], %74 {strides = array<i32>} : memref<1x64x128xbf16, #tpu.memory_space<vmem>>, vector<1x64x128xbf16>,
    %cst_48 = arith.constant dense<0.000000e+00> : vector<128xf32>
    %75 = vector.multi_reduction <add>, %70, %cst_48 [0] : vector<64x128xf32> to vector<128xf32>
    %76 = vector.shape_cast %75 : vector<128xf32> to vector<1x128xf32>
    %c0_49 = arith.constant 0 : index
    %c0_50 = arith.constant 0 : index
    %c0_51 = arith.constant 0 : index
    %77 = vector.load %arg6[%c0_49, %c0_50, %c0_51] : memref<1x2x128xf32, #tpu.memory_space<vmem>>, vector<1x1x128xf32>
    %78 = vector.shape_cast %77 : vector<1x1x128xf32> to vector<1x128xf32>
    %79 = vector.shape_cast %76 : vector<1x128xf32> to vector<1x1x128xf32>
    tpu.vector_store %arg6[%c0_49, %c0_50, %c0_51], %79 {strides = array<i32>} : memref<1x2x128xf32, #tpu.memory_space<vmem>>, vector<1x1x128xf32>,
    %80 = arith.mulf %70, %70 : vector<64x128xf32>
    %cst_52 = arith.constant dense<0.000000e+00> : vector<128xf32>
    %81 = vector.multi_reduction <add>, %80, %cst_52 [0] : vector<64x128xf32> to vector<128xf32>
    %82 = vector.shape_cast %81 : vector<128xf32> to vector<1x128xf32>
    %c0_53 = arith.constant 0 : index
    %c1_54 = arith.constant 1 : index
    %c0_55 = arith.constant 0 : index
    %83 = vector.load %arg6[%c0_53, %c1_54, %c0_55] : memref<1x2x128xf32, #tpu.memory_space<vmem>>, vector<1x1x128xf32>
    %84 = vector.shape_cast %83 : vector<1x1x128xf32> to vector<1x128xf32>
    %85 = vector.shape_cast %82 : vector<1x128xf32> to vector<1x1x128xf32>
    tpu.vector_store %arg6[%c0_53, %c1_54, %c0_55], %85 {strides = array<i32>} : memref<1x2x128xf32, #tpu.memory_space<vmem>>, vector<1x1x128xf32>,
    return
  }
  func.func @transform_0(%arg0: i32) -> (i32, i32, i32, i32) {
    %c0_i32 = arith.constant 0 : i32
    %c0_i32_0 = arith.constant 0 : i32
    %c0_i32_1 = arith.constant 0 : i32
    %c0_i32_2 = arith.constant 0 : i32
    return %arg0, %c0_i32, %c0_i32_0, %c0_i32_1 : i32, i32, i32, i32
  }
  func.func @transform_1(%arg0: i32) -> (i32, i32, i32) {
    %c0_i32 = arith.constant 0 : i32
    %c0_i32_0 = arith.constant 0 : i32
    %c0_i32_1 = arith.constant 0 : i32
    %c0_i32_2 = arith.constant 0 : i32
    return %c0_i32, %c0_i32_0, %c0_i32_1 : i32, i32, i32
  }
  func.func @transform_2(%arg0: i32) -> (i32, i32) {
    %c0_i32 = arith.constant 0 : i32
    %c0_i32_0 = arith.constant 0 : i32
    %c0_i32_1 = arith.constant 0 : i32
    return %c0_i32, %c0_i32_0 : i32, i32
  }
  func.func @transform_3(%arg0: i32) -> (i32, i32) {
    %c0_i32 = arith.constant 0 : i32
    %c0_i32_0 = arith.constant 0 : i32
    %c0_i32_1 = arith.constant 0 : i32
    return %c0_i32, %c0_i32_0 : i32, i32
  }
  func.func @transform_4(%arg0: i32) -> (i32, i32, i32) {
    %c0_i32 = arith.constant 0 : i32
    %c0_i32_0 = arith.constant 0 : i32
    %c0_i32_1 = arith.constant 0 : i32
    return %arg0, %c0_i32, %c0_i32_0 : i32, i32, i32
  }
  func.func @transform_5(%arg0: i32) -> (i32, i32, i32) {
    %c0_i32 = arith.constant 0 : i32
    %c0_i32_0 = arith.constant 0 : i32
    %c0_i32_1 = arith.constant 0 : i32
    return %arg0, %c0_i32, %c0_i32_0 : i32, i32, i32
  }
}

module attributes {stable_mosaic.version = 11 : i64} {
  func.func @_bn_residual_relu_kernel(%arg0: i32, %arg1: memref<128x128xbf16, #tpu.memory_space<vmem>>, %arg2: memref<128x128xbf16, #tpu.memory_space<vmem>>, %arg3: memref<1x128xf32, #tpu.memory_space<vmem>>, %arg4: memref<1x128xf32, #tpu.memory_space<vmem>>, %arg5: memref<1x128xf32, #tpu.memory_space<vmem>>, %arg6: memref<1x128xf32, #tpu.memory_space<vmem>>, %arg7: memref<128x128xf32, #tpu.memory_space<vmem>>) attributes {dimension_semantics = [#tpu.dimension_semantics<parallel>], iteration_bounds = array<i64: 1>, scalar_prefetch = 0 : i64, scratch_operands = 0 : i64, tpu.core_type = #tpu.core_type<tc>, window_params = [{transform_indices = @transform_0, window_bounds = array<i64: 128, 128>}, {transform_indices = @transform_1, window_bounds = array<i64: 128, 128>}, {pipeline_mode = #tpu.pipeline_mode<synchronous>, transform_indices = @transform_2, window_bounds = array<i64: 1, 128>}, {pipeline_mode = #tpu.pipeline_mode<synchronous>, transform_indices = @transform_3, window_bounds = array<i64: 1, 128>}, {pipeline_mode = #tpu.pipeline_mode<synchronous>, transform_indices = @transform_4, window_bounds = array<i64: 1, 128>}, {pipeline_mode = #tpu.pipeline_mode<synchronous>, transform_indices = @transform_5, window_bounds = array<i64: 1, 128>}, {transform_indices = @transform_6, window_bounds = array<i64: 128, 128>}]} {
    %c0 = arith.constant 0 : index
    %c0_0 = arith.constant 0 : index
    %0 = vector.load %arg1[%c0, %c0_0] : memref<128x128xbf16, #tpu.memory_space<vmem>>, vector<128x128xbf16>
    %1 = arith.extf %0 : vector<128x128xbf16> to vector<128x128xf32>
    %c0_1 = arith.constant 0 : index
    %c0_2 = arith.constant 0 : index
    %2 = vector.load %arg3[%c0_1, %c0_2] : memref<1x128xf32, #tpu.memory_space<vmem>>, vector<1x128xf32>
    %3 = vector.broadcast %2 : vector<1x128xf32> to vector<128x128xf32>
    %4 = arith.mulf %1, %3 : vector<128x128xf32>
    %c0_3 = arith.constant 0 : index
    %c0_4 = arith.constant 0 : index
    %5 = vector.load %arg4[%c0_3, %c0_4] : memref<1x128xf32, #tpu.memory_space<vmem>>, vector<1x128xf32>
    %6 = vector.broadcast %5 : vector<1x128xf32> to vector<128x128xf32>
    %7 = arith.addf %4, %6 : vector<128x128xf32>
    %c0_5 = arith.constant 0 : index
    %c0_6 = arith.constant 0 : index
    %8 = vector.load %arg2[%c0_5, %c0_6] : memref<128x128xbf16, #tpu.memory_space<vmem>>, vector<128x128xbf16>
    %9 = arith.extf %8 : vector<128x128xbf16> to vector<128x128xf32>
    %c0_7 = arith.constant 0 : index
    %c0_8 = arith.constant 0 : index
    %10 = vector.load %arg5[%c0_7, %c0_8] : memref<1x128xf32, #tpu.memory_space<vmem>>, vector<1x128xf32>
    %11 = vector.broadcast %10 : vector<1x128xf32> to vector<128x128xf32>
    %12 = arith.mulf %9, %11 : vector<128x128xf32>
    %c0_9 = arith.constant 0 : index
    %c0_10 = arith.constant 0 : index
    %13 = vector.load %arg6[%c0_9, %c0_10] : memref<1x128xf32, #tpu.memory_space<vmem>>, vector<1x128xf32>
    %14 = vector.broadcast %13 : vector<1x128xf32> to vector<128x128xf32>
    %15 = arith.addf %12, %14 : vector<128x128xf32>
    %16 = arith.addf %7, %15 : vector<128x128xf32>
    %cst = arith.constant 0.000000e+00 : f32
    %17 = vector.broadcast %cst : f32 to vector<128x128xf32>
    %18 = arith.maximumf %16, %17 : vector<128x128xf32>
    %c0_11 = arith.constant 0 : index
    %c0_12 = arith.constant 0 : index
    %19 = vector.load %arg7[%c0_11, %c0_12] : memref<128x128xf32, #tpu.memory_space<vmem>>, vector<128x128xf32>
    tpu.vector_store %arg7[%c0_11, %c0_12], %18 {strides = array<i32>} : memref<128x128xf32, #tpu.memory_space<vmem>>, vector<128x128xf32>,
    return
  }
  func.func @transform_0(%arg0: i32) -> (i32, i32) {
    %c0_i32 = arith.constant 0 : i32
    %c0_i32_0 = arith.constant 0 : i32
    return %arg0, %c0_i32 : i32, i32
  }
  func.func @transform_1(%arg0: i32) -> (i32, i32) {
    %c0_i32 = arith.constant 0 : i32
    %c0_i32_0 = arith.constant 0 : i32
    return %arg0, %c0_i32 : i32, i32
  }
  func.func @transform_2(%arg0: i32) -> (i32, i32) {
    %c0_i32 = arith.constant 0 : i32
    %c0_i32_0 = arith.constant 0 : i32
    %c0_i32_1 = arith.constant 0 : i32
    return %c0_i32, %c0_i32_0 : i32, i32
  }
  func.func @transform_3(%arg0: i32) -> (i32, i32) {
    %c0_i32 = arith.constant 0 : i32
    %c0_i32_0 = arith.constant 0 : i32
    %c0_i32_1 = arith.constant 0 : i32
    return %c0_i32, %c0_i32_0 : i32, i32
  }
  func.func @transform_4(%arg0: i32) -> (i32, i32) {
    %c0_i32 = arith.constant 0 : i32
    %c0_i32_0 = arith.constant 0 : i32
    %c0_i32_1 = arith.constant 0 : i32
    return %c0_i32, %c0_i32_0 : i32, i32
  }
  func.func @transform_5(%arg0: i32) -> (i32, i32) {
    %c0_i32 = arith.constant 0 : i32
    %c0_i32_0 = arith.constant 0 : i32
    %c0_i32_1 = arith.constant 0 : i32
    return %c0_i32, %c0_i32_0 : i32, i32
  }
  func.func @transform_6(%arg0: i32) -> (i32, i32) {
    %c0_i32 = arith.constant 0 : i32
    %c0_i32_0 = arith.constant 0 : i32
    return %arg0, %c0_i32 : i32, i32
  }
}

module attributes {stable_mosaic.version = 11 : i64} {
  func.func @_conv_taps_stats_kernel(%arg0: i32, %arg1: memref<1x8x8x128xbf16, #tpu.memory_space<vmem>>, %arg2: memref<1x128x128xbf16, #tpu.memory_space<vmem>>, %arg3: memref<1x64x128xbf16, #tpu.memory_space<vmem>>, %arg4: memref<1x2x128xf32, #tpu.memory_space<vmem>>) attributes {dimension_semantics = [#tpu.dimension_semantics<parallel>], iteration_bounds = array<i64: 2>, scalar_prefetch = 0 : i64, scratch_operands = 0 : i64, tpu.core_type = #tpu.core_type<tc>, window_params = [{transform_indices = @transform_0, window_bounds = array<i64: 1, 8, 8, 128>}, {pipeline_mode = #tpu.pipeline_mode<synchronous>, transform_indices = @transform_1, window_bounds = array<i64: 1, 128, 128>}, {transform_indices = @transform_2, window_bounds = array<i64: 1, 64, 128>}, {transform_indices = @transform_3, window_bounds = array<i64: 1, 2, 128>}]} {
    %c0 = arith.constant 0 : index
    %c0_0 = arith.constant 0 : index
    %c0_1 = arith.constant 0 : index
    %c0_2 = arith.constant 0 : index
    %0 = vector.load %arg1[%c0, %c0_0, %c0_1, %c0_2] : memref<1x8x8x128xbf16, #tpu.memory_space<vmem>>, vector<1x8x8x128xbf16>
    %1 = vector.shape_cast %0 : vector<1x8x8x128xbf16> to vector<8x8x128xbf16>
    %2 = vector.shape_cast %1 : vector<8x8x128xbf16> to vector<64x128xbf16>
    %c0_3 = arith.constant 0 : index
    %c0_4 = arith.constant 0 : index
    %c0_5 = arith.constant 0 : index
    %3 = vector.load %arg2[%c0_3, %c0_4, %c0_5] : memref<1x128x128xbf16, #tpu.memory_space<vmem>>, vector<1x128x128xbf16>
    %4 = vector.shape_cast %3 : vector<1x128x128xbf16> to vector<128x128xbf16>
    %cst = arith.constant dense<0.000000e+00> : vector<64x128xf32>
    %5 = tpu.matmul %2, %4, %cst {dimension_numbers = #tpu.dot_dimension_numbers<[1], [0], [0], [1], [0, 0, 1, 1], [], []>} : vector<64x128xbf16>, vector<128x128xbf16>, vector<64x128xf32> -> vector<64x128xf32>
    %6 = arith.truncf %5 : vector<64x128xf32> to vector<64x128xbf16>
    %c0_6 = arith.constant 0 : index
    %c0_7 = arith.constant 0 : index
    %c0_8 = arith.constant 0 : index
    %7 = vector.load %arg3[%c0_6, %c0_7, %c0_8] : memref<1x64x128xbf16, #tpu.memory_space<vmem>>, vector<1x64x128xbf16>
    %8 = vector.shape_cast %7 : vector<1x64x128xbf16> to vector<64x128xbf16>
    %9 = vector.shape_cast %6 : vector<64x128xbf16> to vector<1x64x128xbf16>
    tpu.vector_store %arg3[%c0_6, %c0_7, %c0_8], %9 {strides = array<i32>} : memref<1x64x128xbf16, #tpu.memory_space<vmem>>, vector<1x64x128xbf16>,
    %cst_9 = arith.constant dense<0.000000e+00> : vector<128xf32>
    %10 = vector.multi_reduction <add>, %5, %cst_9 [0] : vector<64x128xf32> to vector<128xf32>
    %11 = vector.shape_cast %10 : vector<128xf32> to vector<1x128xf32>
    %c0_10 = arith.constant 0 : index
    %c0_11 = arith.constant 0 : index
    %c0_12 = arith.constant 0 : index
    %12 = vector.load %arg4[%c0_10, %c0_11, %c0_12] : memref<1x2x128xf32, #tpu.memory_space<vmem>>, vector<1x1x128xf32>
    %13 = vector.shape_cast %12 : vector<1x1x128xf32> to vector<1x128xf32>
    %14 = vector.shape_cast %11 : vector<1x128xf32> to vector<1x1x128xf32>
    tpu.vector_store %arg4[%c0_10, %c0_11, %c0_12], %14 {strides = array<i32>} : memref<1x2x128xf32, #tpu.memory_space<vmem>>, vector<1x1x128xf32>,
    %15 = arith.mulf %5, %5 : vector<64x128xf32>
    %cst_13 = arith.constant dense<0.000000e+00> : vector<128xf32>
    %16 = vector.multi_reduction <add>, %15, %cst_13 [0] : vector<64x128xf32> to vector<128xf32>
    %17 = vector.shape_cast %16 : vector<128xf32> to vector<1x128xf32>
    %c0_14 = arith.constant 0 : index
    %c1 = arith.constant 1 : index
    %c0_15 = arith.constant 0 : index
    %18 = vector.load %arg4[%c0_14, %c1, %c0_15] : memref<1x2x128xf32, #tpu.memory_space<vmem>>, vector<1x1x128xf32>
    %19 = vector.shape_cast %18 : vector<1x1x128xf32> to vector<1x128xf32>
    %20 = vector.shape_cast %17 : vector<1x128xf32> to vector<1x1x128xf32>
    tpu.vector_store %arg4[%c0_14, %c1, %c0_15], %20 {strides = array<i32>} : memref<1x2x128xf32, #tpu.memory_space<vmem>>, vector<1x1x128xf32>,
    return
  }
  func.func @transform_0(%arg0: i32) -> (i32, i32, i32, i32) {
    %c0_i32 = arith.constant 0 : i32
    %c0_i32_0 = arith.constant 0 : i32
    %c0_i32_1 = arith.constant 0 : i32
    %c0_i32_2 = arith.constant 0 : i32
    return %arg0, %c0_i32, %c0_i32_0, %c0_i32_1 : i32, i32, i32, i32
  }
  func.func @transform_1(%arg0: i32) -> (i32, i32, i32) {
    %c0_i32 = arith.constant 0 : i32
    %c0_i32_0 = arith.constant 0 : i32
    %c0_i32_1 = arith.constant 0 : i32
    %c0_i32_2 = arith.constant 0 : i32
    return %c0_i32, %c0_i32_0, %c0_i32_1 : i32, i32, i32
  }
  func.func @transform_2(%arg0: i32) -> (i32, i32, i32) {
    %c0_i32 = arith.constant 0 : i32
    %c0_i32_0 = arith.constant 0 : i32
    %c0_i32_1 = arith.constant 0 : i32
    return %arg0, %c0_i32, %c0_i32_0 : i32, i32, i32
  }
  func.func @transform_3(%arg0: i32) -> (i32, i32, i32) {
    %c0_i32 = arith.constant 0 : i32
    %c0_i32_0 = arith.constant 0 : i32
    %c0_i32_1 = arith.constant 0 : i32
    return %arg0, %c0_i32, %c0_i32_0 : i32, i32, i32
  }
}

</mosaic_0001>

<llo_original>
// kernel: basic_block_forward.6
$region0: #{basic_block_forward.6}
  #allocation0 [shape = 'u32[]', space=smem, size = 0x4, offset = 0x4, fixed_abs, tag = 'smem constant byte address 0x4 - core index']
  #allocation1 [shape = 'u32[144,128]{1,0:T(1,128)}', space=vmem, size = 0x12000, scoped, tag = 'internal scratch']
  %s0 = inlined_call_operand.vmem [shape: bf16[2,8,8,128], index: 0, kind: input, shape index: {}]
  %s1 = inlined_call_operand.vmem [shape: bf16[1,128,128], index: 1, kind: input, shape index: {}]
  %s2 = inlined_call_operand.vmem [shape: bf16[2,64,128], index: 2, kind: output, shape index: {0}]
  %s3 = inlined_call_operand.vmem [shape: f32[2,2,128], index: 3, kind: output, shape index: {1}]
  %4 = xla_tuple %s2, %s3
  %s5 = sld [smem:[#allocation0]]
  $region49: #{basic_block_forward.6} parent=0
    _
  %s7 = ssub.s32 1, %s5
  %s8 = scalar_select 0, %s7, %s5
  loop: start=0, step=1, limit=4
  $region2: #{basic_block_forward.6} parent=0 // loop_pre_header
    _
  $region3: #{basic_block_forward.6} parent=0 // loop_header
    %s10 = sphi 0, %s14
    %p11 = scmp.ge.s32.totalorder %s10, 4
    %s20 = sphi 0, %s22
    %s23 = sphi 0, %s20
    %s24 = sphi 0, %s23
    %s40 = sphi 0, %s24
    %s44 = sphi 0, %s44
    %s46 = sphi 0, %s44
    %s47 = sphi 0, %s46
    %s61 = sphi 0, %s47
    %s67 = sphi 0, %s69
    %s70 = sphi 0, %s67
    %s71 = sphi 0, %s70
    %s87 = sphi 0, %s71
    %s93 = sphi 0, %s95
    %s96 = sphi 0, %s93
    %s97 = sphi 0, %s96
    %s113 = sphi 0, %s97
  $region4: #{basic_block_forward.6} parent=0 // loop_header_branch
    %13 = sbr.rel (%p11) target = $region8
  $region5: #{basic_block_forward.6} parent=0 // loop_body
    %s15 = ssub.s32 %s10, 1
    %s16 = ssub.s32 %s10, 2
    %s17 = sadd.s32 %s10, 1
    %s18 = ssub.s32 %s10, %s17
    %p19 = scmp.eq.s32.totalorder %s18, 0
    %s21 = sadd.s32 %s20, 1
    %s22 = scalar_select %p19, %s20, %s21
    %p25 = pneg %p19
    %p26 = scmp.eq.s32.totalorder %s10, 1
    %p27 = por %p25, %p26
    %p28 = scmp.ne.s32.totalorder %s20, %s23
    %p29 = scmp.eq.s32.totalorder %s10, 0
    %p30 = por %p28, %p29
    %p31 = scmp.ne.s32.totalorder %s20, %s23
    %p32 = scmp.eq.s32.totalorder %s15, 1
    %p33 = por %p31, %p32
    %p34 = scmp.ne.s32.totalorder %s23, %s24
    %p35 = scmp.eq.s32.totalorder %s15, 0
    %p36 = por %p34, %p35
    %p37 = scmp.ne.s32.totalorder %s23, %s24
    %p38 = scmp.eq.s32.totalorder %s16, 1
    %p39 = por %p37, %p38
    %p41 = scmp.ne.s32.totalorder %s24, %s40
    %p42 = scmp.eq.s32.totalorder %s16, 0
    %p43 = por %p41, %p42
    %s45 = sadd.s32 %s44, 1
    %p48 = scmp.eq.s32.totalorder %s10, 1
    %p49 = scmp.ne.s32.totalorder %s44, %s46
    %p50 = scmp.eq.s32.totalorder %s10, 0
    %p51 = por %p49, %p50
    %p52 = scmp.ne.s32.totalorder %s44, %s46
    %p53 = scmp.eq.s32.totalorder %s15, 1
    %p54 = por %p52, %p53
    %p55 = scmp.ne.s32.totalorder %s46, %s47
    %p56 = scmp.eq.s32.totalorder %s15, 0
    %p57 = por %p55, %p56
    %p58 = scmp.ne.s32.totalorder %s46, %s47
    %p59 = scmp.eq.s32.totalorder %s16, 1
    %p60 = por %p58, %p59
    %p62 = scmp.ne.s32.totalorder %s47, %s61
    %p63 = scmp.eq.s32.totalorder %s16, 0
    %p64 = por %p62, %p63
    %s65 = ssub.s32 %s10, %s17
    %p66 = scmp.eq.s32.totalorder %s65, 0
    %s68 = sadd.s32 %s67, 1
    %s69 = scalar_select %p66, %s67, %s68
    %p72 = pneg %p66
    %p73 = scmp.eq.s32.totalorder %s10, 1
    %p74 = por %p72, %p73
    %p75 = scmp.ne.s32.totalorder %s67, %s70
    %p76 = scmp.eq.s32.totalorder %s10, 0
    %p77 = por %p75, %p76
    %p78 = scmp.ne.s32.totalorder %s67, %s70
    %p79 = scmp.eq.s32.totalorder %s15, 1
    %p80 = por %p78, %p79
    %p81 = scmp.ne.s32.totalorder %s70, %s71
    %p82 = scmp.eq.s32.totalorder %s15, 0
    %p83 = por %p81, %p82
    %p84 = scmp.ne.s32.totalorder %s70, %s71
    %p85 = scmp.eq.s32.totalorder %s16, 1
    %p86 = por %p84, %p85
    %p88 = scmp.ne.s32.totalorder %s71, %s87
    %p89 = scmp.eq.s32.totalorder %s16, 0
    %p90 = por %p88, %p89
    %s91 = ssub.s32 %s10, %s17
    %p92 = scmp.eq.s32.totalorder %s91, 0
    %s94 = sadd.s32 %s93, 1
    %s95 = scalar_select %p92, %s93, %s94
    %p98 = pneg %p92
    %p99 = scmp.eq.s32.totalorder %s10, 1
    %p100 = por %p98, %p99
    %p101 = scmp.ne.s32.totalorder %s93, %s96
    %p102 = scmp.eq.s32.totalorder %s10, 0
    %p103 = por %p101, %p102
    %p104 = scmp.ne.s32.totalorder %s93, %s96
    %p105 = scmp.eq.s32.totalorder %s15, 1
    %p106 = por %p104, %p105
    %p107 = scmp.ne.s32.totalorder %s96, %s97
    %p108 = scmp.eq.s32.totalorder %s15, 0
    %p109 = por %p107, %p108
    %p110 = scmp.ne.s32.totalorder %s96, %s97
    %p111 = scmp.eq.s32.totalorder %s16, 1
    %p112 = por %p110, %p111
    %p114 = scmp.ne.s32.totalorder %s97, %s113
    %p115 = scmp.eq.s32.totalorder %s16, 0
    %p116 = por %p114, %p115
    %p117 = scmp.le.s32.totalorder 1, %s10
    %p118 = scmp.lt.s32.totalorder %s10, 3
    %p119 = pnand %p117, %p118
    %p120 = pneg %p119
    // Predicated region
    $region9: #{basic_block_forward.6} parent=5 // pred_check
      _
    $region10: #{basic_block_forward.6} parent=5 // pred_check_branch
      %122 = sbr.rel (%p119) target = $region12
    $region11: #{basic_block_forward.6} parent=5 // pred_region
      %s123 = ssub.s32 %s10, 1
      // Predicated region
      $region13: #{basic_block_forward.6} parent=11 // pred_check
        %p124 = pneg %p57
      $region14: #{basic_block_forward.6} parent=11 // pred_check_branch
        %126 = sbr.rel (%p124) target = $region16
      $region15: #{basic_block_forward.6} parent=11 // pred_region
        _
      $region16: #{basic_block_forward.6} parent=11 // pred_fallthru
        _
    $region12: #{basic_block_forward.6} parent=5 // pred_fallthru
      _
    %p127 = scmp.lt.s32.totalorder %s10, 2
    // Predicated region
    $region17: #{basic_block_forward.6} parent=5 // pred_check
      %p128 = pneg %p127
    $region18: #{basic_block_forward.6} parent=5 // pred_check_branch
      %130 = sbr.rel (%p128) target = $region20
    $region19: #{basic_block_forward.6} parent=5 // pred_region
      // Predicated region
      $region21: #{basic_block_forward.6} parent=19 // pred_check
        %p131 = pneg %p30
      $region22: #{basic_block_forward.6} parent=19 // pred_check_branch
        %133 = sbr.rel (%p131) target = $region24
      $region23: #{basic_block_forward.6} parent=19 // pred_region
        %p134 = scmp.lt.s32.totalorder %s10, 1
        %s135 = scalar_select %p134, %s10, 1
        %s136 = smul.addr %s135, 8
        %s137 = smul.addr %s136, 4
        %s138 = scalar_lea.vmem %s0, %s137
      $region24: #{basic_block_forward.6} parent=19 // pred_fallthru
        _
    $region20: #{basic_block_forward.6} parent=5 // pred_fallthru
      _
    %p139 = scmp.le.s32.totalorder 1, %s10
    %p140 = scmp.lt.s32.totalorder %s10, 3
    %p141 = pnand %p139, %p140
    %p142 = pneg %p141
    // Predicated region
    $region25: #{basic_block_forward.6} parent=5 // pred_check
      _
    $region26: #{basic_block_forward.6} parent=5 // pred_check_branch
      %144 = sbr.rel (%p141) target = $region28
    $region27: #{basic_block_forward.6} parent=5 // pred_region
      %s145 = ssub.s32 %s10, 1
      %p146 = scmp.lt.s32.totalorder %s15, 1
      %s147 = scalar_select %p146, %s15, 1
      %s148 = smul.addr %s147, 8
      %s149 = smul.addr %s148, 4
      %s150 = scalar_lea.vmem %s0, %s149
      %p151 = pneg %p36
      %p152 = pneg %p33
      %p153 = pneg %p57
      %p154 = pneg %p54
      %p155 = pneg %p83
      %p156 = pneg %p80
      %p157 = scmp.lt.s32.totalorder %s15, 1
      %s158 = scalar_select %p157, %s15, 1
      %s159 = smul.addr %s158, 8
      %s160 = smul.addr %s159, 4
      %s161 = scalar_lea.vmem %s2, %s160
      %p162 = pneg %p109
      %p163 = pneg %p106
      %p164 = scmp.lt.s32.totalorder %s15, 1
      %s165 = scalar_select %p164, %s15, 1
      %s166 = smul.addr %s165, 2
      %s167 = scalar_lea.vmem %s3, %s166
      %p168 = scmp.lt.s32.totalorder %s15, 1
      %s169 = scalar_select %p168, %s15, 1
      %s170 = smul.addr %s169, 8
      %s171 = smul.addr %s170, 4
      %s172 = scalar_lea.vmem %s0, %s171
      %p173 = scmp.lt.s32.totalorder %s15, 1
      %s174 = scalar_select %p173, %s15, 1
      %s175 = smul.addr %s174, 8
      %s176 = smul.addr %s175, 4
      %s177 = scalar_lea.vmem %s2, %s176
      %p178 = scmp.lt.s32.totalorder %s15, 1
      %s179 = scalar_select %p178, %s15, 1
      %s180 = smul.addr %s179, 2
      %s181 = scalar_lea.vmem %s3, %s180
      %v183 = vld [vmem:[%s172] sm:$0xf]
      %v184 = vld [vmem:[%s172 + $0x4] sm:$0xf]
      %v185 = vld [vmem:[%s172 + $0x8] sm:$0xf]
      %v186 = vld [vmem:[%s172 + $0xc] sm:$0xf]
      %v187 = vld [vmem:[%s172 + $0x10] sm:$0xf]
      %v188 = vld [vmem:[%s172 + $0x14] sm:$0xf]
      %v189 = vld [vmem:[%s172 + $0x18] sm:$0xf]
      %v190 = vld [vmem:[%s172 + $0x1c] sm:$0xf]
      %v191 = vld [vmem:[%s1] sm:$0xf]
      %v192 = vld [vmem:[%s1 + $0x4] sm:$0xf]
      %v193 = vld [vmem:[%s1 + $0x8] sm:$0xf]
      %v194 = vld [vmem:[%s1 + $0xc] sm:$0xf]
      %v195 = vld [vmem:[%s1 + $0x10] sm:$0xf]
      %v196 = vld [vmem:[%s1 + $0x14] sm:$0xf]
      %v197 = vld [vmem:[%s1 + $0x18] sm:$0xf]
      %v198 = vld [vmem:[%s1 + $0x1c] sm:$0xf]
      %v199 = vld [vmem:[%s1 + $0x20] sm:$0xf]
      %v200 = vld [vmem:[%s1 + $0x24] sm:$0xf]
      %v201 = vld [vmem:[%s1 + $0x28] sm:$0xf]
      %v202 = vld [vmem:[%s1 + $0x2c] sm:$0xf]
      %v203 = vld [vmem:[%s1 + $0x30] sm:$0xf]
      %v204 = vld [vmem:[%s1 + $0x34] sm:$0xf]
      %v205 = vld [vmem:[%s1 + $0x38] sm:$0xf]
      %v206 = vld [vmem:[%s1 + $0x3c] sm:$0xf]
      %v215 = vunpack.c.l.b16 %v183
      %v216 = vunpack.c.l.b16 %v184
      %v217 = vunpack.c.l.b16 %v185
      %v218 = vunpack.c.l.b16 %v186
      %v219 = vunpack.c.l.b16 %v187
      %v220 = vunpack.c.l.b16 %v188
      %v221 = vunpack.c.l.b16 %v189
      %v222 = vunpack.c.l.b16 %v190
      %v223 = vpack.c.b16 %v216, %v215
      %v224 = vpack.c.b16 %v218, %v217
      %v225 = vpack.c.b16 %v220, %v219
      %v226 = vpack.c.b16 %v222, %v221
      %v247 = vunpack.c.l.b16 %v191
      %v248 = vunpack.c.l.b16 %v192
      %v249 = vunpack.c.l.b16 %v193
      %v250 = vunpack.c.l.b16 %v194
      %v251 = vunpack.c.l.b16 %v195
      %v252 = vunpack.c.l.b16 %v196
      %v253 = vunpack.c.l.b16 %v197
      %v254 = vunpack.c.l.b16 %v198
      %v255 = vunpack.c.l.b16 %v199
      %v256 = vunpack.c.l.b16 %v200
      %v257 = vunpack.c.l.b16 %v201
      %v258 = vunpack.c.l.b16 %v202
      %v259 = vunpack.c.l.b16 %v203
      %v260 = vunpack.c.l.b16 %v204
      %v261 = vunpack.c.l.b16 %v205
      %v262 = vunpack.c.l.b16 %v206
      %v263 = vpack.c.b16 %v248, %v247
      %v264 = vpack.c.b16 %v250, %v249
      %v265 = vpack.c.b16 %v252, %v251
      %v266 = vpack.c.b16 %v254, %v253
      %v267 = vpack.c.b16 %v256, %v255
      %v268 = vpack.c.b16 %v258, %v257
      %v269 = vpack.c.b16 %v260, %v259
      %v270 = vpack.c.b16 %v262, %v261
      %279 = vmatprep.subr.bf16.mxu0 0
      %280 = vmatpush1.bf16.msra.mxu0 %v270
      %281 = vmatprep.subr.bf16.mxu0 0
      %282 = vmatpush1.bf16.msra.mxu0 %v269
      %283 = vmatprep.subr.bf16.mxu0 0
      %284 = vmatpush1.bf16.msra.mxu0 %v268
      %285 = vmatprep.subr.bf16.mxu0 0
      %286 = vmatpush1.bf16.msra.mxu0 %v267
      %287 = vmatprep.subr.bf16.mxu0 0
      %288 = vmatpush1.bf16.msra.mxu0 %v266
      %289 = vmatprep.subr.bf16.mxu0 0
      %290 = vmatpush1.bf16.msra.mxu0 %v265
      %291 = vmatprep.subr.bf16.mxu0 0
      %292 = vmatpush1.bf16.msra.mxu0 %v264
      %293 = vmatprep.subr.bf16.mxu0 0
      %294 = vmatpush1.bf16.msra.mxu0 %v263
      %295 = vmatprep.subr.bf16.mxu0 0
      %296 = vmatpush2.bf16.msra.mxu0 0
      %297 = vmatprep.subr.bf16.mxu0 0
      %298 = vmatpush2.bf16.msra.mxu0 0
      %299 = vmatprep.subr.bf16.mxu0 0
      %300 = vmatpush2.bf16.msra.mxu0 0
      %301 = vmatprep.subr.bf16.mxu0 0
      %302 = vmatpush2.bf16.msra.mxu0 0
      %303 = vmatprep.subr.bf16.mxu0 0
      %304 = vmatpush2.bf16.msra.mxu0 0
      %305 = vmatprep.subr.bf16.mxu0 0
      %306 = vmatpush2.bf16.msra.mxu0 0
      %307 = vmatprep.subr.bf16.mxu0 0
      %308 = vmatpush2.bf16.msra.mxu0 0
      %309 = vmatprep.subr.bf16.mxu0 0
      %310 = vmatpush2.bf16.msra.mxu0 0
      %311 = vmatprep.mubr.bf16.mxu0 0
      %312 = vmatmul.mubr.bf16.gmra.mxu0 %v223
      %v313 = vpop.f32.mrf.mxu0
      %v314 = vadd.f32 0.0, %v313
      %v315 = vpop.f32.mrf.mxu0
      %v316 = vpop.f32.mrf.mxu0
      %v317 = vadd.f32 0.0, %v316
      %v318 = vpop.f32.mrf.mxu0
      %319 = vmatprep.mubr.bf16.mxu0 0
      %320 = vmatmul.mubr.bf16.gmra.mxu0 %v224
      %v321 = vpop.f32.mrf.mxu0
      %v322 = vadd.f32 0.0, %v321
      %v323 = vpop.f32.mrf.mxu0
      %v324 = vpop.f32.mrf.mxu0
      %v325 = vadd.f32 0.0, %v324
      %v326 = vpop.f32.mrf.mxu0
      %327 = vmatprep.mubr.bf16.mxu0 0
      %328 = vmatmul.mubr.bf16.gmra.mxu0 %v225
      %v329 = vpop.f32.mrf.mxu0
      %v330 = vadd.f32 0.0, %v329
      %v331 = vpop.f32.mrf.mxu0
      %v332 = vpop.f32.mrf.mxu0
      %v333 = vadd.f32 0.0, %v332
      %v334 = vpop.f32.mrf.mxu0
      %335 = vmatprep.mubr.bf16.mxu0 0
      %336 = vmatmul.mubr.bf16.gmra.mxu0 %v226
      %v337 = vpop.f32.mrf.mxu0
      %v338 = vadd.f32 0.0, %v337
      %v339 = vpop.f32.mrf.mxu0
      %v340 = vpop.f32.mrf.mxu0
      %v341 = vadd.f32 0.0, %v340
      %v342 = vpop.f32.mrf.mxu0
      %343 = vdwg.mxu0
      %v344 = vpack.c.bf16 %v317, %v314
      %v345 = vpack.c.bf16 %v325, %v322
      %v346 = vpack.c.bf16 %v333, %v330
      %v347 = vpack.c.bf16 %v341, %v338
      %v352 = vunpack.c.l.b16 %v344
      %v353 = vunpack.c.h.b16 %v344
      %v354 = vunpack.c.l.b16 %v345
      %v355 = vunpack.c.h.b16 %v345
      %v356 = vunpack.c.l.b16 %v346
      %v357 = vunpack.c.h.b16 %v346
      %v358 = vunpack.c.l.b16 %v347
      %v359 = vunpack.c.h.b16 %v347
      %v360 = vpack.c.b16 %v352, %v352
      %v361 = vpack.c.b16 %v353, %v353
      %v362 = vpack.c.b16 %v354, %v354
      %v363 = vpack.c.b16 %v355, %v355
      %v364 = vpack.c.b16 %v356, %v356
      %v365 = vpack.c.b16 %v357, %v357
      %v366 = vpack.c.b16 %v358, %v358
      %v367 = vpack.c.b16 %v359, %v359
      %376 = vst [vmem:[%s177] sm:$0xf] %v360
      %377 = vst [vmem:[%s177 + $0x4] sm:$0xf] %v361
      %378 = vst [vmem:[%s177 + $0x8] sm:$0xf] %v362
      %379 = vst [vmem:[%s177 + $0xc] sm:$0xf] %v363
      %380 = vst [vmem:[%s177 + $0x10] sm:$0xf] %v364
      %381 = vst [vmem:[%s177 + $0x14] sm:$0xf] %v365
      %382 = vst [vmem:[%s177 + $0x18] sm:$0xf] %v366
      %383 = vst [vmem:[%s177 + $0x1c] sm:$0xf] %v367
      %v384 = vadd.f32 %v314, %v317
      %v385 = vadd.f32 %v384, %v322
      %v386 = vadd.f32 %v385, %v325
      %v387 = vadd.f32 %v386, %v330
      %v388 = vadd.f32 %v387, %v333
      %v389 = vadd.f32 %v388, %v338
      %v390 = vadd.f32 %v389, %v341
      %v391 = vrot.slane %v390, 4
      %v392 = vadd.f32 %v390, %v391
      %v393 = vrot.slane %v392, 2
      %v394 = vadd.f32 %v392, %v393
      %v395 = vrot.slane %v394, 1
      %v396 = vadd.f32 %v394, %v395
      %397 = vst [vmem:[%s181] sm:$0x1] %v396
      %v398 = vmul.f32 %v314, %v314
      %v399 = vmul.f32 %v317, %v317
      %v400 = vmul.f32 %v322, %v322
      %v401 = vmul.f32 %v325, %v325
      %v402 = vmul.f32 %v330, %v330
      %v403 = vmul.f32 %v333, %v333
      %v404 = vmul.f32 %v338, %v338
      %v405 = vmul.f32 %v341, %v341
      %v406 = vadd.f32 %v398, %v399
      %v407 = vadd.f32 %v406, %v400
      %v408 = vadd.f32 %v407, %v401
      %v409 = vadd.f32 %v408, %v402
      %v410 = vadd.f32 %v409, %v403
      %v411 = vadd.f32 %v410, %v404
      %v412 = vadd.f32 %v411, %v405
      %v413 = vrot.slane %v412, 4
      %v414 = vadd.f32 %v412, %v413
      %v415 = vrot.slane %v414, 2
      %v416 = vadd.f32 %v414, %v415
      %v417 = vrot.slane %v416, 1
      %v418 = vadd.f32 %v416, %v417
      %419 = vst [vmem:[%s181 + $0x1] sm:$0x1] %v418
      %p420 = scmp.lt.s32.totalorder %s15, 1
      %s421 = scalar_select %p420, %s15, 1
      %s422 = smul.addr %s421, 8
      %s423 = smul.addr %s422, 4
      %s424 = scalar_lea.vmem %s2, %s423
      %p425 = scmp.lt.s32.totalorder %s15, 1
      %s426 = scalar_select %p425, %s15, 1
      %s427 = smul.addr %s426, 2
      %s428 = scalar_lea.vmem %s3, %s427
      // Predicated region
      $region29: #{basic_block_forward.6} parent=27 // pred_check
        %p429 = pneg %p80
      $region30: #{basic_block_forward.6} parent=27 // pred_check_branch
        %431 = sbr.rel (%p429) target = $region32
      $region31: #{basic_block_forward.6} parent=27 // pred_region
        _
      $region32: #{basic_block_forward.6} parent=27 // pred_fallthru
        _
      // Predicated region
      $region33: #{basic_block_forward.6} parent=27 // pred_check
        %p432 = pneg %p106
      $region34: #{basic_block_forward.6} parent=27 // pred_check_branch
        %434 = sbr.rel (%p432) target = $region36
      $region35: #{basic_block_forward.6} parent=27 // pred_region
        _
      $region36: #{basic_block_forward.6} parent=27 // pred_fallthru
        _
    $region28: #{basic_block_forward.6} parent=5 // pred_fallthru
      _
    %p435 = scmp.le.s32.totalorder 2, %s10
    // Predicated region
    $region37: #{basic_block_forward.6} parent=5 // pred_check
      %p436 = pneg %p435
    $region38: #{basic_block_forward.6} parent=5 // pred_check_branch
      %438 = sbr.rel (%p436) target = $region40
    $region39: #{basic_block_forward.6} parent=5 // pred_region
      %s439 = ssub.s32 %s10, 2
      // Predicated region
      $region41: #{basic_block_forward.6} parent=39 // pred_check
        %p440 = pneg %p86
      $region42: #{basic_block_forward.6} parent=39 // pred_check_branch
        %442 = sbr.rel (%p440) target = $region44
      $region43: #{basic_block_forward.6} parent=39 // pred_region
        %p443 = scmp.lt.s32.totalorder %s16, 1
        %s444 = scalar_select %p443, %s16, 1
        %s445 = smul.addr %s444, 8
        %s446 = smul.addr %s445, 4
        %s447 = scalar_lea.vmem %s2, %s446
      $region44: #{basic_block_forward.6} parent=39 // pred_fallthru
        _
      // Predicated region
      $region45: #{basic_block_forward.6} parent=39 // pred_check
        %p448 = pneg %p112
      $region46: #{basic_block_forward.6} parent=39 // pred_check_branch
        %450 = sbr.rel (%p448) target = $region48
      $region47: #{basic_block_forward.6} parent=39 // pred_region
        %p451 = scmp.lt.s32.totalorder %s16, 1
        %s452 = scalar_select %p451, %s16, 1
        %s453 = smul.addr %s452, 2
        %s454 = scalar_lea.vmem %s3, %s453
      $region48: #{basic_block_forward.6} parent=39 // pred_fallthru
        _
    $region40: #{basic_block_forward.6} parent=5 // pred_fallthru
      _
  $region6: #{basic_block_forward.6} parent=0 // loop_footer
    %s14 = sadd.s32 1, %s10
  $region7: #{basic_block_forward.6} parent=0 // loop_footer_branch
    %9 = sbr.rel target = $region3
  $region8: #{basic_block_forward.6} parent=0 // loop_exit
    _

// kernel: basic_block_forward.7
$region0: #{basic_block_forward.7}
  #allocation0 [shape = 'u32[]', space=smem, size = 0x4, offset = 0x4, fixed_abs, tag = 'smem constant byte address 0x4 - core index']
  #allocation1 [shape = 'u32[144,128]{1,0:T(1,128)}', space=vmem, size = 0x12000, scoped, tag = 'internal scratch']
  %s0 = inlined_call_operand.vmem [shape: bf16[128,128], index: 0, kind: input, shape index: {}]
  %s1 = inlined_call_operand.vmem [shape: bf16[128,128], index: 1, kind: input, shape index: {}]
  %s2 = inlined_call_operand.vmem [shape: f32[1,128], index: 2, kind: input, shape index: {}]
  %s3 = inlined_call_operand.vmem [shape: f32[1,128], index: 3, kind: input, shape index: {}]
  %s4 = inlined_call_operand.vmem [shape: f32[1,128], index: 4, kind: input, shape index: {}]
  %s5 = inlined_call_operand.vmem [shape: f32[1,128], index: 5, kind: input, shape index: {}]
  %s6 = inlined_call_operand.vmem [shape: f32[128,128], index: 6, kind: output, shape index: {}]
  %s7 = sld [smem:[#allocation0]]
  $region34: #{basic_block_forward.7} parent=0
    _
  %s9 = ssub.s32 1, %s7
  %s10 = scalar_select 0, %s9, %s7
  // Predicated region
  $region2: #{basic_block_forward.7} parent=0 // pred_check
    _
  $region3: #{basic_block_forward.7} parent=0 // pred_check_branch
    %12 = sbr.rel (0) target = $region5
  $region4: #{basic_block_forward.7} parent=0 // pred_region
    _
  $region5: #{basic_block_forward.7} parent=0 // pred_fallthru
    _
  // Predicated region
  $region6: #{basic_block_forward.7} parent=0 // pred_check
    _
  $region7: #{basic_block_forward.7} parent=0 // pred_check_branch
    %14 = sbr.rel (0) target = $region9
  $region8: #{basic_block_forward.7} parent=0 // pred_region
    _
  $region9: #{basic_block_forward.7} parent=0 // pred_fallthru
    _
  // Predicated region
  $region10: #{basic_block_forward.7} parent=0 // pred_check
    _
  $region11: #{basic_block_forward.7} parent=0 // pred_check_branch
    %16 = sbr.rel (0) target = $region13
  $region12: #{basic_block_forward.7} parent=0 // pred_region
    _
  $region13: #{basic_block_forward.7} parent=0 // pred_fallthru
    _
  // Predicated region
  $region14: #{basic_block_forward.7} parent=0 // pred_check
    _
  $region15: #{basic_block_forward.7} parent=0 // pred_check_branch
    %18 = sbr.rel (0) target = $region17
  $region16: #{basic_block_forward.7} parent=0 // pred_region
    _
  $region17: #{basic_block_forward.7} parent=0 // pred_fallthru
    _
  // Predicated region
  $region18: #{basic_block_forward.7} parent=0 // pred_check
    _
  $region19: #{basic_block_forward.7} parent=0 // pred_check_branch
    %20 = sbr.rel (0) target = $region21
  $region20: #{basic_block_forward.7} parent=0 // pred_region
    _
  $region21: #{basic_block_forward.7} parent=0 // pred_fallthru
    _
  // Predicated region
  $region22: #{basic_block_forward.7} parent=0 // pred_check
    _
  $region23: #{basic_block_forward.7} parent=0 // pred_check_branch
    %22 = sbr.rel (0) target = $region25
  $region24: #{basic_block_forward.7} parent=0 // pred_region
    _
  $region25: #{basic_block_forward.7} parent=0 // pred_fallthru
    _
  %v23 = vld [vmem:[%s0] sm:$0xf]
  %v24 = vld [vmem:[%s0 + $0x4] sm:$0xf]
  %v25 = vld [vmem:[%s0 + $0x8] sm:$0xf]
  %v26 = vld [vmem:[%s0 + $0xc] sm:$0xf]
  %v27 = vld [vmem:[%s0 + $0x10] sm:$0xf]
  %v28 = vld [vmem:[%s0 + $0x14] sm:$0xf]
  %v29 = vld [vmem:[%s0 + $0x18] sm:$0xf]
  %v30 = vld [vmem:[%s0 + $0x1c] sm:$0xf]
  %v31 = vld [vmem:[%s0 + $0x20] sm:$0xf]
  %v32 = vld [vmem:[%s0 + $0x24] sm:$0xf]
  %v33 = vld [vmem:[%s0 + $0x28] sm:$0xf]
  %v34 = vld [vmem:[%s0 + $0x2c] sm:$0xf]
  %v35 = vld [vmem:[%s0 + $0x30] sm:$0xf]
  %v36 = vld [vmem:[%s0 + $0x34] sm:$0xf]
  %v37 = vld [vmem:[%s0 + $0x38] sm:$0xf]
  %v38 = vld [vmem:[%s0 + $0x3c] sm:$0xf]
  %v39 = vunpack.c.l.bf16 %v23
  %v40 = vunpack.c.l.bf16 %v24
  %v41 = vunpack.c.l.bf16 %v25
  %v42 = vunpack.c.l.bf16 %v26
  %v43 = vunpack.c.l.bf16 %v27
  %v44 = vunpack.c.l.bf16 %v28
  %v45 = vunpack.c.l.bf16 %v29
  %v46 = vunpack.c.l.bf16 %v30
  %v47 = vunpack.c.l.bf16 %v31
  %v48 = vunpack.c.l.bf16 %v32
  %v49 = vunpack.c.l.bf16 %v33
  %v50 = vunpack.c.l.bf16 %v34
  %v51 = vunpack.c.l.bf16 %v35
  %v52 = vunpack.c.l.bf16 %v36
  %v53 = vunpack.c.l.bf16 %v37
  %v54 = vunpack.c.l.bf16 %v38
  %v55 = vld [vmem:[%s2] sm:$0x1]
  %v57 = vlaneseq
  %v58 = vshrl.u32 %v57, 7
  %v59 = vsub.s32 0, %v58
  %v60 = vrot.slane %v55, %v59
  %v62 = vmul.f32 %v39, %v60
  %v63 = vmul.f32 %v40, %v60
  %v64 = vmul.f32 %v41, %v60
  %v65 = vmul.f32 %v42, %v60
  %v66 = vmul.f32 %v43, %v60
  %v67 = vmul.f32 %v44, %v60
  %v68 = vmul.f32 %v45, %v60
  %v69 = vmul.f32 %v46, %v60
  %v70 = vmul.f32 %v47, %v60
  %v71 = vmul.f32 %v48, %v60
  %v72 = vmul.f32 %v49, %v60
  %v73 = vmul.f32 %v50, %v60
  %v74 = vmul.f32 %v51, %v60
  %v75 = vmul.f32 %v52, %v60
  %v76 = vmul.f32 %v53, %v60
  %v77 = vmul.f32 %v54, %v60
  %v78 = vld [vmem:[%s3] sm:$0x1]
  %v80 = vlaneseq
  %v81 = vshrl.u32 %v80, 7
  %v82 = vsub.s32 0, %v81
  %v83 = vrot.slane %v78, %v82
  %v85 = vadd.f32 %v62, %v83
  %v86 = vadd.f32 %v63, %v83
  %v87 = vadd.f32 %v64, %v83
  %v88 = vadd.f32 %v65, %v83
  %v89 = vadd.f32 %v66, %v83
  %v90 = vadd.f32 %v67, %v83
  %v91 = vadd.f32 %v68, %v83
  %v92 = vadd.f32 %v69, %v83
  %v93 = vadd.f32 %v70, %v83
  %v94 = vadd.f32 %v71, %v83
  %v95 = vadd.f32 %v72, %v83
  %v96 = vadd.f32 %v73, %v83
  %v97 = vadd.f32 %v74, %v83
  %v98 = vadd.f32 %v75, %v83
  %v99 = vadd.f32 %v76, %v83
  %v100 = vadd.f32 %v77, %v83
  %v101 = vld [vmem:[%s1] sm:$0xf]
  %v102 = vld [vmem:[%s1 + $0x4] sm:$0xf]
  %v103 = vld [vmem:[%s1 + $0x8] sm:$0xf]
  %v104 = vld [vmem:[%s1 + $0xc] sm:$0xf]
  %v105 = vld [vmem:[%s1 + $0x10] sm:$0xf]
  %v106 = vld [vmem:[%s1 + $0x14] sm:$0xf]
  %v107 = vld [vmem:[%s1 + $0x18] sm:$0xf]
  %v108 = vld [vmem:[%s1 + $0x1c] sm:$0xf]
  %v109 = vld [vmem:[%s1 + $0x20] sm:$0xf]
  %v110 = vld [vmem:[%s1 + $0x24] sm:$0xf]
  %v111 = vld [vmem:[%s1 + $0x28] sm:$0xf]
  %v112 = vld [vmem:[%s1 + $0x2c] sm:$0xf]
  %v113 = vld [vmem:[%s1 + $0x30] sm:$0xf]
  %v114 = vld [vmem:[%s1 + $0x34] sm:$0xf]
  %v115 = vld [vmem:[%s1 + $0x38] sm:$0xf]
  %v116 = vld [vmem:[%s1 + $0x3c] sm:$0xf]
  %v117 = vunpack.c.l.bf16 %v101
  %v118 = vunpack.c.l.bf16 %v102
  %v119 = vunpack.c.l.bf16 %v103
  %v120 = vunpack.c.l.bf16 %v104
  %v121 = vunpack.c.l.bf16 %v105
  %v122 = vunpack.c.l.bf16 %v106
  %v123 = vunpack.c.l.bf16 %v107
  %v124 = vunpack.c.l.bf16 %v108
  %v125 = vunpack.c.l.bf16 %v109
  %v126 = vunpack.c.l.bf16 %v110
  %v127 = vunpack.c.l.bf16 %v111
  %v128 = vunpack.c.l.bf16 %v112
  %v129 = vunpack.c.l.bf16 %v113
  %v130 = vunpack.c.l.bf16 %v114
  %v131 = vunpack.c.l.bf16 %v115
  %v132 = vunpack.c.l.bf16 %v116
  %v133 = vld [vmem:[%s4] sm:$0x1]
  %v135 = vlaneseq
  %v136 = vshrl.u32 %v135, 7
  %v137 = vsub.s32 0, %v136
  %v138 = vrot.slane %v133, %v137
  %v140 = vmul.f32 %v117, %v138
  %v141 = vmul.f32 %v118, %v138
  %v142 = vmul.f32 %v119, %v138
  %v143 = vmul.f32 %v120, %v138
  %v144 = vmul.f32 %v121, %v138
  %v145 = vmul.f32 %v122, %v138
  %v146 = vmul.f32 %v123, %v138
  %v147 = vmul.f32 %v124, %v138
  %v148 = vmul.f32 %v125, %v138
  %v149 = vmul.f32 %v126, %v138
  %v150 = vmul.f32 %v127, %v138
  %v151 = vmul.f32 %v128, %v138
  %v152 = vmul.f32 %v129, %v138
  %v153 = vmul.f32 %v130, %v138
  %v154 = vmul.f32 %v131, %v138
  %v155 = vmul.f32 %v132, %v138
  %v156 = vld [vmem:[%s5] sm:$0x1]
  %v158 = vlaneseq
  %v159 = vshrl.u32 %v158, 7
  %v160 = vsub.s32 0, %v159
  %v161 = vrot.slane %v156, %v160
  %v163 = vadd.f32 %v140, %v161
  %v164 = vadd.f32 %v141, %v161
  %v165 = vadd.f32 %v142, %v161
  %v166 = vadd.f32 %v143, %v161
  %v167 = vadd.f32 %v144, %v161
  %v168 = vadd.f32 %v145, %v161
  %v169 = vadd.f32 %v146, %v161
  %v170 = vadd.f32 %v147, %v161
  %v171 = vadd.f32 %v148, %v161
  %v172 = vadd.f32 %v149, %v161
  %v173 = vadd.f32 %v150, %v161
  %v174 = vadd.f32 %v151, %v161
  %v175 = vadd.f32 %v152, %v161
  %v176 = vadd.f32 %v153, %v161
  %v177 = vadd.f32 %v154, %v161
  %v178 = vadd.f32 %v155, %v161
  %v179 = vadd.f32 %v85, %v163
  %v180 = vadd.f32 %v86, %v164
  %v181 = vadd.f32 %v87, %v165
  %v182 = vadd.f32 %v88, %v166
  %v183 = vadd.f32 %v89, %v167
  %v184 = vadd.f32 %v90, %v168
  %v185 = vadd.f32 %v91, %v169
  %v186 = vadd.f32 %v92, %v170
  %v187 = vadd.f32 %v93, %v171
  %v188 = vadd.f32 %v94, %v172
  %v189 = vadd.f32 %v95, %v173
  %v190 = vadd.f32 %v96, %v174
  %v191 = vadd.f32 %v97, %v175
  %v192 = vadd.f32 %v98, %v176
  %v193 = vadd.f32 %v99, %v177
  %v194 = vadd.f32 %v100, %v178
  %v195 = vmax.f32 %v179, 0.0
  %v196 = vmax.f32 %v180, 0.0
  %v197 = vmax.f32 %v181, 0.0
  %v198 = vmax.f32 %v182, 0.0
  %v199 = vmax.f32 %v183, 0.0
  %v200 = vmax.f32 %v184, 0.0
  %v201 = vmax.f32 %v185, 0.0
  %v202 = vmax.f32 %v186, 0.0
  %v203 = vmax.f32 %v187, 0.0
  %v204 = vmax.f32 %v188, 0.0
  %v205 = vmax.f32 %v189, 0.0
  %v206 = vmax.f32 %v190, 0.0
  %v207 = vmax.f32 %v191, 0.0
  %v208 = vmax.f32 %v192, 0.0
  %v209 = vmax.f32 %v193, 0.0
  %v210 = vmax.f32 %v194, 0.0
  %211 = vst [vmem:[%s6] sm:$0xff] %v195
  %212 = vst [vmem:[%s6 + $0x8] sm:$0xff] %v196
  %213 = vst [vmem:[%s6 + $0x10] sm:$0xff] %v197
  %214 = vst [vmem:[%s6 + $0x18] sm:$0xff] %v198
  %215 = vst [vmem:[%s6 + $0x20] sm:$0xff] %v199
  %216 = vst [vmem:[%s6 + $0x28] sm:$0xff] %v200
  %217 = vst [vmem:[%s6 + $0x30] sm:$0xff] %v201
  %218 = vst [vmem:[%s6 + $0x38] sm:$0xff] %v202
  %219 = vst [vmem:[%s6 + $0x40] sm:$0xff] %v203
  %220 = vst [vmem:[%s6 + $0x48] sm:$0xff] %v204
  %221 = vst [vmem:[%s6 + $0x50] sm:$0xff] %v205
  %222 = vst [vmem:[%s6 + $0x58] sm:$0xff] %v206
  %223 = vst [vmem:[%s6 + $0x60] sm:$0xff] %v207
  %224 = vst [vmem:[%s6 + $0x68] sm:$0xff] %v208
  %225 = vst [vmem:[%s6 + $0x70] sm:$0xff] %v209
  %226 = vst [vmem:[%s6 + $0x78] sm:$0xff] %v210
  // Predicated region
  $region26: #{basic_block_forward.7} parent=0 // pred_check
    _
  $region27: #{basic_block_forward.7} parent=0 // pred_check_branch
    %228 = sbr.rel (0) target = $region29
  $region28: #{basic_block_forward.7} parent=0 // pred_region
    _
  $region29: #{basic_block_forward.7} parent=0 // pred_fallthru
    _
  // Predicated region
  $region30: #{basic_block_forward.7} parent=0 // pred_check
    _
  $region31: #{basic_block_forward.7} parent=0 // pred_check_branch
    %230 = sbr.rel (0) target = $region33
  $region32: #{basic_block_forward.7} parent=0 // pred_region
    _
  $region33: #{basic_block_forward.7} parent=0 // pred_fallthru
    _

// kernel: basic_block_forward.4
$region0: #{basic_block_forward.4}
  #allocation0 [shape = 'u32[]', space=smem, size = 0x4, offset = 0x4, fixed_abs, tag = 'smem constant byte address 0x4 - core index']
  #allocation1 [shape = 'u32[144,128]{1,0:T(1,128)}', space=vmem, size = 0x12000, scoped, tag = 'internal scratch']
  %s0 = inlined_call_operand.vmem [shape: bf16[2,36,9,128], index: 0, kind: input, shape index: {}]
  %s1 = inlined_call_operand.vmem [shape: bf16[9,128,128], index: 1, kind: input, shape index: {}]
  %s2 = inlined_call_operand.vmem [shape: bf16[2,64,128], index: 2, kind: output, shape index: {0}]
  %s3 = inlined_call_operand.vmem [shape: f32[2,2,128], index: 3, kind: output, shape index: {1}]
  %4 = xla_tuple %s2, %s3
  %s5 = sld [smem:[#allocation0]]
  $region49: #{basic_block_forward.4} parent=0
    _
  %s7 = ssub.s32 1, %s5
  %s8 = scalar_select 0, %s7, %s5
  loop: start=0, step=1, limit=4
  $region2: #{basic_block_forward.4} parent=0 // loop_pre_header
    _
  $region3: #{basic_block_forward.4} parent=0 // loop_header
    %s10 = sphi 0, %s14
    %p11 = scmp.ge.s32.totalorder %s10, 4
    %s20 = sphi 0, %s22
    %s23 = sphi 0, %s20
    %s24 = sphi 0, %s23
    %s40 = sphi 0, %s24
    %s44 = sphi 0, %s44
    %s46 = sphi 0, %s44
    %s47 = sphi 0, %s46
    %s61 = sphi 0, %s47
    %s67 = sphi 0, %s69
    %s70 = sphi 0, %s67
    %s71 = sphi 0, %s70
    %s87 = sphi 0, %s71
    %s93 = sphi 0, %s95
    %s96 = sphi 0, %s93
    %s97 = sphi 0, %s96
    %s113 = sphi 0, %s97
  $region4: #{basic_block_forward.4} parent=0 // loop_header_branch
    %13 = sbr.rel (%p11) target = $region8
  $region5: #{basic_block_forward.4} parent=0 // loop_body
    %s15 = ssub.s32 %s10, 1
    %s16 = ssub.s32 %s10, 2
    %s17 = sadd.s32 %s10, 1
    %s18 = ssub.s32 %s10, %s17
    %p19 = scmp.eq.s32.totalorder %s18, 0
    %s21 = sadd.s32 %s20, 1
    %s22 = scalar_select %p19, %s20, %s21
    %p25 = pneg %p19
    %p26 = scmp.eq.s32.totalorder %s10, 1
    %p27 = por %p25, %p26
    %p28 = scmp.ne.s32.totalorder %s20, %s23
    %p29 = scmp.eq.s32.totalorder %s10, 0
    %p30 = por %p28, %p29
    %p31 = scmp.ne.s32.totalorder %s20, %s23
    %p32 = scmp.eq.s32.totalorder %s15, 1
    %p33 = por %p31, %p32
    %p34 = scmp.ne.s32.totalorder %s23, %s24
    %p35 = scmp.eq.s32.totalorder %s15, 0
    %p36 = por %p34, %p35
    %p37 = scmp.ne.s32.totalorder %s23, %s24
    %p38 = scmp.eq.s32.totalorder %s16, 1
    %p39 = por %p37, %p38
    %p41 = scmp.ne.s32.totalorder %s24, %s40
    %p42 = scmp.eq.s32.totalorder %s16, 0
    %p43 = por %p41, %p42
    %s45 = sadd.s32 %s44, 1
    %p48 = scmp.eq.s32.totalorder %s10, 1
    %p49 = scmp.ne.s32.totalorder %s44, %s46
    %p50 = scmp.eq.s32.totalorder %s10, 0
    %p51 = por %p49, %p50
    %p52 = scmp.ne.s32.totalorder %s44, %s46
    %p53 = scmp.eq.s32.totalorder %s15, 1
    %p54 = por %p52, %p53
    %p55 = scmp.ne.s32.totalorder %s46, %s47
    %p56 = scmp.eq.s32.totalorder %s15, 0
    %p57 = por %p55, %p56
    %p58 = scmp.ne.s32.totalorder %s46, %s47
    %p59 = scmp.eq.s32.totalorder %s16, 1
    %p60 = por %p58, %p59
    %p62 = scmp.ne.s32.totalorder %s47, %s61
    %p63 = scmp.eq.s32.totalorder %s16, 0
    %p64 = por %p62, %p63
    %s65 = ssub.s32 %s10, %s17
    %p66 = scmp.eq.s32.totalorder %s65, 0
    %s68 = sadd.s32 %s67, 1
    %s69 = scalar_select %p66, %s67, %s68
    %p72 = pneg %p66
    %p73 = scmp.eq.s32.totalorder %s10, 1
    %p74 = por %p72, %p73
    %p75 = scmp.ne.s32.totalorder %s67, %s70
    %p76 = scmp.eq.s32.totalorder %s10, 0
    %p77 = por %p75, %p76
    %p78 = scmp.ne.s32.totalorder %s67, %s70
    %p79 = scmp.eq.s32.totalorder %s15, 1
    %p80 = por %p78, %p79
    %p81 = scmp.ne.s32.totalorder %s70, %s71
    %p82 = scmp.eq.s32.totalorder %s15, 0
    %p83 = por %p81, %p82
    %p84 = scmp.ne.s32.totalorder %s70, %s71
    %p85 = scmp.eq.s32.totalorder %s16, 1
    %p86 = por %p84, %p85
    %p88 = scmp.ne.s32.totalorder %s71, %s87
    %p89 = scmp.eq.s32.totalorder %s16, 0
    %p90 = por %p88, %p89
    %s91 = ssub.s32 %s10, %s17
    %p92 = scmp.eq.s32.totalorder %s91, 0
    %s94 = sadd.s32 %s93, 1
    %s95 = scalar_select %p92, %s93, %s94
    %p98 = pneg %p92
    %p99 = scmp.eq.s32.totalorder %s10, 1
    %p100 = por %p98, %p99
    %p101 = scmp.ne.s32.totalorder %s93, %s96
    %p102 = scmp.eq.s32.totalorder %s10, 0
    %p103 = por %p101, %p102
    %p104 = scmp.ne.s32.totalorder %s93, %s96
    %p105 = scmp.eq.s32.totalorder %s15, 1
    %p106 = por %p104, %p105
    %p107 = scmp.ne.s32.totalorder %s96, %s97
    %p108 = scmp.eq.s32.totalorder %s15, 0
    %p109 = por %p107, %p108
    %p110 = scmp.ne.s32.totalorder %s96, %s97
    %p111 = scmp.eq.s32.totalorder %s16, 1
    %p112 = por %p110, %p111
    %p114 = scmp.ne.s32.totalorder %s97, %s113
    %p115 = scmp.eq.s32.totalorder %s16, 0
    %p116 = por %p114, %p115
    %p117 = scmp.le.s32.totalorder 1, %s10
    %p118 = scmp.lt.s32.totalorder %s10, 3
    %p119 = pnand %p117, %p118
    %p120 = pneg %p119
    // Predicated region
    $region9: #{basic_block_forward.4} parent=5 // pred_check
      _
    $region10: #{basic_block_forward.4} parent=5 // pred_check_branch
      %122 = sbr.rel (%p119) target = $region12
    $region11: #{basic_block_forward.4} parent=5 // pred_region
      %s123 = ssub.s32 %s10, 1
      // Predicated region
      $region13: #{basic_block_forward.4} parent=11 // pred_check
        %p124 = pneg %p57
      $region14: #{basic_block_forward.4} parent=11 // pred_check_branch
        %126 = sbr.rel (%p124) target = $region16
      $region15: #{basic_block_forward.4} parent=11 // pred_region
        _
      $region16: #{basic_block_forward.4} parent=11 // pred_fallthru
        _
    $region12: #{basic_block_forward.4} parent=5 // pred_fallthru
      _
    %p127 = scmp.lt.s32.totalorder %s10, 2
    // Predicated region
    $region17: #{basic_block_forward.4} parent=5 // pred_check
      %p128 = pneg %p127
    $region18: #{basic_block_forward.4} parent=5 // pred_check_branch
      %130 = sbr.rel (%p128) target = $region20
    $region19: #{basic_block_forward.4} parent=5 // pred_region
      // Predicated region
      $region21: #{basic_block_forward.4} parent=19 // pred_check
        %p131 = pneg %p30
      $region22: #{basic_block_forward.4} parent=19 // pred_check_branch
        %133 = sbr.rel (%p131) target = $region24
      $region23: #{basic_block_forward.4} parent=19 // pred_region
        %p134 = scmp.lt.s32.totalorder %s10, 1
        %s135 = scalar_select %p134, %s10, 1
        %s136 = smul.addr %s135, 72
        %s137 = smul.addr %s136, 4
        %s138 = scalar_lea.vmem %s0, %s137
      $region24: #{basic_block_forward.4} parent=19 // pred_fallthru
        _
    $region20: #{basic_block_forward.4} parent=5 // pred_fallthru
      _
    %p139 = scmp.le.s32.totalorder 1, %s10
    %p140 = scmp.lt.s32.totalorder %s10, 3
    %p141 = pnand %p139, %p140
    %p142 = pneg %p141
    // Predicated region
    $region25: #{basic_block_forward.4} parent=5 // pred_check
      _
    $region26: #{basic_block_forward.4} parent=5 // pred_check_branch
      %144 = sbr.rel (%p141) target = $region28
    $region27: #{basic_block_forward.4} parent=5 // pred_region
      %s145 = ssub.s32 %s10, 1
      %p146 = scmp.lt.s32.totalorder %s15, 1
      %s147 = scalar_select %p146, %s15, 1
      %s148 = smul.addr %s147, 72
      %s149 = smul.addr %s148, 4
      %s150 = scalar_lea.vmem %s0, %s149
      %p151 = pneg %p36
      %p152 = pneg %p33
      %p153 = pneg %p57
      %p154 = pneg %p54
      %p155 = pneg %p83
      %p156 = pneg %p80
      %p157 = scmp.lt.s32.totalorder %s15, 1
      %s158 = scalar_select %p157, %s15, 1
      %s159 = smul.addr %s158, 8
      %s160 = smul.addr %s159, 4
      %s161 = scalar_lea.vmem %s2, %s160
      %p162 = pneg %p109
      %p163 = pneg %p106
      %p164 = scmp.lt.s32.totalorder %s15, 1
      %s165 = scalar_select %p164, %s15, 1
      %s166 = smul.addr %s165, 2
      %s167 = scalar_lea.vmem %s3, %s166
      %p168 = scmp.lt.s32.totalorder %s15, 1
      %s169 = scalar_select %p168, %s15, 1
      %s170 = smul.addr %s169, 72
      %s171 = smul.addr %s170, 4
      %s172 = scalar_lea.vmem %s0, %s171
      %p173 = scmp.lt.s32.totalorder %s15, 1
      %s174 = scalar_select %p173, %s15, 1
      %s175 = smul.addr %s174, 8
      %s176 = smul.addr %s175, 4
      %s177 = scalar_lea.vmem %s2, %s176
      %p178 = scmp.lt.s32.totalorder %s15, 1
      %s179 = scalar_select %p178, %s15, 1
      %s180 = smul.addr %s179, 2
      %s181 = scalar_lea.vmem %s3, %s180
      %v183 = vld [vmem:[%s172] sm:$0xf]
      %v184 = vld [vmem:[%s172 + $0x4] sm:$0x1]
      %v185 = vld [vmem:[%s172 + $0x8] sm:$0xf]
      %v186 = vld [vmem:[%s172 + $0xc] sm:$0x1]
      %v187 = vld [vmem:[%s172 + $0x10] sm:$0xf]
      %v188 = vld [vmem:[%s172 + $0x14] sm:$0x1]
      %v189 = vld [vmem:[%s172 + $0x18] sm:$0xf]
      %v190 = vld [vmem:[%s172 + $0x1c] sm:$0x1]
      %v191 = vld [vmem:[%s172 + $0x20] sm:$0xf]
      %v192 = vld [vmem:[%s172 + $0x24] sm:$0x1]
      %v193 = vld [vmem:[%s172 + $0x28] sm:$0xf]
      %v194 = vld [vmem:[%s172 + $0x2c] sm:$0x1]
      %v195 = vld [vmem:[%s172 + $0x30] sm:$0xf]
      %v196 = vld [vmem:[%s172 + $0x34] sm:$0x1]
      %v197 = vld [vmem:[%s172 + $0x38] sm:$0xf]
      %v198 = vld [vmem:[%s172 + $0x3c] sm:$0x1]
      %v199 = vld [vmem:[%s172 + $0x40] sm:$0xf]
      %v200 = vld [vmem:[%s172 + $0x44] sm:$0x1]
      %v201 = vld [vmem:[%s172 + $0x48] sm:$0xf]
      %v202 = vld [vmem:[%s172 + $0x50] sm:$0xf]
      %v203 = vld [vmem:[%s172 + $0x58] sm:$0xf]
      %v204 = vld [vmem:[%s172 + $0x60] sm:$0xf]
      %v205 = vld [vmem:[%s172 + $0x68] sm:$0xf]
      %v206 = vld [vmem:[%s172 + $0x70] sm:$0xf]
      %v207 = vld [vmem:[%s172 + $0x78] sm:$0xf]
      %v208 = vld [vmem:[%s172 + $0x80] sm:$0xf]
      %v209 = vld [vmem:[%s172 + $0x88] sm:$0xf]
      %v210 = vld [vmem:[%s172 + $0x90] sm:$0xf]
      %v211 = vld [vmem:[%s172 + $0x94] sm:$0x1]
      %v212 = vld [vmem:[%s172 + $0x98] sm:$0xf]
      %v213 = vld [vmem:[%s172 + $0x9c] sm:$0x1]
      %v214 = vld [vmem:[%s172 + $0xa0] sm:$0xf]
      %v215 = vld [vmem:[%s172 + $0xa4] sm:$0x1]
      %v216 = vld [vmem:[%s172 + $0xa8] sm:$0xf]
      %v217 = vld [vmem:[%s172 + $0xac] sm:$0x1]
      %v218 = vld [vmem:[%s172 + $0xb0] sm:$0xf]
      %v219 = vld [vmem:[%s172 + $0xb4] sm:$0x1]
      %v220 = vld [vmem:[%s172 + $0xb8] sm:$0xf]
      %v221 = vld [vmem:[%s172 + $0xbc] sm:$0x1]
      %v222 = vld [vmem:[%s172 + $0xc0] sm:$0xf]
      %v223 = vld [vmem:[%s172 + $0xc4] sm:$0x1]
      %v224 = vld [vmem:[%s172 + $0xc8] sm:$0xf]
      %v225 = vld [vmem:[%s172 + $0xcc] sm:$0x1]
      %v226 = vld [vmem:[%s172 + $0xd8] sm:$0xf]
      %v227 = vld [vmem:[%s172 + $0xe0] sm:$0xf]
      %v228 = vld [vmem:[%s172 + $0xe8] sm:$0xf]
      %v229 = vld [vmem:[%s172 + $0xf0] sm:$0xf]
      %v230 = vld [vmem:[%s172 + $0xf8] sm:$0xf]
      %v231 = vld [vmem:[%s172 + $0x100] sm:$0xf]
      %v232 = vld [vmem:[%s172 + $0x108] sm:$0xf]
      %v233 = vld [vmem:[%s172 + $0x110] sm:$0xf]
      %v234 = vld [vmem:[%s1] sm:$0xf]
      %v235 = vld [vmem:[%s1 + $0x4] sm:$0xf]
      %v236 = vld [vmem:[%s1 + $0x8] sm:$0xf]
      %v237 = vld [vmem:[%s1 + $0xc] sm:$0xf]
      %v238 = vld [vmem:[%s1 + $0x10] sm:$0xf]
      %v239 = vld [vmem:[%s1 + $0x14] sm:$0xf]
      %v240 = vld [vmem:[%s1 + $0x18] sm:$0xf]
      %v241 = vld [vmem:[%s1 + $0x1c] sm:$0xf]
      %v242 = vld [vmem:[%s1 + $0x20] sm:$0xf]
      %v243 = vld [vmem:[%s1 + $0x24] sm:$0xf]
      %v244 = vld [vmem:[%s1 + $0x28] sm:$0xf]
      %v245 = vld [vmem:[%s1 + $0x2c] sm:$0xf]
      %v246 = vld [vmem:[%s1 + $0x30] sm:$0xf]
      %v247 = vld [vmem:[%s1 + $0x34] sm:$0xf]
      %v248 = vld [vmem:[%s1 + $0x38] sm:$0xf]
      %v249 = vld [vmem:[%s1 + $0x3c] sm:$0xf]
      %s250 = scalar_lea.vmem %s1, 64
      %v251 = vld [vmem:[%s250] sm:$0xf]
      %v252 = vld [vmem:[%s250 + $0x4] sm:$0xf]
      %v253 = vld [vmem:[%s250 + $0x8] sm:$0xf]
      %v254 = vld [vmem:[%s250 + $0xc] sm:$0xf]
      %v255 = vld [vmem:[%s250 + $0x10] sm:$0xf]
      %v256 = vld [vmem:[%s250 + $0x14] sm:$0xf]
      %v257 = vld [vmem:[%s250 + $0x18] sm:$0xf]
      %v258 = vld [vmem:[%s250 + $0x1c] sm:$0xf]
      %v259 = vld [vmem:[%s250 + $0x20] sm:$0xf]
      %v260 = vld [vmem:[%s250 + $0x24] sm:$0xf]
      %v261 = vld [vmem:[%s250 + $0x28] sm:$0xf]
      %v262 = vld [vmem:[%s250 + $0x2c] sm:$0xf]
      %v263 = vld [vmem:[%s250 + $0x30] sm:$0xf]
      %v264 = vld [vmem:[%s250 + $0x34] sm:$0xf]
      %v265 = vld [vmem:[%s250 + $0x38] sm:$0xf]
      %v266 = vld [vmem:[%s250 + $0x3c] sm:$0xf]
      %v275 = vunpack.c.l.b16 %v201
      %v276 = vunpack.c.l.b16 %v202
      %v277 = vunpack.c.l.b16 %v203
      %v278 = vunpack.c.l.b16 %v204
      %v279 = vunpack.c.l.b16 %v205
      %v280 = vunpack.c.l.b16 %v206
      %v281 = vunpack.c.l.b16 %v207
      %v282 = vunpack.c.l.b16 %v208
      %v283 = vpack.c.b16 %v276, %v275
      %v284 = vpack.c.b16 %v278, %v277
      %v285 = vpack.c.b16 %v280, %v279
      %v286 = vpack.c.b16 %v282, %v281
      %v307 = vunpack.c.l.b16 %v251
      %v308 = vunpack.c.l.b16 %v252
      %v309 = vunpack.c.l.b16 %v253
      %v310 = vunpack.c.l.b16 %v254
      %v311 = vunpack.c.l.b16 %v255
      %v312 = vunpack.c.l.b16 %v256
      %v313 = vunpack.c.l.b16 %v257
      %v314 = vunpack.c.l.b16 %v258
      %v315 = vunpack.c.l.b16 %v259
      %v316 = vunpack.c.l.b16 %v260
      %v317 = vunpack.c.l.b16 %v261
      %v318 = vunpack.c.l.b16 %v262
      %v319 = vunpack.c.l.b16 %v263
      %v320 = vunpack.c.l.b16 %v264
      %v321 = vunpack.c.l.b16 %v265
      %v322 = vunpack.c.l.b16 %v266
      %v323 = vpack.c.b16 %v308, %v307
      %v324 = vpack.c.b16 %v310, %v309
      %v325 = vpack.c.b16 %v312, %v311
      %v326 = vpack.c.b16 %v314, %v313
      %v327 = vpack.c.b16 %v316, %v315
      %v328 = vpack.c.b16 %v318, %v317
      %v329 = vpack.c.b16 %v320, %v319
      %v330 = vpack.c.b16 %v322, %v321
      %339 = vmatprep.subr.bf16.mxu0 0
      %340 = vmatpush1.bf16.msra.mxu0 %v330
      %341 = vmatprep.subr.bf16.mxu0 0
      %342 = vmatpush1.bf16.msra.mxu0 %v329
      %343 = vmatprep.subr.bf16.mxu0 0
      %344 = vmatpush1.bf16.msra.mxu0 %v328
      %345 = vmatprep.subr.bf16.mxu0 0
      %346 = vmatpush1.bf16.msra.mxu0 %v327
      %347 = vmatprep.subr.bf16.mxu0 0
      %348 = vmatpush1.bf16.msra.mxu0 %v326
      %349 = vmatprep.subr.bf16.mxu0 0
      %350 = vmatpush1.bf16.msra.mxu0 %v325
      %351 = vmatprep.subr.bf16.mxu0 0
      %352 = vmatpush1.bf16.msra.mxu0 %v324
      %353 = vmatprep.subr.bf16.mxu0 0
      %354 = vmatpush1.bf16.msra.mxu0 %v323
      %355 = vmatprep.subr.bf16.mxu0 0
      %356 = vmatpush2.bf16.msra.mxu0 0
      %357 = vmatprep.subr.bf16.mxu0 0
      %358 = vmatpush2.bf16.msra.mxu0 0
      %359 = vmatprep.subr.bf16.mxu0 0
      %360 = vmatpush2.bf16.msra.mxu0 0
      %361 = vmatprep.subr.bf16.mxu0 0
      %362 = vmatpush2.bf16.msra.mxu0 0
      %363 = vmatprep.subr.bf16.mxu0 0
      %364 = vmatpush2.bf16.msra.mxu0 0
      %365 = vmatprep.subr.bf16.mxu0 0
      %366 = vmatpush2.bf16.msra.mxu0 0
      %367 = vmatprep.subr.bf16.mxu0 0
      %368 = vmatpush2.bf16.msra.mxu0 0
      %369 = vmatprep.subr.bf16.mxu0 0
      %370 = vmatpush2.bf16.msra.mxu0 0
      %371 = vmatprep.mubr.bf16.mxu0 0
      %372 = vmatmul.mubr.bf16.gmra.mxu0 %v283
      %v373 = vpop.f32.mrf.mxu0
      %v374 = vadd.f32 0.0, %v373
      %v375 = vpop.f32.mrf.mxu0
      %v376 = vpop.f32.mrf.mxu0
      %v377 = vadd.f32 0.0, %v376
      %v378 = vpop.f32.mrf.mxu0
      %379 = vmatprep.mubr.bf16.mxu0 0
      %380 = vmatmul.mubr.bf16.gmra.mxu0 %v284
      %v381 = vpop.f32.mrf.mxu0
      %v382 = vadd.f32 0.0, %v381
      %v383 = vpop.f32.mrf.mxu0
      %v384 = vpop.f32.mrf.mxu0
      %v385 = vadd.f32 0.0, %v384
      %v386 = vpop.f32.mrf.mxu0
      %387 = vmatprep.mubr.bf16.mxu0 0
      %388 = vmatmul.mubr.bf16.gmra.mxu0 %v285
      %v389 = vpop.f32.mrf.mxu0
      %v390 = vadd.f32 0.0, %v389
      %v391 = vpop.f32.mrf.mxu0
      %v392 = vpop.f32.mrf.mxu0
      %v393 = vadd.f32 0.0, %v392
      %v394 = vpop.f32.mrf.mxu0
      %395 = vmatprep.mubr.bf16.mxu0 0
      %396 = vmatmul.mubr.bf16.gmra.mxu0 %v286
      %v397 = vpop.f32.mrf.mxu0
      %v398 = vadd.f32 0.0, %v397
      %v399 = vpop.f32.mrf.mxu0
      %v400 = vpop.f32.mrf.mxu0
      %v401 = vadd.f32 0.0, %v400
      %v402 = vpop.f32.mrf.mxu0
      %403 = vdwg.mxu0
      %v412 = vunpack.c.l.b16 %v183
      %v413 = vunpack.c.l.b16 %v185
      %v414 = vunpack.c.l.b16 %v187
      %v415 = vunpack.c.l.b16 %v189
      %v416 = vunpack.c.l.b16 %v191
      %v417 = vunpack.c.l.b16 %v193
      %v418 = vunpack.c.l.b16 %v195
      %v419 = vunpack.c.l.b16 %v197
      %v420 = vpack.c.b16 %v413, %v412
      %v421 = vpack.c.b16 %v415, %v414
      %v422 = vpack.c.b16 %v417, %v416
      %v423 = vpack.c.b16 %v419, %v418
      %v444 = vunpack.c.l.b16 %v234
      %v445 = vunpack.c.l.b16 %v235
      %v446 = vunpack.c.l.b16 %v236
      %v447 = vunpack.c.l.b16 %v237
      %v448 = vunpack.c.l.b16 %v238
      %v449 = vunpack.c.l.b16 %v239
      %v450 = vunpack.c.l.b16 %v240
      %v451 = vunpack.c.l.b16 %v241
      %v452 = vunpack.c.l.b16 %v242
      %v453 = vunpack.c.l.b16 %v243
      %v454 = vunpack.c.l.b16 %v244
      %v455 = vunpack.c.l.b16 %v245
      %v456 = vunpack.c.l.b16 %v246
      %v457 = vunpack.c.l.b16 %v247
      %v458 = vunpack.c.l.b16 %v248
      %v459 = vunpack.c.l.b16 %v249
      %v460 = vpack.c.b16 %v445, %v444
      %v461 = vpack.c.b16 %v447, %v446
      %v462 = vpack.c.b16 %v449, %v448
      %v463 = vpack.c.b16 %v451, %v450
      %v464 = vpack.c.b16 %v453, %v452
      %v465 = vpack.c.b16 %v455, %v454
      %v466 = vpack.c.b16 %v457, %v456
      %v467 = vpack.c.b16 %v459, %v458
      %476 = vmatprep.subr.bf16.mxu0 0
      %477 = vmatpush1.bf16.msra.mxu0 %v467
      %478 = vmatprep.subr.bf16.mxu0 0
      %479 = vmatpush1.bf16.msra.mxu0 %v466
      %480 = vmatprep.subr.bf16.mxu0 0
      %481 = vmatpush1.bf16.msra.mxu0 %v465
      %482 = vmatprep.subr.bf16.mxu0 0
      %483 = vmatpush1.bf16.msra.mxu0 %v464
      %484 = vmatprep.subr.bf16.mxu0 0
      %485 = vmatpush1.bf16.msra.mxu0 %v463
      %486 = vmatprep.subr.bf16.mxu0 0
      %487 = vmatpush1.bf16.msra.mxu0 %v462
      %488 = vmatprep.subr.bf16.mxu0 0
      %489 = vmatpush1.bf16.msra.mxu0 %v461
      %490 = vmatprep.subr.bf16.mxu0 0
      %491 = vmatpush1.bf16.msra.mxu0 %v460
      %492 = vmatprep.subr.bf16.mxu0 0
      %493 = vmatpush2.bf16.msra.mxu0 0
      %494 = vmatprep.subr.bf16.mxu0 0
      %495 = vmatpush2.bf16.msra.mxu0 0
      %496 = vmatprep.subr.bf16.mxu0 0
      %497 = vmatpush2.bf16.msra.mxu0 0
      %498 = vmatprep.subr.bf16.mxu0 0
      %499 = vmatpush2.bf16.msra.mxu0 0
      %500 = vmatprep.subr.bf16.mxu0 0
      %501 = vmatpush2.bf16.msra.mxu0 0
      %502 = vmatprep.subr.bf16.mxu0 0
      %503 = vmatpush2.bf16.msra.mxu0 0
      %504 = vmatprep.subr.bf16.mxu0 0
      %505 = vmatpush2.bf16.msra.mxu0 0
      %506 = vmatprep.subr.bf16.mxu0 0
      %507 = vmatpush2.bf16.msra.mxu0 0
      %508 = vmatprep.mubr.bf16.mxu0 0
      %509 = vmatmul.mubr.bf16.gmra.mxu0 %v420
      %v510 = vpop.f32.mrf.mxu0
      %v511 = vadd.f32 %v374, %v510
      %v512 = vpop.f32.mrf.mxu0
      %v513 = vpop.f32.mrf.mxu0
      %v514 = vadd.f32 %v377, %v513
      %v515 = vpop.f32.mrf.mxu0
      %516 = vmatprep.mubr.bf16.mxu0 0
      %517 = vmatmul.mubr.bf16.gmra.mxu0 %v421
      %v518 = vpop.f32.mrf.mxu0
      %v519 = vadd.f32 %v382, %v518
      %v520 = vpop.f32.mrf.mxu0
      %v521 = vpop.f32.mrf.mxu0
      %v522 = vadd.f32 %v385, %v521
      %v523 = vpop.f32.mrf.mxu0
      %524 = vmatprep.mubr.bf16.mxu0 0
      %525 = vmatmul.mubr.bf16.gmra.mxu0 %v422
      %v526 = vpop.f32.mrf.mxu0
      %v527 = vadd.f32 %v390, %v526
      %v528 = vpop.f32.mrf.mxu0
      %v529 = vpop.f32.mrf.mxu0
      %v530 = vadd.f32 %v393, %v529
      %v531 = vpop.f32.mrf.mxu0
      %532 = vmatprep.mubr.bf16.mxu0 0
      %533 = vmatmul.mubr.bf16.gmra.mxu0 %v423
      %v534 = vpop.f32.mrf.mxu0
      %v535 = vadd.f32 %v398, %v534
      %v536 = vpop.f32.mrf.mxu0
      %v537 = vpop.f32.mrf.mxu0
      %v538 = vadd.f32 %v401, %v537
      %v539 = vpop.f32.mrf.mxu0
      %540 = vdwg.mxu0
      %vm541 = vsmask.f32 3328
      %vm542 = vsmask.f32 7440
      %vm543 = vmor %vm541, %vm542
      %v545 = vshrl.u32 %v183, 16
      %v547 = vrot.slane %v545, 4
      %v548 = vshll.u32 %v183, 16
      %v550 = vrot.slane %v548, 5
      %v551 = vor.u32 %v547, %v550
      %v552 = vrot.slane %v551, 4
      %v554 = vshll.u32 %v184, 16
      %v556 = vrot.slane %v554, 5
      %v557 = vsel %vm543, %v552, %v556
      %v559 = vshrl.u32 %v185, 16
      %v561 = vrot.slane %v559, 4
      %v562 = vshll.u32 %v185, 16
      %v564 = vrot.slane %v562, 5
      %v565 = vor.u32 %v561, %v564
      %v566 = vrot.slane %v565, 4
      %v568 = vshll.u32 %v186, 16
      %v570 = vrot.slane %v568, 5
      %v571 = vsel %vm543, %v566, %v570
      %v573 = vshrl.u32 %v187, 16
      %v575 = vrot.slane %v573, 4
      %v576 = vshll.u32 %v187, 16
      %v578 = vrot.slane %v576, 5
      %v579 = vor.u32 %v575, %v578
      %v580 = vrot.slane %v579, 4
      %v582 = vshll.u32 %v188, 16
      %v584 = vrot.slane %v582, 5
      %v585 = vsel %vm543, %v580, %v584
      %v587 = vshrl.u32 %v189, 16
      %v589 = vrot.slane %v587, 4
      %v590 = vshll.u32 %v189, 16
      %v592 = vrot.slane %v590, 5
      %v593 = vor.u32 %v589, %v592
      %v594 = vrot.slane %v593, 4
      %v596 = vshll.u32 %v190, 16
      %v598 = vrot.slane %v596, 5
      %v599 = vsel %vm543, %v594, %v598
      %v601 = vshrl.u32 %v191, 16
      %v603 = vrot.slane %v601, 4
      %v604 = vshll.u32 %v191, 16
      %v606 = vrot.slane %v604, 5
      %v607 = vor.u32 %v603, %v606
      %v608 = vrot.slane %v607, 4
      %v610 = vshll.u32 %v192, 16
      %v612 = vrot.slane %v610, 5
      %v613 = vsel %vm543, %v608, %v612
      %v615 = vshrl.u32 %v193, 16
      %v617 = vrot.slane %v615, 4
      %v618 = vshll.u32 %v193, 16
      %v620 = vrot.slane %v618, 5
      %v621 = vor.u32 %v617, %v620
      %v622 = vrot.slane %v621, 4
      %v624 = vshll.u32 %v194, 16
      %v626 = vrot.slane %v624, 5
      %v627 = vsel %vm543, %v622, %v626
      %v629 = vshrl.u32 %v195, 16
      %v631 = vrot.slane %v629, 4
      %v632 = vshll.u32 %v195, 16
      %v634 = vrot.slane %v632, 5
      %v635 = vor.u32 %v631, %v634
      %v636 = vrot.slane %v635, 4
      %v638 = vshll.u32 %v196, 16
      %v640 = vrot.slane %v638, 5
      %v641 = vsel %vm543, %v636, %v640
      %v643 = vshrl.u32 %v197, 16
      %v645 = vrot.slane %v643, 4
      %v646 = vshll.u32 %v197, 16
      %v648 = vrot.slane %v646, 5
      %v649 = vor.u32 %v645, %v648
      %v650 = vrot.slane %v649, 4
      %v652 = vshll.u32 %v198, 16
      %v654 = vrot.slane %v652, 5
      %v655 = vsel %vm543, %v650, %v654
      %s656 = scalar_lea.vmem %s1, 128
      %v657 = vld [vmem:[%s656] sm:$0xf]
      %v658 = vld [vmem:[%s656 + $0x4] sm:$0xf]
      %v659 = vld [vmem:[%s656 + $0x8] sm:$0xf]
      %v660 = vld [vmem:[%s656 + $0xc] sm:$0xf]
      %v661 = vld [vmem:[%s656 + $0x10] sm:$0xf]
      %v662 = vld [vmem:[%s656 + $0x14] sm:$0xf]
      %v663 = vld [vmem:[%s656 + $0x18] sm:$0xf]
      %v664 = vld [vmem:[%s656 + $0x1c] sm:$0xf]
      %v665 = vld [vmem:[%s656 + $0x20] sm:$0xf]
      %v666 = vld [vmem:[%s656 + $0x24] sm:$0xf]
      %v667 = vld [vmem:[%s656 + $0x28] sm:$0xf]
      %v668 = vld [vmem:[%s656 + $0x2c] sm:$0xf]
      %v669 = vld [vmem:[%s656 + $0x30] sm:$0xf]
      %v670 = vld [vmem:[%s656 + $0x34] sm:$0xf]
      %v671 = vld [vmem:[%s656 + $0x38] sm:$0xf]
      %v672 = vld [vmem:[%s656 + $0x3c] sm:$0xf]
      %v673 = vunpack.c.l.b16 %v557
      %v674 = vunpack.c.l.b16 %v571
      %v675 = vunpack.c.l.b16 %v585
      %v676 = vunpack.c.l.b16 %v599
      %v677 = vunpack.c.l.b16 %v613
      %v678 = vunpack.c.l.b16 %v627
      %v679 = vunpack.c.l.b16 %v641
      %v680 = vunpack.c.l.b16 %v655
      %v681 = vpack.c.b16 %v674, %v673
      %v682 = vpack.c.b16 %v676, %v675
      %v683 = vpack.c.b16 %v678, %v677
      %v684 = vpack.c.b16 %v680, %v679
      %v705 = vunpack.c.l.b16 %v657
      %v706 = vunpack.c.l.b16 %v658
      %v707 = vunpack.c.l.b16 %v659
      %v708 = vunpack.c.l.b16 %v660
      %v709 = vunpack.c.l.b16 %v661
      %v710 = vunpack.c.l.b16 %v662
      %v711 = vunpack.c.l.b16 %v663
      %v712 = vunpack.c.l.b16 %v664
      %v713 = vunpack.c.l.b16 %v665
      %v714 = vunpack.c.l.b16 %v666
      %v715 = vunpack.c.l.b16 %v667
      %v716 = vunpack.c.l.b16 %v668
      %v717 = vunpack.c.l.b16 %v669
      %v718 = vunpack.c.l.b16 %v670
      %v719 = vunpack.c.l.b16 %v671
      %v720 = vunpack.c.l.b16 %v672
      %v721 = vpack.c.b16 %v706, %v705
      %v722 = vpack.c.b16 %v708, %v707
      %v723 = vpack.c.b16 %v710, %v709
      %v724 = vpack.c.b16 %v712, %v711
      %v725 = vpack.c.b16 %v714, %v713
      %v726 = vpack.c.b16 %v716, %v715
      %v727 = vpack.c.b16 %v718, %v717
      %v728 = vpack.c.b16 %v720, %v719
      %737 = vmatprep.subr.bf16.mxu0 0
      %738 = vmatpush1.bf16.msra.mxu0 %v728
      %739 = vmatprep.subr.bf16.mxu0 0
      %740 = vmatpush1.bf16.msra.mxu0 %v727
      %741 = vmatprep.subr.bf16.mxu0 0
      %742 = vmatpush1.bf16.msra.mxu0 %v726
      %743 = vmatprep.subr.bf16.mxu0 0
      %744 = vmatpush1.bf16.msra.mxu0 %v725
      %745 = vmatprep.subr.bf16.mxu0 0
      %746 = vmatpush1.bf16.msra.mxu0 %v724
      %747 = vmatprep.subr.bf16.mxu0 0
      %748 = vmatpush1.bf16.msra.mxu0 %v723
      %749 = vmatprep.subr.bf16.mxu0 0
      %750 = vmatpush1.bf16.msra.mxu0 %v722
      %751 = vmatprep.subr.bf16.mxu0 0
      %752 = vmatpush1.bf16.msra.mxu0 %v721
      %753 = vmatprep.subr.bf16.mxu0 0
      %754 = vmatpush2.bf16.msra.mxu0 0
      %755 = vmatprep.subr.bf16.mxu0 0
      %756 = vmatpush2.bf16.msra.mxu0 0
      %757 = vmatprep.subr.bf16.mxu0 0
      %758 = vmatpush2.bf16.msra.mxu0 0
      %759 = vmatprep.subr.bf16.mxu0 0
      %760 = vmatpush2.bf16.msra.mxu0 0
      %761 = vmatprep.subr.bf16.mxu0 0
      %762 = vmatpush2.bf16.msra.mxu0 0
      %763 = vmatprep.subr.bf16.mxu0 0
      %764 = vmatpush2.bf16.msra.mxu0 0
      %765 = vmatprep.subr.bf16.mxu0 0
      %766 = vmatpush2.bf16.msra.mxu0 0
      %767 = vmatprep.subr.bf16.mxu0 0
      %768 = vmatpush2.bf16.msra.mxu0 0
      %769 = vmatprep.mubr.bf16.mxu0 0
      %770 = vmatmul.mubr.bf16.gmra.mxu0 %v681
      %v771 = vpop.f32.mrf.mxu0
      %v772 = vadd.f32 0.0, %v771
      %v773 = vpop.f32.mrf.mxu0
      %v774 = vpop.f32.mrf.mxu0
      %v775 = vadd.f32 0.0, %v774
      %v776 = vpop.f32.mrf.mxu0
      %777 = vmatprep.mubr.bf16.mxu0 0
      %778 = vmatmul.mubr.bf16.gmra.mxu0 %v682
      %v779 = vpop.f32.mrf.mxu0
      %v780 = vadd.f32 0.0, %v779
      %v781 = vpop.f32.mrf.mxu0
      %v782 = vpop.f32.mrf.mxu0
      %v783 = vadd.f32 0.0, %v782
      %v784 = vpop.f32.mrf.mxu0
      %785 = vmatprep.mubr.bf16.mxu0 0
      %786 = vmatmul.mubr.bf16.gmra.mxu0 %v683
      %v787 = vpop.f32.mrf.mxu0
      %v788 = vadd.f32 0.0, %v787
      %v789 = vpop.f32.mrf.mxu0
      %v790 = vpop.f32.mrf.mxu0
      %v791 = vadd.f32 0.0, %v790
      %v792 = vpop.f32.mrf.mxu0
      %793 = vmatprep.mubr.bf16.mxu0 0
      %794 = vmatmul.mubr.bf16.gmra.mxu0 %v684
      %v795 = vpop.f32.mrf.mxu0
      %v796 = vadd.f32 0.0, %v795
      %v797 = vpop.f32.mrf.mxu0
      %v798 = vpop.f32.mrf.mxu0
      %v799 = vadd.f32 0.0, %v798
      %v800 = vpop.f32.mrf.mxu0
      %801 = vdwg.mxu0
      %v802 = vadd.f32 %v511, %v772
      %v803 = vadd.f32 %v514, %v775
      %v804 = vadd.f32 %v519, %v780
      %v805 = vadd.f32 %v522, %v783
      %v806 = vadd.f32 %v527, %v788
      %v807 = vadd.f32 %v530, %v791
      %v808 = vadd.f32 %v535, %v796
      %v809 = vadd.f32 %v538, %v799
      %s810 = scalar_lea.vmem %s1, 192
      %v811 = vld [vmem:[%s810] sm:$0xf]
      %v812 = vld [vmem:[%s810 + $0x4] sm:$0xf]
      %v813 = vld [vmem:[%s810 + $0x8] sm:$0xf]
      %v814 = vld [vmem:[%s810 + $0xc] sm:$0xf]
      %v815 = vld [vmem:[%s810 + $0x10] sm:$0xf]
      %v816 = vld [vmem:[%s810 + $0x14] sm:$0xf]
      %v817 = vld [vmem:[%s810 + $0x18] sm:$0xf]
      %v818 = vld [vmem:[%s810 + $0x1c] sm:$0xf]
      %v819 = vld [vmem:[%s810 + $0x20] sm:$0xf]
      %v820 = vld [vmem:[%s810 + $0x24] sm:$0xf]
      %v821 = vld [vmem:[%s810 + $0x28] sm:$0xf]
      %v822 = vld [vmem:[%s810 + $0x2c] sm:$0xf]
      %v823 = vld [vmem:[%s810 + $0x30] sm:$0xf]
      %v824 = vld [vmem:[%s810 + $0x34] sm:$0xf]
      %v825 = vld [vmem:[%s810 + $0x38] sm:$0xf]
      %v826 = vld [vmem:[%s810 + $0x3c] sm:$0xf]
      %v835 = vunpack.c.l.b16 %v210
      %v836 = vunpack.c.l.b16 %v212
      %v837 = vunpack.c.l.b16 %v214
      %v838 = vunpack.c.l.b16 %v216
      %v839 = vunpack.c.l.b16 %v218
      %v840 = vunpack.c.l.b16 %v220
      %v841 = vunpack.c.l.b16 %v222
      %v842 = vunpack.c.l.b16 %v224
      %v843 = vpack.c.b16 %v836, %v835
      %v844 = vpack.c.b16 %v838, %v837
      %v845 = vpack.c.b16 %v840, %v839
      %v846 = vpack.c.b16 %v842, %v841
      %v867 = vunpack.c.l.b16 %v811
      %v868 = vunpack.c.l.b16 %v812
      %v869 = vunpack.c.l.b16 %v813
      %v870 = vunpack.c.l.b16 %v814
      %v871 = vunpack.c.l.b16 %v815
      %v872 = vunpack.c.l.b16 %v816
      %v873 = vunpack.c.l.b16 %v817
      %v874 = vunpack.c.l.b16 %v818
      %v875 = vunpack.c.l.b16 %v819
      %v876 = vunpack.c.l.b16 %v820
      %v877 = vunpack.c.l.b16 %v821
      %v878 = vunpack.c.l.b16 %v822
      %v879 = vunpack.c.l.b16 %v823
      %v880 = vunpack.c.l.b16 %v824
      %v881 = vunpack.c.l.b16 %v825
      %v882 = vunpack.c.l.b16 %v826
      %v883 = vpack.c.b16 %v868, %v867
      %v884 = vpack.c.b16 %v870, %v869
      %v885 = vpack.c.b16 %v872, %v871
      %v886 = vpack.c.b16 %v874, %v873
      %v887 = vpack.c.b16 %v876, %v875
      %v888 = vpack.c.b16 %v878, %v877
      %v889 = vpack.c.b16 %v880, %v879
      %v890 = vpack.c.b16 %v882, %v881
      %899 = vmatprep.subr.bf16.mxu0 0
      %900 = vmatpush1.bf16.msra.mxu0 %v890
      %901 = vmatprep.subr.bf16.mxu0 0
      %902 = vmatpush1.bf16.msra.mxu0 %v889
      %903 = vmatprep.subr.bf16.mxu0 0
      %904 = vmatpush1.bf16.msra.mxu0 %v888
      %905 = vmatprep.subr.bf16.mxu0 0
      %906 = vmatpush1.bf16.msra.mxu0 %v887
      %907 = vmatprep.subr.bf16.mxu0 0
      %908 = vmatpush1.bf16.msra.mxu0 %v886
      %909 = vmatprep.subr.bf16.mxu0 0
      %910 = vmatpush1.bf16.msra.mxu0 %v885
      %911 = vmatprep.subr.bf16.mxu0 0
      %912 = vmatpush1.bf16.msra.mxu0 %v884
      %913 = vmatprep.subr.bf16.mxu0 0
      %914 = vmatpush1.bf16.msra.mxu0 %v883
      %915 = vmatprep.subr.bf16.mxu0 0
      %916 = vmatpush2.bf16.msra.mxu0 0
      %917 = vmatprep.subr.bf16.mxu0 0
      %918 = vmatpush2.bf16.msra.mxu0 0
      %919 = vmatprep.subr.bf16.mxu0 0
      %920 = vmatpush2.bf16.msra.mxu0 0
      %921 = vmatprep.subr.bf16.mxu0 0
      %922 = vmatpush2.bf16.msra.mxu0 0
      %923 = vmatprep.subr.bf16.mxu0 0
      %924 = vmatpush2.bf16.msra.mxu0 0
      %925 = vmatprep.subr.bf16.mxu0 0
      %926 = vmatpush2.bf16.msra.mxu0 0
      %927 = vmatprep.subr.bf16.mxu0 0
      %928 = vmatpush2.bf16.msra.mxu0 0
      %929 = vmatprep.subr.bf16.mxu0 0
      %930 = vmatpush2.bf16.msra.mxu0 0
      %931 = vmatprep.mubr.bf16.mxu0 0
      %932 = vmatmul.mubr.bf16.gmra.mxu0 %v843
      %v933 = vpop.f32.mrf.mxu0
      %v934 = vadd.f32 0.0, %v933
      %v935 = vpop.f32.mrf.mxu0
      %v936 = vpop.f32.mrf.mxu0
      %v937 = vadd.f32 0.0, %v936
      %v938 = vpop.f32.mrf.mxu0
      %939 = vmatprep.mubr.bf16.mxu0 0
      %940 = vmatmul.mubr.bf16.gmra.mxu0 %v844
      %v941 = vpop.f32.mrf.mxu0
      %v942 = vadd.f32 0.0, %v941
      %v943 = vpop.f32.mrf.mxu0
      %v944 = vpop.f32.mrf.mxu0
      %v945 = vadd.f32 0.0, %v944
      %v946 = vpop.f32.mrf.mxu0
      %947 = vmatprep.mubr.bf16.mxu0 0
      %948 = vmatmul.mubr.bf16.gmra.mxu0 %v845
      %v949 = vpop.f32.mrf.mxu0
      %v950 = vadd.f32 0.0, %v949
      %v951 = vpop.f32.mrf.mxu0
      %v952 = vpop.f32.mrf.mxu0
      %v953 = vadd.f32 0.0, %v952
      %v954 = vpop.f32.mrf.mxu0
      %955 = vmatprep.mubr.bf16.mxu0 0
      %956 = vmatmul.mubr.bf16.gmra.mxu0 %v846
      %v957 = vpop.f32.mrf.mxu0
      %v958 = vadd.f32 0.0, %v957
      %v959 = vpop.f32.mrf.mxu0
      %v960 = vpop.f32.mrf.mxu0
      %v961 = vadd.f32 0.0, %v960
      %v962 = vpop.f32.mrf.mxu0
      %963 = vdwg.mxu0
      %v964 = vadd.f32 %v802, %v934
      %v965 = vadd.f32 %v803, %v937
      %v966 = vadd.f32 %v804, %v942
      %v967 = vadd.f32 %v805, %v945
      %v968 = vadd.f32 %v806, %v950
      %v969 = vadd.f32 %v807, %v953
      %v970 = vadd.f32 %v808, %v958
      %v971 = vadd.f32 %v809, %v961
      %s972 = scalar_lea.vmem %s1, 256
      %v973 = vld [vmem:[%s972] sm:$0xf]
      %v974 = vld [vmem:[%s972 + $0x4] sm:$0xf]
      %v975 = vld [vmem:[%s972 + $0x8] sm:$0xf]
      %v976 = vld [vmem:[%s972 + $0xc] sm:$0xf]
      %v977 = vld [vmem:[%s972 + $0x10] sm:$0xf]
      %v978 = vld [vmem:[%s972 + $0x14] sm:$0xf]
      %v979 = vld [vmem:[%s972 + $0x18] sm:$0xf]
      %v980 = vld [vmem:[%s972 + $0x1c] sm:$0xf]
      %v981 = vld [vmem:[%s972 + $0x20] sm:$0xf]
      %v982 = vld [vmem:[%s972 + $0x24] sm:$0xf]
      %v983 = vld [vmem:[%s972 + $0x28] sm:$0xf]
      %v984 = vld [vmem:[%s972 + $0x2c] sm:$0xf]
      %v985 = vld [vmem:[%s972 + $0x30] sm:$0xf]
      %v986 = vld [vmem:[%s972 + $0x34] sm:$0xf]
      %v987 = vld [vmem:[%s972 + $0x38] sm:$0xf]
      %v988 = vld [vmem:[%s972 + $0x3c] sm:$0xf]
      %v997 = vunpack.c.l.b16 %v226
      %v998 = vunpack.c.l.b16 %v227
      %v999 = vunpack.c.l.b16 %v228
      %v1000 = vunpack.c.l.b16 %v229
      %v1001 = vunpack.c.l.b16 %v230
      %v1002 = vunpack.c.l.b16 %v231
      %v1003 = vunpack.c.l.b16 %v232
      %v1004 = vunpack.c.l.b16 %v233
      %v1005 = vpack.c.b16 %v998, %v997
      %v1006 = vpack.c.b16 %v1000, %v999
      %v1007 = vpack.c.b16 %v1002, %v1001
      %v1008 = vpack.c.b16 %v1004, %v1003
      %v1029 = vunpack.c.l.b16 %v973
      %v1030 = vunpack.c.l.b16 %v974
      %v1031 = vunpack.c.l.b16 %v975
      %v1032 = vunpack.c.l.b16 %v976
      %v1033 = vunpack.c.l.b16 %v977
      %v1034 = vunpack.c.l.b16 %v978
      %v1035 = vunpack.c.l.b16 %v979
      %v1036 = vunpack.c.l.b16 %v980
      %v1037 = vunpack.c.l.b16 %v981
      %v1038 = vunpack.c.l.b16 %v982
      %v1039 = vunpack.c.l.b16 %v983
      %v1040 = vunpack.c.l.b16 %v984
      %v1041 = vunpack.c.l.b16 %v985
      %v1042 = vunpack.c.l.b16 %v986
      %v1043 = vunpack.c.l.b16 %v987
      %v1044 = vunpack.c.l.b16 %v988
      %v1045 = vpack.c.b16 %v1030, %v1029
      %v1046 = vpack.c.b16 %v1032, %v1031
      %v1047 = vpack.c.b16 %v1034, %v1033
      %v1048 = vpack.c.b16 %v1036, %v1035
      %v1049 = vpack.c.b16 %v1038, %v1037
      %v1050 = vpack.c.b16 %v1040, %v1039
      %v1051 = vpack.c.b16 %v1042, %v1041
      %v1052 = vpack.c.b16 %v1044, %v1043
      %1061 = vmatprep.subr.bf16.mxu0 0
      %1062 = vmatpush1.bf16.msra.mxu0 %v1052
      %1063 = vmatprep.subr.bf16.mxu0 0
      %1064 = vmatpush1.bf16.msra.mxu0 %v1051
      %1065 = vmatprep.subr.bf16.mxu0 0
      %1066 = vmatpush1.bf16.msra.mxu0 %v1050
      %1067 = vmatprep.subr.bf16.mxu0 0
      %1068 = vmatpush1.bf16.msra.mxu0 %v1049
      %1069 = vmatprep.subr.bf16.mxu0 0
      %1070 = vmatpush1.bf16.msra.mxu0 %v1048
      %1071 = vmatprep.subr.bf16.mxu0 0
      %1072 = vmatpush1.bf16.msra.mxu0 %v1047
      %1073 = vmatprep.subr.bf16.mxu0 0
      %1074 = vmatpush1.bf16.msra.mxu0 %v1046
      %1075 = vmatprep.subr.bf16.mxu0 0
      %1076 = vmatpush1.bf16.msra.mxu0 %v1045
      %1077 = vmatprep.subr.bf16.mxu0 0
      %1078 = vmatpush2.bf16.msra.mxu0 0
      %1079 = vmatprep.subr.bf16.mxu0 0
      %1080 = vmatpush2.bf16.msra.mxu0 0
      %1081 = vmatprep.subr.bf16.mxu0 0
      %1082 = vmatpush2.bf16.msra.mxu0 0
      %1083 = vmatprep.subr.bf16.mxu0 0
      %1084 = vmatpush2.bf16.msra.mxu0 0
      %1085 = vmatprep.subr.bf16.mxu0 0
      %1086 = vmatpush2.bf16.msra.mxu0 0
      %1087 = vmatprep.subr.bf16.mxu0 0
      %1088 = vmatpush2.bf16.msra.mxu0 0
      %1089 = vmatprep.subr.bf16.mxu0 0
      %1090 = vmatpush2.bf16.msra.mxu0 0
      %1091 = vmatprep.subr.bf16.mxu0 0
      %1092 = vmatpush2.bf16.msra.mxu0 0
      %1093 = vmatprep.mubr.bf16.mxu0 0
      %1094 = vmatmul.mubr.bf16.gmra.mxu0 %v1005
      %v1095 = vpop.f32.mrf.mxu0
      %v1096 = vadd.f32 0.0, %v1095
      %v1097 = vpop.f32.mrf.mxu0
      %v1098 = vpop.f32.mrf.mxu0
      %v1099 = vadd.f32 0.0, %v1098
      %v1100 = vpop.f32.mrf.mxu0
      %1101 = vmatprep.mubr.bf16.mxu0 0
      %1102 = vmatmul.mubr.bf16.gmra.mxu0 %v1006
      %v1103 = vpop.f32.mrf.mxu0
      %v1104 = vadd.f32 0.0, %v1103
      %v1105 = vpop.f32.mrf.mxu0
      %v1106 = vpop.f32.mrf.mxu0
      %v1107 = vadd.f32 0.0, %v1106
      %v1108 = vpop.f32.mrf.mxu0
      %1109 = vmatprep.mubr.bf16.mxu0 0
      %1110 = vmatmul.mubr.bf16.gmra.mxu0 %v1007
      %v1111 = vpop.f32.mrf.mxu0
      %v1112 = vadd.f32 0.0, %v1111
      %v1113 = vpop.f32.mrf.mxu0
      %v1114 = vpop.f32.mrf.mxu0
      %v1115 = vadd.f32 0.0, %v1114
      %v1116 = vpop.f32.mrf.mxu0
      %1117 = vmatprep.mubr.bf16.mxu0 0
      %1118 = vmatmul.mubr.bf16.gmra.mxu0 %v1008
      %v1119 = vpop.f32.mrf.mxu0
      %v1120 = vadd.f32 0.0, %v1119
      %v1121 = vpop.f32.mrf.mxu0
      %v1122 = vpop.f32.mrf.mxu0
      %v1123 = vadd.f32 0.0, %v1122
      %v1124 = vpop.f32.mrf.mxu0
      %1125 = vdwg.mxu0
      %v1126 = vadd.f32 %v964, %v1096
      %v1127 = vadd.f32 %v965, %v1099
      %v1128 = vadd.f32 %v966, %v1104
      %v1129 = vadd.f32 %v967, %v1107
      %v1130 = vadd.f32 %v968, %v1112
      %v1131 = vadd.f32 %v969, %v1115
      %v1132 = vadd.f32 %v970, %v1120
      %v1133 = vadd.f32 %v971, %v1123
      %v1135 = vshrl.u32 %v210, 16
      %v1137 = vrot.slane %v1135, 4
      %v1138 = vshll.u32 %v210, 16
      %v1140 = vrot.slane %v1138, 5
      %v1141 = vor.u32 %v1137, %v1140
      %v1142 = vrot.slane %v1141, 4
      %v1144 = vshll.u32 %v211, 16
      %v1146 = vrot.slane %v1144, 5
      %v1147 = vsel %vm543, %v1142, %v1146
      %v1149 = vshrl.u32 %v212, 16
      %v1151 = vrot.slane %v1149, 4
      %v1152 = vshll.u32 %v212, 16
      %v1154 = vrot.slane %v1152, 5
      %v1155 = vor.u32 %v1151, %v1154
      %v1156 = vrot.slane %v1155, 4
      %v1158 = vshll.u32 %v213, 16
      %v1160 = vrot.slane %v1158, 5
      %v1161 = vsel %vm543, %v1156, %v1160
      %v1163 = vshrl.u32 %v214, 16
      %v1165 = vrot.slane %v1163, 4
      %v1166 = vshll.u32 %v214, 16
      %v1168 = vrot.slane %v1166, 5
      %v1169 = vor.u32 %v1165, %v1168
      %v1170 = vrot.slane %v1169, 4
      %v1172 = vshll.u32 %v215, 16
      %v1174 = vrot.slane %v1172, 5
      %v1175 = vsel %vm543, %v1170, %v1174
      %v1177 = vshrl.u32 %v216, 16
      %v1179 = vrot.slane %v1177, 4
      %v1180 = vshll.u32 %v216, 16
      %v1182 = vrot.slane %v1180, 5
      %v1183 = vor.u32 %v1179, %v1182
      %v1184 = vrot.slane %v1183, 4
      %v1186 = vshll.u32 %v217, 16
      %v1188 = vrot.slane %v1186, 5
      %v1189 = vsel %vm543, %v1184, %v1188
      %v1191 = vshrl.u32 %v218, 16
      %v1193 = vrot.slane %v1191, 4
      %v1194 = vshll.u32 %v218, 16
      %v1196 = vrot.slane %v1194, 5
      %v1197 = vor.u32 %v1193, %v1196
      %v1198 = vrot.slane %v1197, 4
      %v1200 = vshll.u32 %v219, 16
      %v1202 = vrot.slane %v1200, 5
      %v1203 = vsel %vm543, %v1198, %v1202
      %v1205 = vshrl.u32 %v220, 16
      %v1207 = vrot.slane %v1205, 4
      %v1208 = vshll.u32 %v220, 16
      %v1210 = vrot.slane %v1208, 5
      %v1211 = vor.u32 %v1207, %v1210
      %v1212 = vrot.slane %v1211, 4
      %v1214 = vshll.u32 %v221, 16
      %v1216 = vrot.slane %v1214, 5
      %v1217 = vsel %vm543, %v1212, %v1216
      %v1219 = vshrl.u32 %v222, 16
      %v1221 = vrot.slane %v1219, 4
      %v1222 = vshll.u32 %v222, 16
      %v1224 = vrot.slane %v1222, 5
      %v1225 = vor.u32 %v1221, %v1224
      %v1226 = vrot.slane %v1225, 4
      %v1228 = vshll.u32 %v223, 16
      %v1230 = vrot.slane %v1228, 5
      %v1231 = vsel %vm543, %v1226, %v1230
      %v1233 = vshrl.u32 %v224, 16
      %v1235 = vrot.slane %v1233, 4
      %v1236 = vshll.u32 %v224, 16
      %v1238 = vrot.slane %v1236, 5
      %v1239 = vor.u32 %v1235, %v1238
      %v1240 = vrot.slane %v1239, 4
      %v1242 = vshll.u32 %v225, 16
      %v1244 = vrot.slane %v1242, 5
      %v1245 = vsel %vm543, %v1240, %v1244
      %s1246 = scalar_lea.vmem %s1, 320
      %v1247 = vld [vmem:[%s1246] sm:$0xf]
      %v1248 = vld [vmem:[%s1246 + $0x4] sm:$0xf]
      %v1249 = vld [vmem:[%s1246 + $0x8] sm:$0xf]
      %v1250 = vld [vmem:[%s1246 + $0xc] sm:$0xf]
      %v1251 = vld [vmem:[%s1246 + $0x10] sm:$0xf]
      %v1252 = vld [vmem:[%s1246 + $0x14] sm:$0xf]
      %v1253 = vld [vmem:[%s1246 + $0x18] sm:$0xf]
      %v1254 = vld [vmem:[%s1246 + $0x1c] sm:$0xf]
      %v1255 = vld [vmem:[%s1246 + $0x20] sm:$0xf]
      %v1256 = vld [vmem:[%s1246 + $0x24] sm:$0xf]
      %v1257 = vld [vmem:[%s1246 + $0x28] sm:$0xf]
      %v1258 = vld [vmem:[%s1246 + $0x2c] sm:$0xf]
      %v1259 = vld [vmem:[%s1246 + $0x30] sm:$0xf]
      %v1260 = vld [vmem:[%s1246 + $0x34] sm:$0xf]
      %v1261 = vld [vmem:[%s1246 + $0x38] sm:$0xf]
      %v1262 = vld [vmem:[%s1246 + $0x3c] sm:$0xf]
      %v1263 = vunpack.c.l.b16 %v1147
      %v1264 = vunpack.c.l.b16 %v1161
      %v1265 = vunpack.c.l.b16 %v1175
      %v1266 = vunpack.c.l.b16 %v1189
      %v1267 = vunpack.c.l.b16 %v1203
      %v1268 = vunpack.c.l.b16 %v1217
      %v1269 = vunpack.c.l.b16 %v1231
      %v1270 = vunpack.c.l.b16 %v1245
      %v1271 = vpack.c.b16 %v1264, %v1263
      %v1272 = vpack.c.b16 %v1266, %v1265
      %v1273 = vpack.c.b16 %v1268, %v1267
      %v1274 = vpack.c.b16 %v1270, %v1269
      %v1295 = vunpack.c.l.b16 %v1247
      %v1296 = vunpack.c.l.b16 %v1248
      %v1297 = vunpack.c.l.b16 %v1249
      %v1298 = vunpack.c.l.b16 %v1250
      %v1299 = vunpack.c.l.b16 %v1251
      %v1300 = vunpack.c.l.b16 %v1252
      %v1301 = vunpack.c.l.b16 %v1253
      %v1302 = vunpack.c.l.b16 %v1254
      %v1303 = vunpack.c.l.b16 %v1255
      %v1304 = vunpack.c.l.b16 %v1256
      %v1305 = vunpack.c.l.b16 %v1257
      %v1306 = vunpack.c.l.b16 %v1258
      %v1307 = vunpack.c.l.b16 %v1259
      %v1308 = vunpack.c.l.b16 %v1260
      %v1309 = vunpack.c.l.b16 %v1261
      %v1310 = vunpack.c.l.b16 %v1262
      %v1311 = vpack.c.b16 %v1296, %v1295
      %v1312 = vpack.c.b16 %v1298, %v1297
      %v1313 = vpack.c.b16 %v1300, %v1299
      %v1314 = vpack.c.b16 %v1302, %v1301
      %v1315 = vpack.c.b16 %v1304, %v1303
      %v1316 = vpack.c.b16 %v1306, %v1305
      %v1317 = vpack.c.b16 %v1308, %v1307
      %v1318 = vpack.c.b16 %v1310, %v1309
      %1327 = vmatprep.subr.bf16.mxu0 0
      %1328 = vmatpush1.bf16.msra.mxu0 %v1318
      %1329 = vmatprep.subr.bf16.mxu0 0
      %1330 = vmatpush1.bf16.msra.mxu0 %v1317
      %1331 = vmatprep.subr.bf16.mxu0 0
      %1332 = vmatpush1.bf16.msra.mxu0 %v1316
      %1333 = vmatprep.subr.bf16.mxu0 0
      %1334 = vmatpush1.bf16.msra.mxu0 %v1315
      %1335 = vmatprep.subr.bf16.mxu0 0
      %1336 = vmatpush1.bf16.msra.mxu0 %v1314
      %1337 = vmatprep.subr.bf16.mxu0 0
      %1338 = vmatpush1.bf16.msra.mxu0 %v1313
      %1339 = vmatprep.subr.bf16.mxu0 0
      %1340 = vmatpush1.bf16.msra.mxu0 %v1312
      %1341 = vmatprep.subr.bf16.mxu0 0
      %1342 = vmatpush1.bf16.msra.mxu0 %v1311
      %1343 = vmatprep.subr.bf16.mxu0 0
      %1344 = vmatpush2.bf16.msra.mxu0 0
      %1345 = vmatprep.subr.bf16.mxu0 0
      %1346 = vmatpush2.bf16.msra.mxu0 0
      %1347 = vmatprep.subr.bf16.mxu0 0
      %1348 = vmatpush2.bf16.msra.mxu0 0
      %1349 = vmatprep.subr.bf16.mxu0 0
      %1350 = vmatpush2.bf16.msra.mxu0 0
      %1351 = vmatprep.subr.bf16.mxu0 0
      %1352 = vmatpush2.bf16.msra.mxu0 0
      %1353 = vmatprep.subr.bf16.mxu0 0
      %1354 = vmatpush2.bf16.msra.mxu0 0
      %1355 = vmatprep.subr.bf16.mxu0 0
      %1356 = vmatpush2.bf16.msra.mxu0 0
      %1357 = vmatprep.subr.bf16.mxu0 0
      %1358 = vmatpush2.bf16.msra.mxu0 0
      %1359 = vmatprep.mubr.bf16.mxu0 0
      %1360 = vmatmul.mubr.bf16.gmra.mxu0 %v1271
      %v1361 = vpop.f32.mrf.mxu0
      %v1362 = vadd.f32 0.0, %v1361
      %v1363 = vpop.f32.mrf.mxu0
      %v1364 = vpop.f32.mrf.mxu0
      %v1365 = vadd.f32 0.0, %v1364
      %v1366 = vpop.f32.mrf.mxu0
      %1367 = vmatprep.mubr.bf16.mxu0 0
      %1368 = vmatmul.mubr.bf16.gmra.mxu0 %v1272
      %v1369 = vpop.f32.mrf.mxu0
      %v1370 = vadd.f32 0.0, %v1369
      %v1371 = vpop.f32.mrf.mxu0
      %v1372 = vpop.f32.mrf.mxu0
      %v1373 = vadd.f32 0.0, %v1372
      %v1374 = vpop.f32.mrf.mxu0
      %1375 = vmatprep.mubr.bf16.mxu0 0
      %1376 = vmatmul.mubr.bf16.gmra.mxu0 %v1273
      %v1377 = vpop.f32.mrf.mxu0
      %v1378 = vadd.f32 0.0, %v1377
      %v1379 = vpop.f32.mrf.mxu0
      %v1380 = vpop.f32.mrf.mxu0
      %v1381 = vadd.f32 0.0, %v1380
      %v1382 = vpop.f32.mrf.mxu0
      %1383 = vmatprep.mubr.bf16.mxu0 0
      %1384 = vmatmul.mubr.bf16.gmra.mxu0 %v1274
      %v1385 = vpop.f32.mrf.mxu0
      %v1386 = vadd.f32 0.0, %v1385
      %v1387 = vpop.f32.mrf.mxu0
      %v1388 = vpop.f32.mrf.mxu0
      %v1389 = vadd.f32 0.0, %v1388
      %v1390 = vpop.f32.mrf.mxu0
      %1391 = vdwg.mxu0
      %v1392 = vadd.f32 %v1126, %v1362
      %v1393 = vadd.f32 %v1127, %v1365
      %v1394 = vadd.f32 %v1128, %v1370
      %v1395 = vadd.f32 %v1129, %v1373
      %v1396 = vadd.f32 %v1130, %v1378
      %v1397 = vadd.f32 %v1131, %v1381
      %v1398 = vadd.f32 %v1132, %v1386
      %v1399 = vadd.f32 %v1133, %v1389
      %s1400 = scalar_lea.vmem %s1, 384
      %v1401 = vld [vmem:[%s1400] sm:$0xf]
      %v1402 = vld [vmem:[%s1400 + $0x4] sm:$0xf]
      %v1403 = vld [vmem:[%s1400 + $0x8] sm:$0xf]
      %v1404 = vld [vmem:[%s1400 + $0xc] sm:$0xf]
      %v1405 = vld [vmem:[%s1400 + $0x10] sm:$0xf]
      %v1406 = vld [vmem:[%s1400 + $0x14] sm:$0xf]
      %v1407 = vld [vmem:[%s1400 + $0x18] sm:$0xf]
      %v1408 = vld [vmem:[%s1400 + $0x1c] sm:$0xf]
      %v1409 = vld [vmem:[%s1400 + $0x20] sm:$0xf]
      %v1410 = vld [vmem:[%s1400 + $0x24] sm:$0xf]
      %v1411 = vld [vmem:[%s1400 + $0x28] sm:$0xf]
      %v1412 = vld [vmem:[%s1400 + $0x2c] sm:$0xf]
      %v1413 = vld [vmem:[%s1400 + $0x30] sm:$0xf]
      %v1414 = vld [vmem:[%s1400 + $0x34] sm:$0xf]
      %v1415 = vld [vmem:[%s1400 + $0x38] sm:$0xf]
      %v1416 = vld [vmem:[%s1400 + $0x3c] sm:$0xf]
      %v1418 = vunpack.c.l.b16 %v199
      %v1419 = vpack.c.b16 %v414, %v413
      %v1420 = vpack.c.b16 %v416, %v415
      %v1421 = vpack.c.b16 %v418, %v417
      %v1422 = vpack.c.b16 %v1418, %v419
      %v1443 = vunpack.c.l.b16 %v1401
      %v1444 = vunpack.c.l.b16 %v1402
      %v1445 = vunpack.c.l.b16 %v1403
      %v1446 = vunpack.c.l.b16 %v1404
      %v1447 = vunpack.c.l.b16 %v1405
      %v1448 = vunpack.c.l.b16 %v1406
      %v1449 = vunpack.c.l.b16 %v1407
      %v1450 = vunpack.c.l.b16 %v1408
      %v1451 = vunpack.c.l.b16 %v1409
      %v1452 = vunpack.c.l.b16 %v1410
      %v1453 = vunpack.c.l.b16 %v1411
      %v1454 = vunpack.c.l.b16 %v1412
      %v1455 = vunpack.c.l.b16 %v1413
      %v1456 = vunpack.c.l.b16 %v1414
      %v1457 = vunpack.c.l.b16 %v1415
      %v1458 = vunpack.c.l.b16 %v1416
      %v1459 = vpack.c.b16 %v1444, %v1443
      %v1460 = vpack.c.b16 %v1446, %v1445
      %v1461 = vpack.c.b16 %v1448, %v1447
      %v1462 = vpack.c.b16 %v1450, %v1449
      %v1463 = vpack.c.b16 %v1452, %v1451
      %v1464 = vpack.c.b16 %v1454, %v1453
      %v1465 = vpack.c.b16 %v1456, %v1455
      %v1466 = vpack.c.b16 %v1458, %v1457
      %1475 = vmatprep.subr.bf16.mxu0 0
      %1476 = vmatpush1.bf16.msra.mxu0 %v1466
      %1477 = vmatprep.subr.bf16.mxu0 0
      %1478 = vmatpush1.bf16.msra.mxu0 %v1465
      %1479 = vmatprep.subr.bf16.mxu0 0
      %1480 = vmatpush1.bf16.msra.mxu0 %v1464
      %1481 = vmatprep.subr.bf16.mxu0 0
      %1482 = vmatpush1.bf16.msra.mxu0 %v1463
      %1483 = vmatprep.subr.bf16.mxu0 0
      %1484 = vmatpush1.bf16.msra.mxu0 %v1462
      %1485 = vmatprep.subr.bf16.mxu0 0
      %1486 = vmatpush1.bf16.msra.mxu0 %v1461
      %1487 = vmatprep.subr.bf16.mxu0 0
      %1488 = vmatpush1.bf16.msra.mxu0 %v1460
      %1489 = vmatprep.subr.bf16.mxu0 0
      %1490 = vmatpush1.bf16.msra.mxu0 %v1459
      %1491 = vmatprep.subr.bf16.mxu0 0
      %1492 = vmatpush2.bf16.msra.mxu0 0
      %1493 = vmatprep.subr.bf16.mxu0 0
      %1494 = vmatpush2.bf16.msra.mxu0 0
      %1495 = vmatprep.subr.bf16.mxu0 0
      %1496 = vmatpush2.bf16.msra.mxu0 0
      %1497 = vmatprep.subr.bf16.mxu0 0
      %1498 = vmatpush2.bf16.msra.mxu0 0
      %1499 = vmatprep.subr.bf16.mxu0 0
      %1500 = vmatpush2.bf16.msra.mxu0 0
      %1501 = vmatprep.subr.bf16.mxu0 0
      %1502 = vmatpush2.bf16.msra.mxu0 0
      %1503 = vmatprep.subr.bf16.mxu0 0
      %1504 = vmatpush2.bf16.msra.mxu0 0
      %1505 = vmatprep.subr.bf16.mxu0 0
      %1506 = vmatpush2.bf16.msra.mxu0 0
      %1507 = vmatprep.mubr.bf16.mxu0 0
      %1508 = vmatmul.mubr.bf16.gmra.mxu0 %v1419
      %v1509 = vpop.f32.mrf.mxu0
      %v1510 = vadd.f32 0.0, %v1509
      %v1511 = vpop.f32.mrf.mxu0
      %v1512 = vpop.f32.mrf.mxu0
      %v1513 = vadd.f32 0.0, %v1512
      %v1514 = vpop.f32.mrf.mxu0
      %1515 = vmatprep.mubr.bf16.mxu0 0
      %1516 = vmatmul.mubr.bf16.gmra.mxu0 %v1420
      %v1517 = vpop.f32.mrf.mxu0
      %v1518 = vadd.f32 0.0, %v1517
      %v1519 = vpop.f32.mrf.mxu0
      %v1520 = vpop.f32.mrf.mxu0
      %v1521 = vadd.f32 0.0, %v1520
      %v1522 = vpop.f32.mrf.mxu0
      %1523 = vmatprep.mubr.bf16.mxu0 0
      %1524 = vmatmul.mubr.bf16.gmra.mxu0 %v1421
      %v1525 = vpop.f32.mrf.mxu0
      %v1526 = vadd.f32 0.0, %v1525
      %v1527 = vpop.f32.mrf.mxu0
      %v1528 = vpop.f32.mrf.mxu0
      %v1529 = vadd.f32 0.0, %v1528
      %v1530 = vpop.f32.mrf.mxu0
      %1531 = vmatprep.mubr.bf16.mxu0 0
      %1532 = vmatmul.mubr.bf16.gmra.mxu0 %v1422
      %v1533 = vpop.f32.mrf.mxu0
      %v1534 = vadd.f32 0.0, %v1533
      %v1535 = vpop.f32.mrf.mxu0
      %v1536 = vpop.f32.mrf.mxu0
      %v1537 = vadd.f32 0.0, %v1536
      %v1538 = vpop.f32.mrf.mxu0
      %1539 = vdwg.mxu0
      %v1540 = vadd.f32 %v1392, %v1510
      %v1541 = vadd.f32 %v1393, %v1513
      %v1542 = vadd.f32 %v1394, %v1518
      %v1543 = vadd.f32 %v1395, %v1521
      %v1544 = vadd.f32 %v1396, %v1526
      %v1545 = vadd.f32 %v1397, %v1529
      %v1546 = vadd.f32 %v1398, %v1534
      %v1547 = vadd.f32 %v1399, %v1537
      %s1548 = scalar_lea.vmem %s1, 448
      %v1549 = vld [vmem:[%s1548] sm:$0xf]
      %v1550 = vld [vmem:[%s1548 + $0x4] sm:$0xf]
      %v1551 = vld [vmem:[%s1548 + $0x8] sm:$0xf]
      %v1552 = vld [vmem:[%s1548 + $0xc] sm:$0xf]
      %v1553 = vld [vmem:[%s1548 + $0x10] sm:$0xf]
      %v1554 = vld [vmem:[%s1548 + $0x14] sm:$0xf]
      %v1555 = vld [vmem:[%s1548 + $0x18] sm:$0xf]
      %v1556 = vld [vmem:[%s1548 + $0x1c] sm:$0xf]
      %v1557 = vld [vmem:[%s1548 + $0x20] sm:$0xf]
      %v1558 = vld [vmem:[%s1548 + $0x24] sm:$0xf]
      %v1559 = vld [vmem:[%s1548 + $0x28] sm:$0xf]
      %v1560 = vld [vmem:[%s1548 + $0x2c] sm:$0xf]
      %v1561 = vld [vmem:[%s1548 + $0x30] sm:$0xf]
      %v1562 = vld [vmem:[%s1548 + $0x34] sm:$0xf]
      %v1563 = vld [vmem:[%s1548 + $0x38] sm:$0xf]
      %v1564 = vld [vmem:[%s1548 + $0x3c] sm:$0xf]
      %v1566 = vunpack.c.l.b16 %v209
      %v1567 = vpack.c.b16 %v277, %v276
      %v1568 = vpack.c.b16 %v279, %v278
      %v1569 = vpack.c.b16 %v281, %v280
      %v1570 = vpack.c.b16 %v1566, %v282
      %v1591 = vunpack.c.l.b16 %v1549
      %v1592 = vunpack.c.l.b16 %v1550
      %v1593 = vunpack.c.l.b16 %v1551
      %v1594 = vunpack.c.l.b16 %v1552
      %v1595 = vunpack.c.l.b16 %v1553
      %v1596 = vunpack.c.l.b16 %v1554
      %v1597 = vunpack.c.l.b16 %v1555
      %v1598 = vunpack.c.l.b16 %v1556
      %v1599 = vunpack.c.l.b16 %v1557
      %v1600 = vunpack.c.l.b16 %v1558
      %v1601 = vunpack.c.l.b16 %v1559
      %v1602 = vunpack.c.l.b16 %v1560
      %v1603 = vunpack.c.l.b16 %v1561
      %v1604 = vunpack.c.l.b16 %v1562
      %v1605 = vunpack.c.l.b16 %v1563
      %v1606 = vunpack.c.l.b16 %v1564
      %v1607 = vpack.c.b16 %v1592, %v1591
      %v1608 = vpack.c.b16 %v1594, %v1593
      %v1609 = vpack.c.b16 %v1596, %v1595
      %v1610 = vpack.c.b16 %v1598, %v1597
      %v1611 = vpack.c.b16 %v1600, %v1599
      %v1612 = vpack.c.b16 %v1602, %v1601
      %v1613 = vpack.c.b16 %v1604, %v1603
      %v1614 = vpack.c.b16 %v1606, %v1605
      %1623 = vmatprep.subr.bf16.mxu0 0
      %1624 = vmatpush1.bf16.msra.mxu0 %v1614
      %1625 = vmatprep.subr.bf16.mxu0 0
      %1626 = vmatpush1.bf16.msra.mxu0 %v1613
      %1627 = vmatprep.subr.bf16.mxu0 0
      %1628 = vmatpush1.bf16.msra.mxu0 %v1612
      %1629 = vmatprep.subr.bf16.mxu0 0
      %1630 = vmatpush1.bf16.msra.mxu0 %v1611
      %1631 = vmatprep.subr.bf16.mxu0 0
      %1632 = vmatpush1.bf16.msra.mxu0 %v1610
      %1633 = vmatprep.subr.bf16.mxu0 0
      %1634 = vmatpush1.bf16.msra.mxu0 %v1609
      %1635 = vmatprep.subr.bf16.mxu0 0
      %1636 = vmatpush1.bf16.msra.mxu0 %v1608
      %1637 = vmatprep.subr.bf16.mxu0 0
      %1638 = vmatpush1.bf16.msra.mxu0 %v1607
      %1639 = vmatprep.subr.bf16.mxu0 0
      %1640 = vmatpush2.bf16.msra.mxu0 0
      %1641 = vmatprep.subr.bf16.mxu0 0
      %1642 = vmatpush2.bf16.msra.mxu0 0
      %1643 = vmatprep.subr.bf16.mxu0 0
      %1644 = vmatpush2.bf16.msra.mxu0 0
      %1645 = vmatprep.subr.bf16.mxu0 0
      %1646 = vmatpush2.bf16.msra.mxu0 0
      %1647 = vmatprep.subr.bf16.mxu0 0
      %1648 = vmatpush2.bf16.msra.mxu0 0
      %1649 = vmatprep.subr.bf16.mxu0 0
      %1650 = vmatpush2.bf16.msra.mxu0 0
      %1651 = vmatprep.subr.bf16.mxu0 0
      %1652 = vmatpush2.bf16.msra.mxu0 0
      %1653 = vmatprep.subr.bf16.mxu0 0
      %1654 = vmatpush2.bf16.msra.mxu0 0
      %1655 = vmatprep.mubr.bf16.mxu0 0
      %1656 = vmatmul.mubr.bf16.gmra.mxu0 %v1567
      %v1657 = vpop.f32.mrf.mxu0
      %v1658 = vadd.f32 0.0, %v1657
      %v1659 = vpop.f32.mrf.mxu0
      %v1660 = vpop.f32.mrf.mxu0
      %v1661 = vadd.f32 0.0, %v1660
      %v1662 = vpop.f32.mrf.mxu0
      %1663 = vmatprep.mubr.bf16.mxu0 0
      %1664 = vmatmul.mubr.bf16.gmra.mxu0 %v1568
      %v1665 = vpop.f32.mrf.mxu0
      %v1666 = vadd.f32 0.0, %v1665
      %v1667 = vpop.f32.mrf.mxu0
      %v1668 = vpop.f32.mrf.mxu0
      %v1669 = vadd.f32 0.0, %v1668
      %v1670 = vpop.f32.mrf.mxu0
      %1671 = vmatprep.mubr.bf16.mxu0 0
      %1672 = vmatmul.mubr.bf16.gmra.mxu0 %v1569
      %v1673 = vpop.f32.mrf.mxu0
      %v1674 = vadd.f32 0.0, %v1673
      %v1675 = vpop.f32.mrf.mxu0
      %v1676 = vpop.f32.mrf.mxu0
      %v1677 = vadd.f32 0.0, %v1676
      %v1678 = vpop.f32.mrf.mxu0
      %1679 = vmatprep.mubr.bf16.mxu0 0
      %1680 = vmatmul.mubr.bf16.gmra.mxu0 %v1570
      %v1681 = vpop.f32.mrf.mxu0
      %v1682 = vadd.f32 0.0, %v1681
      %v1683 = vpop.f32.mrf.mxu0
      %v1684 = vpop.f32.mrf.mxu0
      %v1685 = vadd.f32 0.0, %v1684
      %v1686 = vpop.f32.mrf.mxu0
      %1687 = vdwg.mxu0
      %v1688 = vadd.f32 %v1540, %v1658
      %v1689 = vadd.f32 %v1541, %v1661
      %v1690 = vadd.f32 %v1542, %v1666
      %v1691 = vadd.f32 %v1543, %v1669
      %v1692 = vadd.f32 %v1544, %v1674
      %v1693 = vadd.f32 %v1545, %v1677
      %v1694 = vadd.f32 %v1546, %v1682
      %v1695 = vadd.f32 %v1547, %v1685
      %v1697 = vshrl.u32 %v199, 16
      %v1699 = vrot.slane %v1697, 4
      %v1700 = vshll.u32 %v199, 16
      %v1702 = vrot.slane %v1700, 5
      %v1703 = vor.u32 %v1699, %v1702
      %v1704 = vrot.slane %v1703, 4
      %v1706 = vshll.u32 %v200, 16
      %v1708 = vrot.slane %v1706, 5
      %v1709 = vsel %vm543, %v1704, %v1708
      %s1710 = scalar_lea.vmem %s1, 512
      %v1711 = vld [vmem:[%s1710] sm:$0xf]
      %v1712 = vld [vmem:[%s1710 + $0x4] sm:$0xf]
      %v1713 = vld [vmem:[%s1710 + $0x8] sm:$0xf]
      %v1714 = vld [vmem:[%s1710 + $0xc] sm:$0xf]
      %v1715 = vld [vmem:[%s1710 + $0x10] sm:$0xf]
      %v1716 = vld [vmem:[%s1710 + $0x14] sm:$0xf]
      %v1717 = vld [vmem:[%s1710 + $0x18] sm:$0xf]
      %v1718 = vld [vmem:[%s1710 + $0x1c] sm:$0xf]
      %v1719 = vld [vmem:[%s1710 + $0x20] sm:$0xf]
      %v1720 = vld [vmem:[%s1710 + $0x24] sm:$0xf]
      %v1721 = vld [vmem:[%s1710 + $0x28] sm:$0xf]
      %v1722 = vld [vmem:[%s1710 + $0x2c] sm:$0xf]
      %v1723 = vld [vmem:[%s1710 + $0x30] sm:$0xf]
      %v1724 = vld [vmem:[%s1710 + $0x34] sm:$0xf]
      %v1725 = vld [vmem:[%s1710 + $0x38] sm:$0xf]
      %v1726 = vld [vmem:[%s1710 + $0x3c] sm:$0xf]
      %v1727 = vunpack.c.l.b16 %v1709
      %v1728 = vpack.c.b16 %v675, %v674
      %v1729 = vpack.c.b16 %v677, %v676
      %v1730 = vpack.c.b16 %v679, %v678
      %v1731 = vpack.c.b16 %v1727, %v680
      %v1752 = vunpack.c.l.b16 %v1711
      %v1753 = vunpack.c.l.b16 %v1712
      %v1754 = vunpack.c.l.b16 %v1713
      %v1755 = vunpack.c.l.b16 %v1714
      %v1756 = vunpack.c.l.b16 %v1715
      %v1757 = vunpack.c.l.b16 %v1716
      %v1758 = vunpack.c.l.b16 %v1717
      %v1759 = vunpack.c.l.b16 %v1718
      %v1760 = vunpack.c.l.b16 %v1719
      %v1761 = vunpack.c.l.b16 %v1720
      %v1762 = vunpack.c.l.b16 %v1721
      %v1763 = vunpack.c.l.b16 %v1722
      %v1764 = vunpack.c.l.b16 %v1723
      %v1765 = vunpack.c.l.b16 %v1724
      %v1766 = vunpack.c.l.b16 %v1725
      %v1767 = vunpack.c.l.b16 %v1726
      %v1768 = vpack.c.b16 %v1753, %v1752
      %v1769 = vpack.c.b16 %v1755, %v1754
      %v1770 = vpack.c.b16 %v1757, %v1756
      %v1771 = vpack.c.b16 %v1759, %v1758
      %v1772 = vpack.c.b16 %v1761, %v1760
      %v1773 = vpack.c.b16 %v1763, %v1762
      %v1774 = vpack.c.b16 %v1765, %v1764
      %v1775 = vpack.c.b16 %v1767, %v1766
      %1784 = vmatprep.subr.bf16.mxu0 0
      %1785 = vmatpush1.bf16.msra.mxu0 %v1775
      %1786 = vmatprep.subr.bf16.mxu0 0
      %1787 = vmatpush1.bf16.msra.mxu0 %v1774
      %1788 = vmatprep.subr.bf16.mxu0 0
      %1789 = vmatpush1.bf16.msra.mxu0 %v1773
      %1790 = vmatprep.subr.bf16.mxu0 0
      %1791 = vmatpush1.bf16.msra.mxu0 %v1772
      %1792 = vmatprep.subr.bf16.mxu0 0
      %1793 = vmatpush1.bf16.msra.mxu0 %v1771
      %1794 = vmatprep.subr.bf16.mxu0 0
      %1795 = vmatpush1.bf16.msra.mxu0 %v1770
      %1796 = vmatprep.subr.bf16.mxu0 0
      %1797 = vmatpush1.bf16.msra.mxu0 %v1769
      %1798 = vmatprep.subr.bf16.mxu0 0
      %1799 = vmatpush1.bf16.msra.mxu0 %v1768
      %1800 = vmatprep.subr.bf16.mxu0 0
      %1801 = vmatpush2.bf16.msra.mxu0 0
      %1802 = vmatprep.subr.bf16.mxu0 0
      %1803 = vmatpush2.bf16.msra.mxu0 0
      %1804 = vmatprep.subr.bf16.mxu0 0
      %1805 = vmatpush2.bf16.msra.mxu0 0
      %1806 = vmatprep.subr.bf16.mxu0 0
      %1807 = vmatpush2.bf16.msra.mxu0 0
      %1808 = vmatprep.subr.bf16.mxu0 0
      %1809 = vmatpush2.bf16.msra.mxu0 0
      %1810 = vmatprep.subr.bf16.mxu0 0
      %1811 = vmatpush2.bf16.msra.mxu0 0
      %1812 = vmatprep.subr.bf16.mxu0 0
      %1813 = vmatpush2.bf16.msra.mxu0 0
      %1814 = vmatprep.subr.bf16.mxu0 0
      %1815 = vmatpush2.bf16.msra.mxu0 0
      %1816 = vmatprep.mubr.bf16.mxu0 0
      %1817 = vmatmul.mubr.bf16.gmra.mxu0 %v1728
      %v1818 = vpop.f32.mrf.mxu0
      %v1819 = vadd.f32 0.0, %v1818
      %v1820 = vpop.f32.mrf.mxu0
      %v1821 = vpop.f32.mrf.mxu0
      %v1822 = vadd.f32 0.0, %v1821
      %v1823 = vpop.f32.mrf.mxu0
      %1824 = vmatprep.mubr.bf16.mxu0 0
      %1825 = vmatmul.mubr.bf16.gmra.mxu0 %v1729
      %v1826 = vpop.f32.mrf.mxu0
      %v1827 = vadd.f32 0.0, %v1826
      %v1828 = vpop.f32.mrf.mxu0
      %v1829 = vpop.f32.mrf.mxu0
      %v1830 = vadd.f32 0.0, %v1829
      %v1831 = vpop.f32.mrf.mxu0
      %1832 = vmatprep.mubr.bf16.mxu0 0
      %1833 = vmatmul.mubr.bf16.gmra.mxu0 %v1730
      %v1834 = vpop.f32.mrf.mxu0
      %v1835 = vadd.f32 0.0, %v1834
      %v1836 = vpop.f32.mrf.mxu0
      %v1837 = vpop.f32.mrf.mxu0
      %v1838 = vadd.f32 0.0, %v1837
      %v1839 = vpop.f32.mrf.mxu0
      %1840 = vmatprep.mubr.bf16.mxu0 0
      %1841 = vmatmul.mubr.bf16.gmra.mxu0 %v1731
      %v1842 = vpop.f32.mrf.mxu0
      %v1843 = vadd.f32 0.0, %v1842
      %v1844 = vpop.f32.mrf.mxu0
      %v1845 = vpop.f32.mrf.mxu0
      %v1846 = vadd.f32 0.0, %v1845
      %v1847 = vpop.f32.mrf.mxu0
      %1848 = vdwg.mxu0
      %v1849 = vadd.f32 %v1688, %v1819
      %v1850 = vadd.f32 %v1689, %v1822
      %v1851 = vadd.f32 %v1690, %v1827
      %v1852 = vadd.f32 %v1691, %v1830
      %v1853 = vadd.f32 %v1692, %v1835
      %v1854 = vadd.f32 %v1693, %v1838
      %v1855 = vadd.f32 %v1694, %v1843
      %v1856 = vadd.f32 %v1695, %v1846
      %v1857 = vpack.c.bf16 %v1850, %v1849
      %v1858 = vpack.c.bf16 %v1852, %v1851
      %v1859 = vpack.c.bf16 %v1854, %v1853
      %v1860 = vpack.c.bf16 %v1856, %v1855
      %v1865 = vunpack.c.l.b16 %v1857
      %v1866 = vunpack.c.h.b16 %v1857
      %v1867 = vunpack.c.l.b16 %v1858
      %v1868 = vunpack.c.h.b16 %v1858
      %v1869 = vunpack.c.l.b16 %v1859
      %v1870 = vunpack.c.h.b16 %v1859
      %v1871 = vunpack.c.l.b16 %v1860
      %v1872 = vunpack.c.h.b16 %v1860
      %v1873 = vpack.c.b16 %v1865, %v1865
      %v1874 = vpack.c.b16 %v1866, %v1866
      %v1875 = vpack.c.b16 %v1867, %v1867
      %v1876 = vpack.c.b16 %v1868, %v1868
      %v1877 = vpack.c.b16 %v1869, %v1869
      %v1878 = vpack.c.b16 %v1870, %v1870
      %v1879 = vpack.c.b16 %v1871, %v1871
      %v1880 = vpack.c.b16 %v1872, %v1872
      %1889 = vst [vmem:[%s177] sm:$0xf] %v1873
      %1890 = vst [vmem:[%s177 + $0x4] sm:$0xf] %v1874
      %1891 = vst [vmem:[%s177 + $0x8] sm:$0xf] %v1875
      %1892 = vst [vmem:[%s177 + $0xc] sm:$0xf] %v1876
      %1893 = vst [vmem:[%s177 + $0x10] sm:$0xf] %v1877
      %1894 = vst [vmem:[%s177 + $0x14] sm:$0xf] %v1878
      %1895 = vst [vmem:[%s177 + $0x18] sm:$0xf] %v1879
      %1896 = vst [vmem:[%s177 + $0x1c] sm:$0xf] %v1880
      %v1897 = vadd.f32 %v1849, %v1850
      %v1898 = vadd.f32 %v1897, %v1851
      %v1899 = vadd.f32 %v1898, %v1852
      %v1900 = vadd.f32 %v1899, %v1853
      %v1901 = vadd.f32 %v1900, %v1854
      %v1902 = vadd.f32 %v1901, %v1855
      %v1903 = vadd.f32 %v1902, %v1856
      %v1904 = vrot.slane %v1903, 4
      %v1905 = vadd.f32 %v1903, %v1904
      %v1906 = vrot.slane %v1905, 2
      %v1907 = vadd.f32 %v1905, %v1906
      %v1908 = vrot.slane %v1907, 1
      %v1909 = vadd.f32 %v1907, %v1908
      %1910 = vst [vmem:[%s181] sm:$0x1] %v1909
      %v1911 = vmul.f32 %v1849, %v1849
      %v1912 = vmul.f32 %v1850, %v1850
      %v1913 = vmul.f32 %v1851, %v1851
      %v1914 = vmul.f32 %v1852, %v1852
      %v1915 = vmul.f32 %v1853, %v1853
      %v1916 = vmul.f32 %v1854, %v1854
      %v1917 = vmul.f32 %v1855, %v1855
      %v1918 = vmul.f32 %v1856, %v1856
      %v1919 = vadd.f32 %v1911, %v1912
      %v1920 = vadd.f32 %v1919, %v1913
      %v1921 = vadd.f32 %v1920, %v1914
      %v1922 = vadd.f32 %v1921, %v1915
      %v1923 = vadd.f32 %v1922, %v1916
      %v1924 = vadd.f32 %v1923, %v1917
      %v1925 = vadd.f32 %v1924, %v1918
      %v1926 = vrot.slane %v1925, 4
      %v1927 = vadd.f32 %v1925, %v1926
      %v1928 = vrot.slane %v1927, 2
      %v1929 = vadd.f32 %v1927, %v1928
      %v1930 = vrot.slane %v1929, 1
      %v1931 = vadd.f32 %v1929, %v1930
      %1932 = vst [vmem:[%s181 + $0x1] sm:$0x1] %v1931
      %p1933 = scmp.lt.s32.totalorder %s15, 1
      %s1934 = scalar_select %p1933, %s15, 1
      %s1935 = smul.addr %s1934, 8
      %s1936 = smul.addr %s1935, 4
      %s1937 = scalar_lea.vmem %s2, %s1936
      %p1938 = scmp.lt.s32.totalorder %s15, 1
      %s1939 = scalar_select %p1938, %s15, 1
      %s1940 = smul.addr %s1939, 2
      %s1941 = scalar_lea.vmem %s3, %s1940
      // Predicated region
      $region29: #{basic_block_forward.4} parent=27 // pred_check
        %p1942 = pneg %p80
      $region30: #{basic_block_forward.4} parent=27 // pred_check_branch
        %1944 = sbr.rel (%p1942) target = $region32
      $region31: #{basic_block_forward.4} parent=27 // pred_region
        _
      $region32: #{basic_block_forward.4} parent=27 // pred_fallthru
        _
      // Predicated region
      $region33: #{basic_block_forward.4} parent=27 // pred_check
        %p1945 = pneg %p106
      $region34: #{basic_block_forward.4} parent=27 // pred_check_branch
        %1947 = sbr.rel (%p1945) target = $region36
      $region35: #{basic_block_forward.4} parent=27 // pred_region
        _
      $region36: #{basic_block_forward.4} parent=27 // pred_fallthru
        _
    $region28: #{basic_block_forward.4} parent=5 // pred_fallthru
      _
    %p1948 = scmp.le.s32.totalorder 2, %s10
    // Predicated region
    $region37: #{basic_block_forward.4} parent=5 // pred_check
      %p1949 = pneg %p1948
    $region38: #{basic_block_forward.4} parent=5 // pred_check_branch
      %1951 = sbr.rel (%p1949) target = $region40
    $region39: #{basic_block_forward.4} parent=5 // pred_region
      %s1952 = ssub.s32 %s10, 2
      // Predicated region
      $region41: #{basic_block_forward.4} parent=39 // pred_check
        %p1953 = pneg %p86
      $region42: #{basic_block_forward.4} parent=39 // pred_check_branch
        %1955 = sbr.rel (%p1953) target = $region44
      $region43: #{basic_block_forward.4} parent=39 // pred_region
        %p1956 = scmp.lt.s32.totalorder %s16, 1
        %s1957 = scalar_select %p1956, %s16, 1
        %s1958 = smul.addr %s1957, 8
        %s1959 = smul.addr %s1958, 4
        %s1960 = scalar_lea.vmem %s2, %s1959
      $region44: #{basic_block_forward.4} parent=39 // pred_fallthru
        _
      // Predicated region
      $region45: #{basic_block_forward.4} parent=39 // pred_check
        %p1961 = pneg %p112
      $region46: #{basic_block_forward.4} parent=39 // pred_check_branch
        %1963 = sbr.rel (%p1961) target = $region48
      $region47: #{basic_block_forward.4} parent=39 // pred_region
        %p1964 = scmp.lt.s32.totalorder %s16, 1
        %s1965 = scalar_select %p1964, %s16, 1
        %s1966 = smul.addr %s1965, 2
        %s1967 = scalar_lea.vmem %s3, %s1966
      $region48: #{basic_block_forward.4} parent=39 // pred_fallthru
        _
    $region40: #{basic_block_forward.4} parent=5 // pred_fallthru
      _
  $region6: #{basic_block_forward.4} parent=0 // loop_footer
    %s14 = sadd.s32 1, %s10
  $region7: #{basic_block_forward.4} parent=0 // loop_footer_branch
    %9 = sbr.rel target = $region3
  $region8: #{basic_block_forward.4} parent=0 // loop_exit
    _

// kernel: basic_block_forward.5
$region0: #{basic_block_forward.5}
  #allocation0 [shape = 'u32[]', space=smem, size = 0x4, offset = 0x4, fixed_abs, tag = 'smem constant byte address 0x4 - core index']
  #allocation1 [shape = 'u32[144,128]{1,0:T(1,128)}', space=vmem, size = 0x12000, scoped, tag = 'internal scratch']
  #allocation2 [shape = 'bf16[10,10,128]{2,1,0:T(8,128)(2,1)}', space=vmem, size = 0xa000, scoped, tag = 'scratch operand']
  %s0 = inlined_call_operand.vmem [shape: bf16[2,8,8,128], index: 0, kind: input, shape index: {}]
  %s1 = inlined_call_operand.vmem [shape: bf16[9,128,128], index: 1, kind: input, shape index: {}]
  %s2 = inlined_call_operand.vmem [shape: f32[1,128], index: 2, kind: input, shape index: {}]
  %s3 = inlined_call_operand.vmem [shape: f32[1,128], index: 3, kind: input, shape index: {}]
  %s4 = inlined_call_operand.vmem [shape: bf16[2,64,128], index: 4, kind: output, shape index: {0}]
  %s5 = inlined_call_operand.vmem [shape: f32[2,2,128], index: 5, kind: output, shape index: {1}]
  %6 = xla_tuple %s4, %s5
  %s7 = sld [smem:[#allocation0]]
  $region57: #{basic_block_forward.5} parent=0
    _
  %s9 = ssub.s32 1, %s7
  %s10 = scalar_select 0, %s9, %s7
  loop: start=0, step=1, limit=4
  $region2: #{basic_block_forward.5} parent=0 // loop_pre_header
    _
  $region3: #{basic_block_forward.5} parent=0 // loop_header
    %s12 = sphi 0, %s16
    %p13 = scmp.ge.s32.totalorder %s12, 4
    %s22 = sphi 0, %s24
    %s25 = sphi 0, %s22
    %s26 = sphi 0, %s25
    %s42 = sphi 0, %s26
    %s46 = sphi 0, %s46
    %s48 = sphi 0, %s46
    %s49 = sphi 0, %s48
    %s63 = sphi 0, %s49
    %s67 = sphi 0, %s67
    %s69 = sphi 0, %s67
    %s70 = sphi 0, %s69
    %s84 = sphi 0, %s70
    %s88 = sphi 0, %s88
    %s90 = sphi 0, %s88
    %s91 = sphi 0, %s90
    %s105 = sphi 0, %s91
    %s111 = sphi 0, %s113
    %s114 = sphi 0, %s111
    %s115 = sphi 0, %s114
    %s131 = sphi 0, %s115
    %s137 = sphi 0, %s139
    %s140 = sphi 0, %s137
    %s141 = sphi 0, %s140
    %s157 = sphi 0, %s141
  $region4: #{basic_block_forward.5} parent=0 // loop_header_branch
    %15 = sbr.rel (%p13) target = $region8
  $region5: #{basic_block_forward.5} parent=0 // loop_body
    %s17 = ssub.s32 %s12, 1
    %s18 = ssub.s32 %s12, 2
    %s19 = sadd.s32 %s12, 1
    %s20 = ssub.s32 %s12, %s19
    %p21 = scmp.eq.s32.totalorder %s20, 0
    %s23 = sadd.s32 %s22, 1
    %s24 = scalar_select %p21, %s22, %s23
    %p27 = pneg %p21
    %p28 = scmp.eq.s32.totalorder %s12, 1
    %p29 = por %p27, %p28
    %p30 = scmp.ne.s32.totalorder %s22, %s25
    %p31 = scmp.eq.s32.totalorder %s12, 0
    %p32 = por %p30, %p31
    %p33 = scmp.ne.s32.totalorder %s22, %s25
    %p34 = scmp.eq.s32.totalorder %s17, 1
    %p35 = por %p33, %p34
    %p36 = scmp.ne.s32.totalorder %s25, %s26
    %p37 = scmp.eq.s32.totalorder %s17, 0
    %p38 = por %p36, %p37
    %p39 = scmp.ne.s32.totalorder %s25, %s26
    %p40 = scmp.eq.s32.totalorder %s18, 1
    %p41 = por %p39, %p40
    %p43 = scmp.ne.s32.totalorder %s26, %s42
    %p44 = scmp.eq.s32.totalorder %s18, 0
    %p45 = por %p43, %p44
    %s47 = sadd.s32 %s46, 1
    %p50 = scmp.eq.s32.totalorder %s12, 1
    %p51 = scmp.ne.s32.totalorder %s46, %s48
    %p52 = scmp.eq.s32.totalorder %s12, 0
    %p53 = por %p51, %p52
    %p54 = scmp.ne.s32.totalorder %s46, %s48
    %p55 = scmp.eq.s32.totalorder %s17, 1
    %p56 = por %p54, %p55
    %p57 = scmp.ne.s32.totalorder %s48, %s49
    %p58 = scmp.eq.s32.totalorder %s17, 0
    %p59 = por %p57, %p58
    %p60 = scmp.ne.s32.totalorder %s48, %s49
    %p61 = scmp.eq.s32.totalorder %s18, 1
    %p62 = por %p60, %p61
    %p64 = scmp.ne.s32.totalorder %s49, %s63
    %p65 = scmp.eq.s32.totalorder %s18, 0
    %p66 = por %p64, %p65
    %s68 = sadd.s32 %s67, 1
    %p71 = scmp.eq.s32.totalorder %s12, 1
    %p72 = scmp.ne.s32.totalorder %s67, %s69
    %p73 = scmp.eq.s32.totalorder %s12, 0
    %p74 = por %p72, %p73
    %p75 = scmp.ne.s32.totalorder %s67, %s69
    %p76 = scmp.eq.s32.totalorder %s17, 1
    %p77 = por %p75, %p76
    %p78 = scmp.ne.s32.totalorder %s69, %s70
    %p79 = scmp.eq.s32.totalorder %s17, 0
    %p80 = por %p78, %p79
    %p81 = scmp.ne.s32.totalorder %s69, %s70
    %p82 = scmp.eq.s32.totalorder %s18, 1
    %p83 = por %p81, %p82
    %p85 = scmp.ne.s32.totalorder %s70, %s84
    %p86 = scmp.eq.s32.totalorder %s18, 0
    %p87 = por %p85, %p86
    %s89 = sadd.s32 %s88, 1
    %p92 = scmp.eq.s32.totalorder %s12, 1
    %p93 = scmp.ne.s32.totalorder %s88, %s90
    %p94 = scmp.eq.s32.totalorder %s12, 0
    %p95 = por %p93, %p94
    %p96 = scmp.ne.s32.totalorder %s88, %s90
    %p97 = scmp.eq.s32.totalorder %s17, 1
    %p98 = por %p96, %p97
    %p99 = scmp.ne.s32.totalorder %s90, %s91
    %p100 = scmp.eq.s32.totalorder %s17, 0
    %p101 = por %p99, %p100
    %p102 = scmp.ne.s32.totalorder %s90, %s91
    %p103 = scmp.eq.s32.totalorder %s18, 1
    %p104 = por %p102, %p103
    %p106 = scmp.ne.s32.totalorder %s91, %s105
    %p107 = scmp.eq.s32.totalorder %s18, 0
    %p108 = por %p106, %p107
    %s109 = ssub.s32 %s12, %s19
    %p110 = scmp.eq.s32.totalorder %s109, 0
    %s112 = sadd.s32 %s111, 1
    %s113 = scalar_select %p110, %s111, %s112
    %p116 = pneg %p110
    %p117 = scmp.eq.s32.totalorder %s12, 1
    %p118 = por %p116, %p117
    %p119 = scmp.ne.s32.totalorder %s111, %s114
    %p120 = scmp.eq.s32.totalorder %s12, 0
    %p121 = por %p119, %p120
    %p122 = scmp.ne.s32.totalorder %s111, %s114
    %p123 = scmp.eq.s32.totalorder %s17, 1
    %p124 = por %p122, %p123
    %p125 = scmp.ne.s32.totalorder %s114, %s115
    %p126 = scmp.eq.s32.totalorder %s17, 0
    %p127 = por %p125, %p126
    %p128 = scmp.ne.s32.totalorder %s114, %s115
    %p129 = scmp.eq.s32.totalorder %s18, 1
    %p130 = por %p128, %p129
    %p132 = scmp.ne.s32.totalorder %s115, %s131
    %p133 = scmp.eq.s32.totalorder %s18, 0
    %p134 = por %p132, %p133
    %s135 = ssub.s32 %s12, %s19
    %p136 = scmp.eq.s32.totalorder %s135, 0
    %s138 = sadd.s32 %s137, 1
    %s139 = scalar_select %p136, %s137, %s138
    %p142 = pneg %p136
    %p143 = scmp.eq.s32.totalorder %s12, 1
    %p144 = por %p142, %p143
    %p145 = scmp.ne.s32.totalorder %s137, %s140
    %p146 = scmp.eq.s32.totalorder %s12, 0
    %p147 = por %p145, %p146
    %p148 = scmp.ne.s32.totalorder %s137, %s140
    %p149 = scmp.eq.s32.totalorder %s17, 1
    %p150 = por %p148, %p149
    %p151 = scmp.ne.s32.totalorder %s140, %s141
    %p152 = scmp.eq.s32.totalorder %s17, 0
    %p153 = por %p151, %p152
    %p154 = scmp.ne.s32.totalorder %s140, %s141
    %p155 = scmp.eq.s32.totalorder %s18, 1
    %p156 = por %p154, %p155
    %p158 = scmp.ne.s32.totalorder %s141, %s157
    %p159 = scmp.eq.s32.totalorder %s18, 0
    %p160 = por %p158, %p159
    %p161 = scmp.le.s32.totalorder 1, %s12
    %p162 = scmp.lt.s32.totalorder %s12, 3
    %p163 = pnand %p161, %p162
    %p164 = pneg %p163
    // Predicated region
    $region9: #{basic_block_forward.5} parent=5 // pred_check
      _
    $region10: #{basic_block_forward.5} parent=5 // pred_check_branch
      %166 = sbr.rel (%p163) target = $region12
    $region11: #{basic_block_forward.5} parent=5 // pred_region
      %s167 = ssub.s32 %s12, 1
      // Predicated region
      $region13: #{basic_block_forward.5} parent=11 // pred_check
        %p168 = pneg %p59
      $region14: #{basic_block_forward.5} parent=11 // pred_check_branch
        %170 = sbr.rel (%p168) target = $region16
      $region15: #{basic_block_forward.5} parent=11 // pred_region
        _
      $region16: #{basic_block_forward.5} parent=11 // pred_fallthru
        _
      // Predicated region
      $region17: #{basic_block_forward.5} parent=11 // pred_check
        %p171 = pneg %p80
      $region18: #{basic_block_forward.5} parent=11 // pred_check_branch
        %173 = sbr.rel (%p171) target = $region20
      $region19: #{basic_block_forward.5} parent=11 // pred_region
        _
      $region20: #{basic_block_forward.5} parent=11 // pred_fallthru
        _
      // Predicated region
      $region21: #{basic_block_forward.5} parent=11 // pred_check
        %p174 = pneg %p101
      $region22: #{basic_block_forward.5} parent=11 // pred_check_branch
        %176 = sbr.rel (%p174) target = $region24
      $region23: #{basic_block_forward.5} parent=11 // pred_region
        _
      $region24: #{basic_block_forward.5} parent=11 // pred_fallthru
        _
    $region12: #{basic_block_forward.5} parent=5 // pred_fallthru
      _
    %p177 = scmp.lt.s32.totalorder %s12, 2
    // Predicated region
    $region25: #{basic_block_forward.5} parent=5 // pred_check
      %p178 = pneg %p177
    $region26: #{basic_block_forward.5} parent=5 // pred_check_branch
      %180 = sbr.rel (%p178) target = $region28
    $region27: #{basic_block_forward.5} parent=5 // pred_region
      // Predicated region
      $region29: #{basic_block_forward.5} parent=27 // pred_check
        %p181 = pneg %p32
      $region30: #{basic_block_forward.5} parent=27 // pred_check_branch
        %183 = sbr.rel (%p181) target = $region32
      $region31: #{basic_block_forward.5} parent=27 // pred_region
        %p184 = scmp.lt.s32.totalorder %s12, 1
        %s185 = scalar_select %p184, %s12, 1
        %s186 = smul.addr %s185, 8
        %s187 = smul.addr %s186, 4
        %s188 = scalar_lea.vmem %s0, %s187
      $region32: #{basic_block_forward.5} parent=27 // pred_fallthru
        _
    $region28: #{basic_block_forward.5} parent=5 // pred_fallthru
      _
    %p189 = scmp.le.s32.totalorder 1, %s12
    %p190 = scmp.lt.s32.totalorder %s12, 3
    %p191 = pnand %p189, %p190
    %p192 = pneg %p191
    // Predicated region
    $region33: #{basic_block_forward.5} parent=5 // pred_check
      _
    $region34: #{basic_block_forward.5} parent=5 // pred_check_branch
      %194 = sbr.rel (%p191) target = $region36
    $region35: #{basic_block_forward.5} parent=5 // pred_region
      %s195 = ssub.s32 %s12, 1
      %p196 = scmp.lt.s32.totalorder %s17, 1
      %s197 = scalar_select %p196, %s17, 1
      %s198 = smul.addr %s197, 8
      %s199 = smul.addr %s198, 4
      %s200 = scalar_lea.vmem %s0, %s199
      %p201 = pneg %p38
      %p202 = pneg %p35
      %p203 = pneg %p59
      %p204 = pneg %p56
      %p205 = pneg %p80
      %p206 = pneg %p77
      %p207 = pneg %p101
      %p208 = pneg %p98
      %p209 = pneg %p127
      %p210 = pneg %p124
      %p211 = scmp.lt.s32.totalorder %s17, 1
      %s212 = scalar_select %p211, %s17, 1
      %s213 = smul.addr %s212, 8
      %s214 = smul.addr %s213, 4
      %s215 = scalar_lea.vmem %s4, %s214
      %p216 = pneg %p153
      %p217 = pneg %p150
      %p218 = scmp.lt.s32.totalorder %s17, 1
      %s219 = scalar_select %p218, %s17, 1
      %s220 = smul.addr %s219, 2
      %s221 = scalar_lea.vmem %s5, %s220
      %p222 = scmp.lt.s32.totalorder %s17, 1
      %s223 = scalar_select %p222, %s17, 1
      %s224 = smul.addr %s223, 8
      %s225 = smul.addr %s224, 4
      %s226 = scalar_lea.vmem %s0, %s225
      %p227 = scmp.lt.s32.totalorder %s17, 1
      %s228 = scalar_select %p227, %s17, 1
      %s229 = smul.addr %s228, 8
      %s230 = smul.addr %s229, 4
      %s231 = scalar_lea.vmem %s4, %s230
      %p232 = scmp.lt.s32.totalorder %s17, 1
      %s233 = scalar_select %p232, %s17, 1
      %s234 = smul.addr %s233, 2
      %s235 = scalar_lea.vmem %s5, %s234
      %v237 = vld [vmem:[%s226] sm:$0xf]
      %v238 = vld [vmem:[%s226 + $0x4] sm:$0xf]
      %v239 = vld [vmem:[%s226 + $0x8] sm:$0xf]
      %v240 = vld [vmem:[%s226 + $0xc] sm:$0xf]
      %v241 = vld [vmem:[%s226 + $0x10] sm:$0xf]
      %v242 = vld [vmem:[%s226 + $0x14] sm:$0xf]
      %v243 = vld [vmem:[%s226 + $0x18] sm:$0xf]
      %v244 = vld [vmem:[%s226 + $0x1c] sm:$0xf]
      %v245 = vunpack.c.l.bf16 %v237
      %v246 = vunpack.c.l.bf16 %v238
      %v247 = vunpack.c.l.bf16 %v239
      %v248 = vunpack.c.l.bf16 %v240
      %v249 = vunpack.c.l.bf16 %v241
      %v250 = vunpack.c.l.bf16 %v242
      %v251 = vunpack.c.l.bf16 %v243
      %v252 = vunpack.c.l.bf16 %v244
      %v253 = vld [vmem:[%s2] sm:$0x1]
      %v255 = vlaneseq
      %v256 = vshrl.u32 %v255, 7
      %v257 = vsub.s32 0, %v256
      %v258 = vrot.slane %v253, %v257
      %v260 = vmul.f32 %v245, %v258
      %v261 = vmul.f32 %v246, %v258
      %v262 = vmul.f32 %v247, %v258
      %v263 = vmul.f32 %v248, %v258
      %v264 = vmul.f32 %v249, %v258
      %v265 = vmul.f32 %v250, %v258
      %v266 = vmul.f32 %v251, %v258
      %v267 = vmul.f32 %v252, %v258
      %v268 = vld [vmem:[%s3] sm:$0x1]
      %v270 = vlaneseq
      %v271 = vshrl.u32 %v270, 7
      %v272 = vsub.s32 0, %v271
      %v273 = vrot.slane %v268, %v272
      %v275 = vadd.f32 %v260, %v273
      %v276 = vadd.f32 %v261, %v273
      %v277 = vadd.f32 %v262, %v273
      %v278 = vadd.f32 %v263, %v273
      %v279 = vadd.f32 %v264, %v273
      %v280 = vadd.f32 %v265, %v273
      %v281 = vadd.f32 %v266, %v273
      %v282 = vadd.f32 %v267, %v273
      %v283 = vmax.f32 %v275, 0.0
      %v284 = vmax.f32 %v276, 0.0
      %v285 = vmax.f32 %v277, 0.0
      %v286 = vmax.f32 %v278, 0.0
      %v287 = vmax.f32 %v279, 0.0
      %v288 = vmax.f32 %v280, 0.0
      %v289 = vmax.f32 %v281, 0.0
      %v290 = vmax.f32 %v282, 0.0
      %291 = vst [vmem:[#allocation2] sm:$0xf] 0
      %292 = vst [vmem:[#allocation2 + $0x4] sm:$0x1] 0
      %293 = vst [vmem:[#allocation2 + $0x8] sm:$0xf] 0
      %294 = vst [vmem:[#allocation2 + $0xc] sm:$0x1] 0
      %295 = vst [vmem:[#allocation2 + $0x10] sm:$0xf] 0
      %296 = vst [vmem:[#allocation2 + $0x14] sm:$0x1] 0
      %297 = vst [vmem:[#allocation2 + $0x18] sm:$0xf] 0
      %298 = vst [vmem:[#allocation2 + $0x1c] sm:$0x1] 0
      %299 = vst [vmem:[#allocation2 + $0x20] sm:$0xf] 0
      %300 = vst [vmem:[#allocation2 + $0x24] sm:$0x1] 0
      %301 = vst [vmem:[#allocation2 + $0x28] sm:$0xf] 0
      %302 = vst [vmem:[#allocation2 + $0x2c] sm:$0x1] 0
      %303 = vst [vmem:[#allocation2 + $0x30] sm:$0xf] 0
      %304 = vst [vmem:[#allocation2 + $0x34] sm:$0x1] 0
      %305 = vst [vmem:[#allocation2 + $0x38] sm:$0xf] 0
      %306 = vst [vmem:[#allocation2 + $0x3c] sm:$0x1] 0
      %307 = vst [vmem:[#allocation2 + $0x40] sm:$0xf] 0
      %308 = vst [vmem:[#allocation2 + $0x44] sm:$0x1] 0
      %309 = vst [vmem:[#allocation2 + $0x48] sm:$0xf] 0
      %310 = vst [vmem:[#allocation2 + $0x4c] sm:$0x1] 0
      %v311 = vpack.c.bf16 %v283, %v283
      %v312 = vpack.c.bf16 %v284, %v284
      %v313 = vpack.c.bf16 %v285, %v285
      %v314 = vpack.c.bf16 %v286, %v286
      %v315 = vpack.c.bf16 %v287, %v287
      %v316 = vpack.c.bf16 %v288, %v288
      %v317 = vpack.c.bf16 %v289, %v289
      %v318 = vpack.c.bf16 %v290, %v290
      %v327 = vunpack.c.l.b16 %v311
      %v328 = vunpack.c.l.b16 %v312
      %v329 = vunpack.c.l.b16 %v313
      %v330 = vunpack.c.l.b16 %v314
      %v331 = vunpack.c.l.b16 %v315
      %v332 = vunpack.c.l.b16 %v316
      %v333 = vunpack.c.l.b16 %v317
      %v334 = vunpack.c.l.b16 %v318
      %v335 = vpack.c.b16 %v327, %v327
      %v336 = vpack.c.b16 %v328, %v328
      %v337 = vpack.c.b16 %v329, %v329
      %v338 = vpack.c.b16 %v330, %v330
      %v339 = vpack.c.b16 %v331, %v331
      %v340 = vpack.c.b16 %v332, %v332
      %v341 = vpack.c.b16 %v333, %v333
      %v342 = vpack.c.b16 %v334, %v334
      %v344 = vshrl.u32 %v335, 16
      %v346 = vrot.slane %v344, 7
      %v347 = vshll.u32 %v335, 16
      %v349 = vor.u32 %v346, %v347
      %v350 = vrot.slane %v346, 4
      %v352 = vshrl.u32 %v336, 16
      %v354 = vrot.slane %v352, 7
      %v355 = vshll.u32 %v336, 16
      %v357 = vor.u32 %v354, %v355
      %v358 = vrot.slane %v354, 4
      %v360 = vshrl.u32 %v337, 16
      %v362 = vrot.slane %v360, 7
      %v363 = vshll.u32 %v337, 16
      %v365 = vor.u32 %v362, %v363
      %v366 = vrot.slane %v362, 4
      %v368 = vshrl.u32 %v338, 16
      %v370 = vrot.slane %v368, 7
      %v371 = vshll.u32 %v338, 16
      %v373 = vor.u32 %v370, %v371
      %v374 = vrot.slane %v370, 4
      %v376 = vshrl.u32 %v339, 16
      %v378 = vrot.slane %v376, 7
      %v379 = vshll.u32 %v339, 16
      %v381 = vor.u32 %v378, %v379
      %v382 = vrot.slane %v378, 4
      %v384 = vshrl.u32 %v340, 16
      %v386 = vrot.slane %v384, 7
      %v387 = vshll.u32 %v340, 16
      %v389 = vor.u32 %v386, %v387
      %v390 = vrot.slane %v386, 4
      %v392 = vshrl.u32 %v341, 16
      %v394 = vrot.slane %v392, 7
      %v395 = vshll.u32 %v341, 16
      %v397 = vor.u32 %v394, %v395
      %v398 = vrot.slane %v394, 4
      %v400 = vshrl.u32 %v342, 16
      %v402 = vrot.slane %v400, 7
      %v403 = vshll.u32 %v342, 16
      %v405 = vor.u32 %v402, %v403
      %v406 = vrot.slane %v402, 4
      %s423 = scalar_lea.vmem [#allocation2], 8
      %vm424 = vcmask 1043456
      %vm425 = vsmask.f32 7938
      %vm426 = vmand %vm424, %vm425
      %v427 = vld [vmem:[%s423] sm:$0xf]
      %v428 = vsel %vm426, %v349, %v427
      %429 = vst [vmem:[%s423] sm:$0xf] %v428
      %vm430 = vcmask 1040384
      %vm431 = vsmask.f32 256
      %vm432 = vmand %vm430, %vm431
      %v433 = vld [vmem:[%s423 + $0x4] sm:$0x1]
      %v434 = vsel %vm432, %v350, %v433
      %435 = vst [vmem:[%s423 + $0x4] sm:$0x1] %v434
      %v436 = vld [vmem:[%s423 + $0x8] sm:$0xf]
      %v437 = vsel %vm426, %v357, %v436
      %438 = vst [vmem:[%s423 + $0x8] sm:$0xf] %v437
      %v439 = vld [vmem:[%s423 + $0xc] sm:$0x1]
      %v440 = vsel %vm432, %v358, %v439
      %441 = vst [vmem:[%s423 + $0xc] sm:$0x1] %v440
      %v442 = vld [vmem:[%s423 + $0x10] sm:$0xf]
      %v443 = vsel %vm426, %v365, %v442
      %444 = vst [vmem:[%s423 + $0x10] sm:$0xf] %v443
      %v445 = vld [vmem:[%s423 + $0x14] sm:$0x1]
      %v446 = vsel %vm432, %v366, %v445
      %447 = vst [vmem:[%s423 + $0x14] sm:$0x1] %v446
      %v448 = vld [vmem:[%s423 + $0x18] sm:$0xf]
      %v449 = vsel %vm426, %v373, %v448
      %450 = vst [vmem:[%s423 + $0x18] sm:$0xf] %v449
      %v451 = vld [vmem:[%s423 + $0x1c] sm:$0x1]
      %v452 = vsel %vm432, %v374, %v451
      %453 = vst [vmem:[%s423 + $0x1c] sm:$0x1] %v452
      %v454 = vld [vmem:[%s423 + $0x20] sm:$0xf]
      %v455 = vsel %vm426, %v381, %v454
      %456 = vst [vmem:[%s423 + $0x20] sm:$0xf] %v455
      %v457 = vld [vmem:[%s423 + $0x24] sm:$0x1]
      %v458 = vsel %vm432, %v382, %v457
      %459 = vst [vmem:[%s423 + $0x24] sm:$0x1] %v458
      %v460 = vld [vmem:[%s423 + $0x28] sm:$0xf]
      %v461 = vsel %vm426, %v389, %v460
      %462 = vst [vmem:[%s423 + $0x28] sm:$0xf] %v461
      %v463 = vld [vmem:[%s423 + $0x2c] sm:$0x1]
      %v464 = vsel %vm432, %v390, %v463
      %465 = vst [vmem:[%s423 + $0x2c] sm:$0x1] %v464
      %v466 = vld [vmem:[%s423 + $0x30] sm:$0xf]
      %v467 = vsel %vm426, %v397, %v466
      %468 = vst [vmem:[%s423 + $0x30] sm:$0xf] %v467
      %v469 = vld [vmem:[%s423 + $0x34] sm:$0x1]
      %v470 = vsel %vm432, %v398, %v469
      %471 = vst [vmem:[%s423 + $0x34] sm:$0x1] %v470
      %v472 = vld [vmem:[%s423 + $0x38] sm:$0xf]
      %v473 = vsel %vm426, %v405, %v472
      %474 = vst [vmem:[%s423 + $0x38] sm:$0xf] %v473
      %v475 = vld [vmem:[%s423 + $0x3c] sm:$0x1]
      %v476 = vsel %vm432, %v406, %v475
      %477 = vst [vmem:[%s423 + $0x3c] sm:$0x1] %v476
      %v478 = vld [vmem:[#allocation2] sm:$0xf]
      %v479 = vld [vmem:[#allocation2 + $0x4] sm:$0x1]
      %v480 = vld [vmem:[#allocation2 + $0x8] sm:$0xf]
      %v481 = vld [vmem:[#allocation2 + $0xc] sm:$0x1]
      %v482 = vld [vmem:[#allocation2 + $0x10] sm:$0xf]
      %v483 = vld [vmem:[#allocation2 + $0x14] sm:$0x1]
      %v484 = vld [vmem:[#allocation2 + $0x18] sm:$0xf]
      %v485 = vld [vmem:[#allocation2 + $0x1c] sm:$0x1]
      %v486 = vld [vmem:[#allocation2 + $0x20] sm:$0xf]
      %v487 = vld [vmem:[#allocation2 + $0x24] sm:$0x1]
      %v488 = vld [vmem:[#allocation2 + $0x28] sm:$0xf]
      %v489 = vld [vmem:[#allocation2 + $0x2c] sm:$0x1]
      %v490 = vld [vmem:[#allocation2 + $0x30] sm:$0xf]
      %v491 = vld [vmem:[#allocation2 + $0x34] sm:$0x1]
      %v492 = vld [vmem:[#allocation2 + $0x38] sm:$0xf]
      %v493 = vld [vmem:[#allocation2 + $0x3c] sm:$0x1]
      %v494 = vld [vmem:[#allocation2 + $0x40] sm:$0xf]
      %v495 = vld [vmem:[#allocation2 + $0x44] sm:$0x1]
      %v496 = vld [vmem:[#allocation2 + $0x48] sm:$0xf]
      %v497 = vld [vmem:[#allocation2 + $0x4c] sm:$0x1]
      %v498 = vld [vmem:[%s1] sm:$0xf]
      %v499 = vld [vmem:[%s1 + $0x4] sm:$0xf]
      %v500 = vld [vmem:[%s1 + $0x8] sm:$0xf]
      %v501 = vld [vmem:[%s1 + $0xc] sm:$0xf]
      %v502 = vld [vmem:[%s1 + $0x10] sm:$0xf]
      %v503 = vld [vmem:[%s1 + $0x14] sm:$0xf]
      %v504 = vld [vmem:[%s1 + $0x18] sm:$0xf]
      %v505 = vld [vmem:[%s1 + $0x1c] sm:$0xf]
      %v506 = vld [vmem:[%s1 + $0x20] sm:$0xf]
      %v507 = vld [vmem:[%s1 + $0x24] sm:$0xf]
      %v508 = vld [vmem:[%s1 + $0x28] sm:$0xf]
      %v509 = vld [vmem:[%s1 + $0x2c] sm:$0xf]
      %v510 = vld [vmem:[%s1 + $0x30] sm:$0xf]
      %v511 = vld [vmem:[%s1 + $0x34] sm:$0xf]
      %v512 = vld [vmem:[%s1 + $0x38] sm:$0xf]
      %v513 = vld [vmem:[%s1 + $0x3c] sm:$0xf]
      %vm514 = vsmask.f32 3328
      %vm515 = vsmask.f32 7440
      %vm516 = vmor %vm514, %vm515
      %v518 = vshrl.u32 %v478, 16
      %v520 = vrot.slane %v518, 4
      %v521 = vshll.u32 %v478, 16
      %v523 = vrot.slane %v521, 5
      %v524 = vor.u32 %v520, %v523
      %v525 = vrot.slane %v524, 4
      %v527 = vshll.u32 %v479, 16
      %v529 = vrot.slane %v527, 5
      %v530 = vsel %vm516, %v525, %v529
      %v532 = vshrl.u32 %v480, 16
      %v534 = vrot.slane %v532, 4
      %v535 = vshll.u32 %v480, 16
      %v537 = vrot.slane %v535, 5
      %v538 = vor.u32 %v534, %v537
      %v539 = vrot.slane %v538, 4
      %v541 = vshll.u32 %v481, 16
      %v543 = vrot.slane %v541, 5
      %v544 = vsel %vm516, %v539, %v543
      %v546 = vshrl.u32 %v482, 16
      %v548 = vrot.slane %v546, 4
      %v549 = vshll.u32 %v482, 16
      %v551 = vrot.slane %v549, 5
      %v552 = vor.u32 %v548, %v551
      %v553 = vrot.slane %v552, 4
      %v555 = vshll.u32 %v483, 16
      %v557 = vrot.slane %v555, 5
      %v558 = vsel %vm516, %v553, %v557
      %v560 = vshrl.u32 %v484, 16
      %v562 = vrot.slane %v560, 4
      %v563 = vshll.u32 %v484, 16
      %v565 = vrot.slane %v563, 5
      %v566 = vor.u32 %v562, %v565
      %v567 = vrot.slane %v566, 4
      %v569 = vshll.u32 %v485, 16
      %v571 = vrot.slane %v569, 5
      %v572 = vsel %vm516, %v567, %v571
      %v574 = vshrl.u32 %v486, 16
      %v576 = vrot.slane %v574, 4
      %v577 = vshll.u32 %v486, 16
      %v579 = vrot.slane %v577, 5
      %v580 = vor.u32 %v576, %v579
      %v581 = vrot.slane %v580, 4
      %v583 = vshll.u32 %v487, 16
      %v585 = vrot.slane %v583, 5
      %v586 = vsel %vm516, %v581, %v585
      %v588 = vshrl.u32 %v488, 16
      %v590 = vrot.slane %v588, 4
      %v591 = vshll.u32 %v488, 16
      %v593 = vrot.slane %v591, 5
      %v594 = vor.u32 %v590, %v593
      %v595 = vrot.slane %v594, 4
      %v597 = vshll.u32 %v489, 16
      %v599 = vrot.slane %v597, 5
      %v600 = vsel %vm516, %v595, %v599
      %v602 = vshrl.u32 %v490, 16
      %v604 = vrot.slane %v602, 4
      %v605 = vshll.u32 %v490, 16
      %v607 = vrot.slane %v605, 5
      %v608 = vor.u32 %v604, %v607
      %v609 = vrot.slane %v608, 4
      %v611 = vshll.u32 %v491, 16
      %v613 = vrot.slane %v611, 5
      %v614 = vsel %vm516, %v609, %v613
      %v616 = vshrl.u32 %v492, 16
      %v618 = vrot.slane %v616, 4
      %v619 = vshll.u32 %v492, 16
      %v621 = vrot.slane %v619, 5
      %v622 = vor.u32 %v618, %v621
      %v623 = vrot.slane %v622, 4
      %v625 = vshll.u32 %v493, 16
      %v627 = vrot.slane %v625, 5
      %v628 = vsel %vm516, %v623, %v627
      %s629 = scalar_lea.vmem %s1, 64
      %v630 = vld [vmem:[%s629] sm:$0xf]
      %v631 = vld [vmem:[%s629 + $0x4] sm:$0xf]
      %v632 = vld [vmem:[%s629 + $0x8] sm:$0xf]
      %v633 = vld [vmem:[%s629 + $0xc] sm:$0xf]
      %v634 = vld [vmem:[%s629 + $0x10] sm:$0xf]
      %v635 = vld [vmem:[%s629 + $0x14] sm:$0xf]
      %v636 = vld [vmem:[%s629 + $0x18] sm:$0xf]
      %v637 = vld [vmem:[%s629 + $0x1c] sm:$0xf]
      %v638 = vld [vmem:[%s629 + $0x20] sm:$0xf]
      %v639 = vld [vmem:[%s629 + $0x24] sm:$0xf]
      %v640 = vld [vmem:[%s629 + $0x28] sm:$0xf]
      %v641 = vld [vmem:[%s629 + $0x2c] sm:$0xf]
      %v642 = vld [vmem:[%s629 + $0x30] sm:$0xf]
      %v643 = vld [vmem:[%s629 + $0x34] sm:$0xf]
      %v644 = vld [vmem:[%s629 + $0x38] sm:$0xf]
      %v645 = vld [vmem:[%s629 + $0x3c] sm:$0xf]
      %v646 = vunpack.c.l.b16 %v530
      %v647 = vunpack.c.l.b16 %v544
      %v648 = vunpack.c.l.b16 %v558
      %v649 = vunpack.c.l.b16 %v572
      %v650 = vunpack.c.l.b16 %v586
      %v651 = vunpack.c.l.b16 %v600
      %v652 = vunpack.c.l.b16 %v614
      %v653 = vunpack.c.l.b16 %v628
      %v654 = vpack.c.b16 %v647, %v646
      %v655 = vpack.c.b16 %v649, %v648
      %v656 = vpack.c.b16 %v651, %v650
      %v657 = vpack.c.b16 %v653, %v652
      %v678 = vunpack.c.l.b16 %v630
      %v679 = vunpack.c.l.b16 %v631
      %v680 = vunpack.c.l.b16 %v632
      %v681 = vunpack.c.l.b16 %v633
      %v682 = vunpack.c.l.b16 %v634
      %v683 = vunpack.c.l.b16 %v635
      %v684 = vunpack.c.l.b16 %v636
      %v685 = vunpack.c.l.b16 %v637
      %v686 = vunpack.c.l.b16 %v638
      %v687 = vunpack.c.l.b16 %v639
      %v688 = vunpack.c.l.b16 %v640
      %v689 = vunpack.c.l.b16 %v641
      %v690 = vunpack.c.l.b16 %v642
      %v691 = vunpack.c.l.b16 %v643
      %v692 = vunpack.c.l.b16 %v644
      %v693 = vunpack.c.l.b16 %v645
      %v694 = vpack.c.b16 %v679, %v678
      %v695 = vpack.c.b16 %v681, %v680
      %v696 = vpack.c.b16 %v683, %v682
      %v697 = vpack.c.b16 %v685, %v684
      %v698 = vpack.c.b16 %v687, %v686
      %v699 = vpack.c.b16 %v689, %v688
      %v700 = vpack.c.b16 %v691, %v690
      %v701 = vpack.c.b16 %v693, %v692
      %710 = vmatprep.subr.bf16.mxu0 0
      %711 = vmatpush1.bf16.msra.mxu0 %v701
      %712 = vmatprep.subr.bf16.mxu0 0
      %713 = vmatpush1.bf16.msra.mxu0 %v700
      %714 = vmatprep.subr.bf16.mxu0 0
      %715 = vmatpush1.bf16.msra.mxu0 %v699
      %716 = vmatprep.subr.bf16.mxu0 0
      %717 = vmatpush1.bf16.msra.mxu0 %v698
      %718 = vmatprep.subr.bf16.mxu0 0
      %719 = vmatpush1.bf16.msra.mxu0 %v697
      %720 = vmatprep.subr.bf16.mxu0 0
      %721 = vmatpush1.bf16.msra.mxu0 %v696
      %722 = vmatprep.subr.bf16.mxu0 0
      %723 = vmatpush1.bf16.msra.mxu0 %v695
      %724 = vmatprep.subr.bf16.mxu0 0
      %725 = vmatpush1.bf16.msra.mxu0 %v694
      %726 = vmatprep.subr.bf16.mxu0 0
      %727 = vmatpush2.bf16.msra.mxu0 0
      %728 = vmatprep.subr.bf16.mxu0 0
      %729 = vmatpush2.bf16.msra.mxu0 0
      %730 = vmatprep.subr.bf16.mxu0 0
      %731 = vmatpush2.bf16.msra.mxu0 0
      %732 = vmatprep.subr.bf16.mxu0 0
      %733 = vmatpush2.bf16.msra.mxu0 0
      %734 = vmatprep.subr.bf16.mxu0 0
      %735 = vmatpush2.bf16.msra.mxu0 0
      %736 = vmatprep.subr.bf16.mxu0 0
      %737 = vmatpush2.bf16.msra.mxu0 0
      %738 = vmatprep.subr.bf16.mxu0 0
      %739 = vmatpush2.bf16.msra.mxu0 0
      %740 = vmatprep.subr.bf16.mxu0 0
      %741 = vmatpush2.bf16.msra.mxu0 0
      %742 = vmatprep.mubr.bf16.mxu0 0
      %743 = vmatmul.mubr.bf16.gmra.mxu0 %v654
      %v744 = vpop.f32.mrf.mxu0
      %v745 = vadd.f32 0.0, %v744
      %v746 = vpop.f32.mrf.mxu0
      %v747 = vpop.f32.mrf.mxu0
      %v748 = vadd.f32 0.0, %v747
      %v749 = vpop.f32.mrf.mxu0
      %750 = vmatprep.mubr.bf16.mxu0 0
      %751 = vmatmul.mubr.bf16.gmra.mxu0 %v655
      %v752 = vpop.f32.mrf.mxu0
      %v753 = vadd.f32 0.0, %v752
      %v754 = vpop.f32.mrf.mxu0
      %v755 = vpop.f32.mrf.mxu0
      %v756 = vadd.f32 0.0, %v755
      %v757 = vpop.f32.mrf.mxu0
      %758 = vmatprep.mubr.bf16.mxu0 0
      %759 = vmatmul.mubr.bf16.gmra.mxu0 %v656
      %v760 = vpop.f32.mrf.mxu0
      %v761 = vadd.f32 0.0, %v760
      %v762 = vpop.f32.mrf.mxu0
      %v763 = vpop.f32.mrf.mxu0
      %v764 = vadd.f32 0.0, %v763
      %v765 = vpop.f32.mrf.mxu0
      %766 = vmatprep.mubr.bf16.mxu0 0
      %767 = vmatmul.mubr.bf16.gmra.mxu0 %v657
      %v768 = vpop.f32.mrf.mxu0
      %v769 = vadd.f32 0.0, %v768
      %v770 = vpop.f32.mrf.mxu0
      %v771 = vpop.f32.mrf.mxu0
      %v772 = vadd.f32 0.0, %v771
      %v773 = vpop.f32.mrf.mxu0
      %774 = vdwg.mxu0
      %v783 = vunpack.c.l.b16 %v478
      %v784 = vunpack.c.l.b16 %v480
      %v785 = vunpack.c.l.b16 %v482
      %v786 = vunpack.c.l.b16 %v484
      %v787 = vunpack.c.l.b16 %v486
      %v788 = vunpack.c.l.b16 %v488
      %v789 = vunpack.c.l.b16 %v490
      %v790 = vunpack.c.l.b16 %v492
      %v791 = vpack.c.b16 %v784, %v783
      %v792 = vpack.c.b16 %v786, %v785
      %v793 = vpack.c.b16 %v788, %v787
      %v794 = vpack.c.b16 %v790, %v789
      %v815 = vunpack.c.l.b16 %v498
      %v816 = vunpack.c.l.b16 %v499
      %v817 = vunpack.c.l.b16 %v500
      %v818 = vunpack.c.l.b16 %v501
      %v819 = vunpack.c.l.b16 %v502
      %v820 = vunpack.c.l.b16 %v503
      %v821 = vunpack.c.l.b16 %v504
      %v822 = vunpack.c.l.b16 %v505
      %v823 = vunpack.c.l.b16 %v506
      %v824 = vunpack.c.l.b16 %v507
      %v825 = vunpack.c.l.b16 %v508
      %v826 = vunpack.c.l.b16 %v509
      %v827 = vunpack.c.l.b16 %v510
      %v828 = vunpack.c.l.b16 %v511
      %v829 = vunpack.c.l.b16 %v512
      %v830 = vunpack.c.l.b16 %v513
      %v831 = vpack.c.b16 %v816, %v815
      %v832 = vpack.c.b16 %v818, %v817
      %v833 = vpack.c.b16 %v820, %v819
      %v834 = vpack.c.b16 %v822, %v821
      %v835 = vpack.c.b16 %v824, %v823
      %v836 = vpack.c.b16 %v826, %v825
      %v837 = vpack.c.b16 %v828, %v827
      %v838 = vpack.c.b16 %v830, %v829
      %847 = vmatprep.subr.bf16.mxu0 0
      %848 = vmatpush1.bf16.msra.mxu0 %v838
      %849 = vmatprep.subr.bf16.mxu0 0
      %850 = vmatpush1.bf16.msra.mxu0 %v837
      %851 = vmatprep.subr.bf16.mxu0 0
      %852 = vmatpush1.bf16.msra.mxu0 %v836
      %853 = vmatprep.subr.bf16.mxu0 0
      %854 = vmatpush1.bf16.msra.mxu0 %v835
      %855 = vmatprep.subr.bf16.mxu0 0
      %856 = vmatpush1.bf16.msra.mxu0 %v834
      %857 = vmatprep.subr.bf16.mxu0 0
      %858 = vmatpush1.bf16.msra.mxu0 %v833
      %859 = vmatprep.subr.bf16.mxu0 0
      %860 = vmatpush1.bf16.msra.mxu0 %v832
      %861 = vmatprep.subr.bf16.mxu0 0
      %862 = vmatpush1.bf16.msra.mxu0 %v831
      %863 = vmatprep.subr.bf16.mxu0 0
      %864 = vmatpush2.bf16.msra.mxu0 0
      %865 = vmatprep.subr.bf16.mxu0 0
      %866 = vmatpush2.bf16.msra.mxu0 0
      %867 = vmatprep.subr.bf16.mxu0 0
      %868 = vmatpush2.bf16.msra.mxu0 0
      %869 = vmatprep.subr.bf16.mxu0 0
      %870 = vmatpush2.bf16.msra.mxu0 0
      %871 = vmatprep.subr.bf16.mxu0 0
      %872 = vmatpush2.bf16.msra.mxu0 0
      %873 = vmatprep.subr.bf16.mxu0 0
      %874 = vmatpush2.bf16.msra.mxu0 0
      %875 = vmatprep.subr.bf16.mxu0 0
      %876 = vmatpush2.bf16.msra.mxu0 0
      %877 = vmatprep.subr.bf16.mxu0 0
      %878 = vmatpush2.bf16.msra.mxu0 0
      %879 = vmatprep.mubr.bf16.mxu0 0
      %880 = vmatmul.mubr.bf16.gmra.mxu0 %v791
      %v881 = vpop.f32.mrf.mxu0
      %v882 = vadd.f32 %v745, %v881
      %v883 = vpop.f32.mrf.mxu0
      %v884 = vpop.f32.mrf.mxu0
      %v885 = vadd.f32 %v748, %v884
      %v886 = vpop.f32.mrf.mxu0
      %887 = vmatprep.mubr.bf16.mxu0 0
      %888 = vmatmul.mubr.bf16.gmra.mxu0 %v792
      %v889 = vpop.f32.mrf.mxu0
      %v890 = vadd.f32 %v753, %v889
      %v891 = vpop.f32.mrf.mxu0
      %v892 = vpop.f32.mrf.mxu0
      %v893 = vadd.f32 %v756, %v892
      %v894 = vpop.f32.mrf.mxu0
      %895 = vmatprep.mubr.bf16.mxu0 0
      %896 = vmatmul.mubr.bf16.gmra.mxu0 %v793
      %v897 = vpop.f32.mrf.mxu0
      %v898 = vadd.f32 %v761, %v897
      %v899 = vpop.f32.mrf.mxu0
      %v900 = vpop.f32.mrf.mxu0
      %v901 = vadd.f32 %v764, %v900
      %v902 = vpop.f32.mrf.mxu0
      %903 = vmatprep.mubr.bf16.mxu0 0
      %904 = vmatmul.mubr.bf16.gmra.mxu0 %v794
      %v905 = vpop.f32.mrf.mxu0
      %v906 = vadd.f32 %v769, %v905
      %v907 = vpop.f32.mrf.mxu0
      %v908 = vpop.f32.mrf.mxu0
      %v909 = vadd.f32 %v772, %v908
      %v910 = vpop.f32.mrf.mxu0
      %911 = vdwg.mxu0
      %vm920 = vcmask 1042432
      %vm921 = vcmask 1046532
      %vm922 = vmor %vm920, %vm921
      %v923 = vrot.slane %v478, 5
      %v924 = vrot.slane %v923, 4
      %v925 = vrot.slane %v479, 5
      %v926 = vsel %vm922, %v924, %v925
      %v927 = vrot.slane %v480, 5
      %v928 = vrot.slane %v927, 4
      %v929 = vrot.slane %v481, 5
      %v930 = vsel %vm922, %v928, %v929
      %v931 = vrot.slane %v482, 5
      %v932 = vrot.slane %v931, 4
      %v933 = vrot.slane %v483, 5
      %v934 = vsel %vm922, %v932, %v933
      %v935 = vrot.slane %v484, 5
      %v936 = vrot.slane %v935, 4
      %v937 = vrot.slane %v485, 5
      %v938 = vsel %vm922, %v936, %v937
      %v939 = vrot.slane %v486, 5
      %v940 = vrot.slane %v939, 4
      %v941 = vrot.slane %v487, 5
      %v942 = vsel %vm922, %v940, %v941
      %v943 = vrot.slane %v488, 5
      %v944 = vrot.slane %v943, 4
      %v945 = vrot.slane %v489, 5
      %v946 = vsel %vm922, %v944, %v945
      %v947 = vrot.slane %v490, 5
      %v948 = vrot.slane %v947, 4
      %v949 = vrot.slane %v491, 5
      %v950 = vsel %vm922, %v948, %v949
      %v951 = vrot.slane %v492, 5
      %v952 = vrot.slane %v951, 4
      %v953 = vrot.slane %v493, 5
      %v954 = vsel %vm922, %v952, %v953
      %s955 = scalar_lea.vmem %s1, 128
      %v956 = vld [vmem:[%s955] sm:$0xf]
      %v957 = vld [vmem:[%s955 + $0x4] sm:$0xf]
      %v958 = vld [vmem:[%s955 + $0x8] sm:$0xf]
      %v959 = vld [vmem:[%s955 + $0xc] sm:$0xf]
      %v960 = vld [vmem:[%s955 + $0x10] sm:$0xf]
      %v961 = vld [vmem:[%s955 + $0x14] sm:$0xf]
      %v962 = vld [vmem:[%s955 + $0x18] sm:$0xf]
      %v963 = vld [vmem:[%s955 + $0x1c] sm:$0xf]
      %v964 = vld [vmem:[%s955 + $0x20] sm:$0xf]
      %v965 = vld [vmem:[%s955 + $0x24] sm:$0xf]
      %v966 = vld [vmem:[%s955 + $0x28] sm:$0xf]
      %v967 = vld [vmem:[%s955 + $0x2c] sm:$0xf]
      %v968 = vld [vmem:[%s955 + $0x30] sm:$0xf]
      %v969 = vld [vmem:[%s955 + $0x34] sm:$0xf]
      %v970 = vld [vmem:[%s955 + $0x38] sm:$0xf]
      %v971 = vld [vmem:[%s955 + $0x3c] sm:$0xf]
      %v972 = vunpack.c.l.b16 %v926
      %v973 = vunpack.c.l.b16 %v930
      %v974 = vunpack.c.l.b16 %v934
      %v975 = vunpack.c.l.b16 %v938
      %v976 = vunpack.c.l.b16 %v942
      %v977 = vunpack.c.l.b16 %v946
      %v978 = vunpack.c.l.b16 %v950
      %v979 = vunpack.c.l.b16 %v954
      %v980 = vpack.c.b16 %v973, %v972
      %v981 = vpack.c.b16 %v975, %v974
      %v982 = vpack.c.b16 %v977, %v976
      %v983 = vpack.c.b16 %v979, %v978
      %v1004 = vunpack.c.l.b16 %v956
      %v1005 = vunpack.c.l.b16 %v957
      %v1006 = vunpack.c.l.b16 %v958
      %v1007 = vunpack.c.l.b16 %v959
      %v1008 = vunpack.c.l.b16 %v960
      %v1009 = vunpack.c.l.b16 %v961
      %v1010 = vunpack.c.l.b16 %v962
      %v1011 = vunpack.c.l.b16 %v963
      %v1012 = vunpack.c.l.b16 %v964
      %v1013 = vunpack.c.l.b16 %v965
      %v1014 = vunpack.c.l.b16 %v966
      %v1015 = vunpack.c.l.b16 %v967
      %v1016 = vunpack.c.l.b16 %v968
      %v1017 = vunpack.c.l.b16 %v969
      %v1018 = vunpack.c.l.b16 %v970
      %v1019 = vunpack.c.l.b16 %v971
      %v1020 = vpack.c.b16 %v1005, %v1004
      %v1021 = vpack.c.b16 %v1007, %v1006
      %v1022 = vpack.c.b16 %v1009, %v1008
      %v1023 = vpack.c.b16 %v1011, %v1010
      %v1024 = vpack.c.b16 %v1013, %v1012
      %v1025 = vpack.c.b16 %v1015, %v1014
      %v1026 = vpack.c.b16 %v1017, %v1016
      %v1027 = vpack.c.b16 %v1019, %v1018
      %1036 = vmatprep.subr.bf16.mxu0 0
      %1037 = vmatpush1.bf16.msra.mxu0 %v1027
      %1038 = vmatprep.subr.bf16.mxu0 0
      %1039 = vmatpush1.bf16.msra.mxu0 %v1026
      %1040 = vmatprep.subr.bf16.mxu0 0
      %1041 = vmatpush1.bf16.msra.mxu0 %v1025
      %1042 = vmatprep.subr.bf16.mxu0 0
      %1043 = vmatpush1.bf16.msra.mxu0 %v1024
      %1044 = vmatprep.subr.bf16.mxu0 0
      %1045 = vmatpush1.bf16.msra.mxu0 %v1023
      %1046 = vmatprep.subr.bf16.mxu0 0
      %1047 = vmatpush1.bf16.msra.mxu0 %v1022
      %1048 = vmatprep.subr.bf16.mxu0 0
      %1049 = vmatpush1.bf16.msra.mxu0 %v1021
      %1050 = vmatprep.subr.bf16.mxu0 0
      %1051 = vmatpush1.bf16.msra.mxu0 %v1020
      %1052 = vmatprep.subr.bf16.mxu0 0
      %1053 = vmatpush2.bf16.msra.mxu0 0
      %1054 = vmatprep.subr.bf16.mxu0 0
      %1055 = vmatpush2.bf16.msra.mxu0 0
      %1056 = vmatprep.subr.bf16.mxu0 0
      %1057 = vmatpush2.bf16.msra.mxu0 0
      %1058 = vmatprep.subr.bf16.mxu0 0
      %1059 = vmatpush2.bf16.msra.mxu0 0
      %1060 = vmatprep.subr.bf16.mxu0 0
      %1061 = vmatpush2.bf16.msra.mxu0 0
      %1062 = vmatprep.subr.bf16.mxu0 0
      %1063 = vmatpush2.bf16.msra.mxu0 0
      %1064 = vmatprep.subr.bf16.mxu0 0
      %1065 = vmatpush2.bf16.msra.mxu0 0
      %1066 = vmatprep.subr.bf16.mxu0 0
      %1067 = vmatpush2.bf16.msra.mxu0 0
      %1068 = vmatprep.mubr.bf16.mxu0 0
      %1069 = vmatmul.mubr.bf16.gmra.mxu0 %v980
      %v1070 = vpop.f32.mrf.mxu0
      %v1071 = vadd.f32 0.0, %v1070
      %v1072 = vpop.f32.mrf.mxu0
      %v1073 = vpop.f32.mrf.mxu0
      %v1074 = vadd.f32 0.0, %v1073
      %v1075 = vpop.f32.mrf.mxu0
      %1076 = vmatprep.mubr.bf16.mxu0 0
      %1077 = vmatmul.mubr.bf16.gmra.mxu0 %v981
      %v1078 = vpop.f32.mrf.mxu0
      %v1079 = vadd.f32 0.0, %v1078
      %v1080 = vpop.f32.mrf.mxu0
      %v1081 = vpop.f32.mrf.mxu0
      %v1082 = vadd.f32 0.0, %v1081
      %v1083 = vpop.f32.mrf.mxu0
      %1084 = vmatprep.mubr.bf16.mxu0 0
      %1085 = vmatmul.mubr.bf16.gmra.mxu0 %v982
      %v1086 = vpop.f32.mrf.mxu0
      %v1087 = vadd.f32 0.0, %v1086
      %v1088 = vpop.f32.mrf.mxu0
      %v1089 = vpop.f32.mrf.mxu0
      %v1090 = vadd.f32 0.0, %v1089
      %v1091 = vpop.f32.mrf.mxu0
      %1092 = vmatprep.mubr.bf16.mxu0 0
      %1093 = vmatmul.mubr.bf16.gmra.mxu0 %v983
      %v1094 = vpop.f32.mrf.mxu0
      %v1095 = vadd.f32 0.0, %v1094
      %v1096 = vpop.f32.mrf.mxu0
      %v1097 = vpop.f32.mrf.mxu0
      %v1098 = vadd.f32 0.0, %v1097
      %v1099 = vpop.f32.mrf.mxu0
      %1100 = vdwg.mxu0
      %v1101 = vadd.f32 %v882, %v1071
      %v1102 = vadd.f32 %v885, %v1074
      %v1103 = vadd.f32 %v890, %v1079
      %v1104 = vadd.f32 %v893, %v1082
      %v1105 = vadd.f32 %v898, %v1087
      %v1106 = vadd.f32 %v901, %v1090
      %v1107 = vadd.f32 %v906, %v1095
      %v1108 = vadd.f32 %v909, %v1098
      %s1109 = scalar_lea.vmem %s1, 192
      %v1110 = vld [vmem:[%s1109] sm:$0xf]
      %v1111 = vld [vmem:[%s1109 + $0x4] sm:$0xf]
      %v1112 = vld [vmem:[%s1109 + $0x8] sm:$0xf]
      %v1113 = vld [vmem:[%s1109 + $0xc] sm:$0xf]
      %v1114 = vld [vmem:[%s1109 + $0x10] sm:$0xf]
      %v1115 = vld [vmem:[%s1109 + $0x14] sm:$0xf]
      %v1116 = vld [vmem:[%s1109 + $0x18] sm:$0xf]
      %v1117 = vld [vmem:[%s1109 + $0x1c] sm:$0xf]
      %v1118 = vld [vmem:[%s1109 + $0x20] sm:$0xf]
      %v1119 = vld [vmem:[%s1109 + $0x24] sm:$0xf]
      %v1120 = vld [vmem:[%s1109 + $0x28] sm:$0xf]
      %v1121 = vld [vmem:[%s1109 + $0x2c] sm:$0xf]
      %v1122 = vld [vmem:[%s1109 + $0x30] sm:$0xf]
      %v1123 = vld [vmem:[%s1109 + $0x34] sm:$0xf]
      %v1124 = vld [vmem:[%s1109 + $0x38] sm:$0xf]
      %v1125 = vld [vmem:[%s1109 + $0x3c] sm:$0xf]
      %v1127 = vunpack.c.l.b16 %v494
      %v1128 = vpack.c.b16 %v785, %v784
      %v1129 = vpack.c.b16 %v787, %v786
      %v1130 = vpack.c.b16 %v789, %v788
      %v1131 = vpack.c.b16 %v1127, %v790
      %v1152 = vunpack.c.l.b16 %v1110
      %v1153 = vunpack.c.l.b16 %v1111
      %v1154 = vunpack.c.l.b16 %v1112
      %v1155 = vunpack.c.l.b16 %v1113
      %v1156 = vunpack.c.l.b16 %v1114
      %v1157 = vunpack.c.l.b16 %v1115
      %v1158 = vunpack.c.l.b16 %v1116
      %v1159 = vunpack.c.l.b16 %v1117
      %v1160 = vunpack.c.l.b16 %v1118
      %v1161 = vunpack.c.l.b16 %v1119
      %v1162 = vunpack.c.l.b16 %v1120
      %v1163 = vunpack.c.l.b16 %v1121
      %v1164 = vunpack.c.l.b16 %v1122
      %v1165 = vunpack.c.l.b16 %v1123
      %v1166 = vunpack.c.l.b16 %v1124
      %v1167 = vunpack.c.l.b16 %v1125
      %v1168 = vpack.c.b16 %v1153, %v1152
      %v1169 = vpack.c.b16 %v1155, %v1154
      %v1170 = vpack.c.b16 %v1157, %v1156
      %v1171 = vpack.c.b16 %v1159, %v1158
      %v1172 = vpack.c.b16 %v1161, %v1160
      %v1173 = vpack.c.b16 %v1163, %v1162
      %v1174 = vpack.c.b16 %v1165, %v1164
      %v1175 = vpack.c.b16 %v1167, %v1166
      %1184 = vmatprep.subr.bf16.mxu0 0
      %1185 = vmatpush1.bf16.msra.mxu0 %v1175
      %1186 = vmatprep.subr.bf16.mxu0 0
      %1187 = vmatpush1.bf16.msra.mxu0 %v1174
      %1188 = vmatprep.subr.bf16.mxu0 0
      %1189 = vmatpush1.bf16.msra.mxu0 %v1173
      %1190 = vmatprep.subr.bf16.mxu0 0
      %1191 = vmatpush1.bf16.msra.mxu0 %v1172
      %1192 = vmatprep.subr.bf16.mxu0 0
      %1193 = vmatpush1.bf16.msra.mxu0 %v1171
      %1194 = vmatprep.subr.bf16.mxu0 0
      %1195 = vmatpush1.bf16.msra.mxu0 %v1170
      %1196 = vmatprep.subr.bf16.mxu0 0
      %1197 = vmatpush1.bf16.msra.mxu0 %v1169
      %1198 = vmatprep.subr.bf16.mxu0 0
      %1199 = vmatpush1.bf16.msra.mxu0 %v1168
      %1200 = vmatprep.subr.bf16.mxu0 0
      %1201 = vmatpush2.bf16.msra.mxu0 0
      %1202 = vmatprep.subr.bf16.mxu0 0
      %1203 = vmatpush2.bf16.msra.mxu0 0
      %1204 = vmatprep.subr.bf16.mxu0 0
      %1205 = vmatpush2.bf16.msra.mxu0 0
      %1206 = vmatprep.subr.bf16.mxu0 0
      %1207 = vmatpush2.bf16.msra.mxu0 0
      %1208 = vmatprep.subr.bf16.mxu0 0
      %1209 = vmatpush2.bf16.msra.mxu0 0
      %1210 = vmatprep.subr.bf16.mxu0 0
      %1211 = vmatpush2.bf16.msra.mxu0 0
      %1212 = vmatprep.subr.bf16.mxu0 0
      %1213 = vmatpush2.bf16.msra.mxu0 0
      %1214 = vmatprep.subr.bf16.mxu0 0
      %1215 = vmatpush2.bf16.msra.mxu0 0
      %1216 = vmatprep.mubr.bf16.mxu0 0
      %1217 = vmatmul.mubr.bf16.gmra.mxu0 %v1128
      %v1218 = vpop.f32.mrf.mxu0
      %v1219 = vadd.f32 0.0, %v1218
      %v1220 = vpop.f32.mrf.mxu0
      %v1221 = vpop.f32.mrf.mxu0
      %v1222 = vadd.f32 0.0, %v1221
      %v1223 = vpop.f32.mrf.mxu0
      %1224 = vmatprep.mubr.bf16.mxu0 0
      %1225 = vmatmul.mubr.bf16.gmra.mxu0 %v1129
      %v1226 = vpop.f32.mrf.mxu0
      %v1227 = vadd.f32 0.0, %v1226
      %v1228 = vpop.f32.mrf.mxu0
      %v1229 = vpop.f32.mrf.mxu0
      %v1230 = vadd.f32 0.0, %v1229
      %v1231 = vpop.f32.mrf.mxu0
      %1232 = vmatprep.mubr.bf16.mxu0 0
      %1233 = vmatmul.mubr.bf16.gmra.mxu0 %v1130
      %v1234 = vpop.f32.mrf.mxu0
      %v1235 = vadd.f32 0.0, %v1234
      %v1236 = vpop.f32.mrf.mxu0
      %v1237 = vpop.f32.mrf.mxu0
      %v1238 = vadd.f32 0.0, %v1237
      %v1239 = vpop.f32.mrf.mxu0
      %1240 = vmatprep.mubr.bf16.mxu0 0
      %1241 = vmatmul.mubr.bf16.gmra.mxu0 %v1131
      %v1242 = vpop.f32.mrf.mxu0
      %v1243 = vadd.f32 0.0, %v1242
      %v1244 = vpop.f32.mrf.mxu0
      %v1245 = vpop.f32.mrf.mxu0
      %v1246 = vadd.f32 0.0, %v1245
      %v1247 = vpop.f32.mrf.mxu0
      %1248 = vdwg.mxu0
      %v1249 = vadd.f32 %v1101, %v1219
      %v1250 = vadd.f32 %v1102, %v1222
      %v1251 = vadd.f32 %v1103, %v1227
      %v1252 = vadd.f32 %v1104, %v1230
      %v1253 = vadd.f32 %v1105, %v1235
      %v1254 = vadd.f32 %v1106, %v1238
      %v1255 = vadd.f32 %v1107, %v1243
      %v1256 = vadd.f32 %v1108, %v1246
      %v1258 = vshrl.u32 %v494, 16
      %v1260 = vrot.slane %v1258, 4
      %v1261 = vshll.u32 %v494, 16
      %v1263 = vrot.slane %v1261, 5
      %v1264 = vor.u32 %v1260, %v1263
      %v1265 = vrot.slane %v1264, 4
      %v1267 = vshll.u32 %v495, 16
      %v1269 = vrot.slane %v1267, 5
      %v1270 = vsel %vm516, %v1265, %v1269
      %s1271 = scalar_lea.vmem %s1, 256
      %v1272 = vld [vmem:[%s1271] sm:$0xf]
      %v1273 = vld [vmem:[%s1271 + $0x4] sm:$0xf]
      %v1274 = vld [vmem:[%s1271 + $0x8] sm:$0xf]
      %v1275 = vld [vmem:[%s1271 + $0xc] sm:$0xf]
      %v1276 = vld [vmem:[%s1271 + $0x10] sm:$0xf]
      %v1277 = vld [vmem:[%s1271 + $0x14] sm:$0xf]
      %v1278 = vld [vmem:[%s1271 + $0x18] sm:$0xf]
      %v1279 = vld [vmem:[%s1271 + $0x1c] sm:$0xf]
      %v1280 = vld [vmem:[%s1271 + $0x20] sm:$0xf]
      %v1281 = vld [vmem:[%s1271 + $0x24] sm:$0xf]
      %v1282 = vld [vmem:[%s1271 + $0x28] sm:$0xf]
      %v1283 = vld [vmem:[%s1271 + $0x2c] sm:$0xf]
      %v1284 = vld [vmem:[%s1271 + $0x30] sm:$0xf]
      %v1285 = vld [vmem:[%s1271 + $0x34] sm:$0xf]
      %v1286 = vld [vmem:[%s1271 + $0x38] sm:$0xf]
      %v1287 = vld [vmem:[%s1271 + $0x3c] sm:$0xf]
      %v1288 = vunpack.c.l.b16 %v1270
      %v1289 = vpack.c.b16 %v648, %v647
      %v1290 = vpack.c.b16 %v650, %v649
      %v1291 = vpack.c.b16 %v652, %v651
      %v1292 = vpack.c.b16 %v1288, %v653
      %v1313 = vunpack.c.l.b16 %v1272
      %v1314 = vunpack.c.l.b16 %v1273
      %v1315 = vunpack.c.l.b16 %v1274
      %v1316 = vunpack.c.l.b16 %v1275
      %v1317 = vunpack.c.l.b16 %v1276
      %v1318 = vunpack.c.l.b16 %v1277
      %v1319 = vunpack.c.l.b16 %v1278
      %v1320 = vunpack.c.l.b16 %v1279
      %v1321 = vunpack.c.l.b16 %v1280
      %v1322 = vunpack.c.l.b16 %v1281
      %v1323 = vunpack.c.l.b16 %v1282
      %v1324 = vunpack.c.l.b16 %v1283
      %v1325 = vunpack.c.l.b16 %v1284
      %v1326 = vunpack.c.l.b16 %v1285
      %v1327 = vunpack.c.l.b16 %v1286
      %v1328 = vunpack.c.l.b16 %v1287
      %v1329 = vpack.c.b16 %v1314, %v1313
      %v1330 = vpack.c.b16 %v1316, %v1315
      %v1331 = vpack.c.b16 %v1318, %v1317
      %v1332 = vpack.c.b16 %v1320, %v1319
      %v1333 = vpack.c.b16 %v1322, %v1321
      %v1334 = vpack.c.b16 %v1324, %v1323
      %v1335 = vpack.c.b16 %v1326, %v1325
      %v1336 = vpack.c.b16 %v1328, %v1327
      %1345 = vmatprep.subr.bf16.mxu0 0
      %1346 = vmatpush1.bf16.msra.mxu0 %v1336
      %1347 = vmatprep.subr.bf16.mxu0 0
      %1348 = vmatpush1.bf16.msra.mxu0 %v1335
      %1349 = vmatprep.subr.bf16.mxu0 0
      %1350 = vmatpush1.bf16.msra.mxu0 %v1334
      %1351 = vmatprep.subr.bf16.mxu0 0
      %1352 = vmatpush1.bf16.msra.mxu0 %v1333
      %1353 = vmatprep.subr.bf16.mxu0 0
      %1354 = vmatpush1.bf16.msra.mxu0 %v1332
      %1355 = vmatprep.subr.bf16.mxu0 0
      %1356 = vmatpush1.bf16.msra.mxu0 %v1331
      %1357 = vmatprep.subr.bf16.mxu0 0
      %1358 = vmatpush1.bf16.msra.mxu0 %v1330
      %1359 = vmatprep.subr.bf16.mxu0 0
      %1360 = vmatpush1.bf16.msra.mxu0 %v1329
      %1361 = vmatprep.subr.bf16.mxu0 0
      %1362 = vmatpush2.bf16.msra.mxu0 0
      %1363 = vmatprep.subr.bf16.mxu0 0
      %1364 = vmatpush2.bf16.msra.mxu0 0
      %1365 = vmatprep.subr.bf16.mxu0 0
      %1366 = vmatpush2.bf16.msra.mxu0 0
      %1367 = vmatprep.subr.bf16.mxu0 0
      %1368 = vmatpush2.bf16.msra.mxu0 0
      %1369 = vmatprep.subr.bf16.mxu0 0
      %1370 = vmatpush2.bf16.msra.mxu0 0
      %1371 = vmatprep.subr.bf16.mxu0 0
      %1372 = vmatpush2.bf16.msra.mxu0 0
      %1373 = vmatprep.subr.bf16.mxu0 0
      %1374 = vmatpush2.bf16.msra.mxu0 0
      %1375 = vmatprep.subr.bf16.mxu0 0
      %1376 = vmatpush2.bf16.msra.mxu0 0
      %1377 = vmatprep.mubr.bf16.mxu0 0
      %1378 = vmatmul.mubr.bf16.gmra.mxu0 %v1289
      %v1379 = vpop.f32.mrf.mxu0
      %v1380 = vadd.f32 0.0, %v1379
      %v1381 = vpop.f32.mrf.mxu0
      %v1382 = vpop.f32.mrf.mxu0
      %v1383 = vadd.f32 0.0, %v1382
      %v1384 = vpop.f32.mrf.mxu0
      %1385 = vmatprep.mubr.bf16.mxu0 0
      %1386 = vmatmul.mubr.bf16.gmra.mxu0 %v1290
      %v1387 = vpop.f32.mrf.mxu0
      %v1388 = vadd.f32 0.0, %v1387
      %v1389 = vpop.f32.mrf.mxu0
      %v1390 = vpop.f32.mrf.mxu0
      %v1391 = vadd.f32 0.0, %v1390
      %v1392 = vpop.f32.mrf.mxu0
      %1393 = vmatprep.mubr.bf16.mxu0 0
      %1394 = vmatmul.mubr.bf16.gmra.mxu0 %v1291
      %v1395 = vpop.f32.mrf.mxu0
      %v1396 = vadd.f32 0.0, %v1395
      %v1397 = vpop.f32.mrf.mxu0
      %v1398 = vpop.f32.mrf.mxu0
      %v1399 = vadd.f32 0.0, %v1398
      %v1400 = vpop.f32.mrf.mxu0
      %1401 = vmatprep.mubr.bf16.mxu0 0
      %1402 = vmatmul.mubr.bf16.gmra.mxu0 %v1292
      %v1403 = vpop.f32.mrf.mxu0
      %v1404 = vadd.f32 0.0, %v1403
      %v1405 = vpop.f32.mrf.mxu0
      %v1406 = vpop.f32.mrf.mxu0
      %v1407 = vadd.f32 0.0, %v1406
      %v1408 = vpop.f32.mrf.mxu0
      %1409 = vdwg.mxu0
      %v1410 = vadd.f32 %v1249, %v1380
      %v1411 = vadd.f32 %v1250, %v1383
      %v1412 = vadd.f32 %v1251, %v1388
      %v1413 = vadd.f32 %v1252, %v1391
      %v1414 = vadd.f32 %v1253, %v1396
      %v1415 = vadd.f32 %v1254, %v1399
      %v1416 = vadd.f32 %v1255, %v1404
      %v1417 = vadd.f32 %v1256, %v1407
      %v1419 = vrot.slane %v494, 5
      %v1420 = vrot.slane %v1419, 4
      %v1421 = vrot.slane %v495, 5
      %v1422 = vsel %vm922, %v1420, %v1421
      %s1423 = scalar_lea.vmem %s1, 320
      %v1424 = vld [vmem:[%s1423] sm:$0xf]
      %v1425 = vld [vmem:[%s1423 + $0x4] sm:$0xf]
      %v1426 = vld [vmem:[%s1423 + $0x8] sm:$0xf]
      %v1427 = vld [vmem:[%s1423 + $0xc] sm:$0xf]
      %v1428 = vld [vmem:[%s1423 + $0x10] sm:$0xf]
      %v1429 = vld [vmem:[%s1423 + $0x14] sm:$0xf]
      %v1430 = vld [vmem:[%s1423 + $0x18] sm:$0xf]
      %v1431 = vld [vmem:[%s1423 + $0x1c] sm:$0xf]
      %v1432 = vld [vmem:[%s1423 + $0x20] sm:$0xf]
      %v1433 = vld [vmem:[%s1423 + $0x24] sm:$0xf]
      %v1434 = vld [vmem:[%s1423 + $0x28] sm:$0xf]
      %v1435 = vld [vmem:[%s1423 + $0x2c] sm:$0xf]
      %v1436 = vld [vmem:[%s1423 + $0x30] sm:$0xf]
      %v1437 = vld [vmem:[%s1423 + $0x34] sm:$0xf]
      %v1438 = vld [vmem:[%s1423 + $0x38] sm:$0xf]
      %v1439 = vld [vmem:[%s1423 + $0x3c] sm:$0xf]
      %v1440 = vunpack.c.l.b16 %v1422
      %v1441 = vpack.c.b16 %v974, %v973
      %v1442 = vpack.c.b16 %v976, %v975
      %v1443 = vpack.c.b16 %v978, %v977
      %v1444 = vpack.c.b16 %v1440, %v979
      %v1465 = vunpack.c.l.b16 %v1424
      %v1466 = vunpack.c.l.b16 %v1425
      %v1467 = vunpack.c.l.b16 %v1426
      %v1468 = vunpack.c.l.b16 %v1427
      %v1469 = vunpack.c.l.b16 %v1428
      %v1470 = vunpack.c.l.b16 %v1429
      %v1471 = vunpack.c.l.b16 %v1430
      %v1472 = vunpack.c.l.b16 %v1431
      %v1473 = vunpack.c.l.b16 %v1432
      %v1474 = vunpack.c.l.b16 %v1433
      %v1475 = vunpack.c.l.b16 %v1434
      %v1476 = vunpack.c.l.b16 %v1435
      %v1477 = vunpack.c.l.b16 %v1436
      %v1478 = vunpack.c.l.b16 %v1437
      %v1479 = vunpack.c.l.b16 %v1438
      %v1480 = vunpack.c.l.b16 %v1439
      %v1481 = vpack.c.b16 %v1466, %v1465
      %v1482 = vpack.c.b16 %v1468, %v1467
      %v1483 = vpack.c.b16 %v1470, %v1469
      %v1484 = vpack.c.b16 %v1472, %v1471
      %v1485 = vpack.c.b16 %v1474, %v1473
      %v1486 = vpack.c.b16 %v1476, %v1475
      %v1487 = vpack.c.b16 %v1478, %v1477
      %v1488 = vpack.c.b16 %v1480, %v1479
      %1497 = vmatprep.subr.bf16.mxu0 0
      %1498 = vmatpush1.bf16.msra.mxu0 %v1488
      %1499 = vmatprep.subr.bf16.mxu0 0
      %1500 = vmatpush1.bf16.msra.mxu0 %v1487
      %1501 = vmatprep.subr.bf16.mxu0 0
      %1502 = vmatpush1.bf16.msra.mxu0 %v1486
      %1503 = vmatprep.subr.bf16.mxu0 0
      %1504 = vmatpush1.bf16.msra.mxu0 %v1485
      %1505 = vmatprep.subr.bf16.mxu0 0
      %1506 = vmatpush1.bf16.msra.mxu0 %v1484
      %1507 = vmatprep.subr.bf16.mxu0 0
      %1508 = vmatpush1.bf16.msra.mxu0 %v1483
      %1509 = vmatprep.subr.bf16.mxu0 0
      %1510 = vmatpush1.bf16.msra.mxu0 %v1482
      %1511 = vmatprep.subr.bf16.mxu0 0
      %1512 = vmatpush1.bf16.msra.mxu0 %v1481
      %1513 = vmatprep.subr.bf16.mxu0 0
      %1514 = vmatpush2.bf16.msra.mxu0 0
      %1515 = vmatprep.subr.bf16.mxu0 0
      %1516 = vmatpush2.bf16.msra.mxu0 0
      %1517 = vmatprep.subr.bf16.mxu0 0
      %1518 = vmatpush2.bf16.msra.mxu0 0
      %1519 = vmatprep.subr.bf16.mxu0 0
      %1520 = vmatpush2.bf16.msra.mxu0 0
      %1521 = vmatprep.subr.bf16.mxu0 0
      %1522 = vmatpush2.bf16.msra.mxu0 0
      %1523 = vmatprep.subr.bf16.mxu0 0
      %1524 = vmatpush2.bf16.msra.mxu0 0
      %1525 = vmatprep.subr.bf16.mxu0 0
      %1526 = vmatpush2.bf16.msra.mxu0 0
      %1527 = vmatprep.subr.bf16.mxu0 0
      %1528 = vmatpush2.bf16.msra.mxu0 0
      %1529 = vmatprep.mubr.bf16.mxu0 0
      %1530 = vmatmul.mubr.bf16.gmra.mxu0 %v1441
      %v1531 = vpop.f32.mrf.mxu0
      %v1532 = vadd.f32 0.0, %v1531
      %v1533 = vpop.f32.mrf.mxu0
      %v1534 = vpop.f32.mrf.mxu0
      %v1535 = vadd.f32 0.0, %v1534
      %v1536 = vpop.f32.mrf.mxu0
      %1537 = vmatprep.mubr.bf16.mxu0 0
      %1538 = vmatmul.mubr.bf16.gmra.mxu0 %v1442
      %v1539 = vpop.f32.mrf.mxu0
      %v1540 = vadd.f32 0.0, %v1539
      %v1541 = vpop.f32.mrf.mxu0
      %v1542 = vpop.f32.mrf.mxu0
      %v1543 = vadd.f32 0.0, %v1542
      %v1544 = vpop.f32.mrf.mxu0
      %1545 = vmatprep.mubr.bf16.mxu0 0
      %1546 = vmatmul.mubr.bf16.gmra.mxu0 %v1443
      %v1547 = vpop.f32.mrf.mxu0
      %v1548 = vadd.f32 0.0, %v1547
      %v1549 = vpop.f32.mrf.mxu0
      %v1550 = vpop.f32.mrf.mxu0
      %v1551 = vadd.f32 0.0, %v1550
      %v1552 = vpop.f32.mrf.mxu0
      %1553 = vmatprep.mubr.bf16.mxu0 0
      %1554 = vmatmul.mubr.bf16.gmra.mxu0 %v1444
      %v1555 = vpop.f32.mrf.mxu0
      %v1556 = vadd.f32 0.0, %v1555
      %v1557 = vpop.f32.mrf.mxu0
      %v1558 = vpop.f32.mrf.mxu0
      %v1559 = vadd.f32 0.0, %v1558
      %v1560 = vpop.f32.mrf.mxu0
      %1561 = vdwg.mxu0
      %v1562 = vadd.f32 %v1410, %v1532
      %v1563 = vadd.f32 %v1411, %v1535
      %v1564 = vadd.f32 %v1412, %v1540
      %v1565 = vadd.f32 %v1413, %v1543
      %v1566 = vadd.f32 %v1414, %v1548
      %v1567 = vadd.f32 %v1415, %v1551
      %v1568 = vadd.f32 %v1416, %v1556
      %v1569 = vadd.f32 %v1417, %v1559
      %s1570 = scalar_lea.vmem %s1, 384
      %v1571 = vld [vmem:[%s1570] sm:$0xf]
      %v1572 = vld [vmem:[%s1570 + $0x4] sm:$0xf]
      %v1573 = vld [vmem:[%s1570 + $0x8] sm:$0xf]
      %v1574 = vld [vmem:[%s1570 + $0xc] sm:$0xf]
      %v1575 = vld [vmem:[%s1570 + $0x10] sm:$0xf]
      %v1576 = vld [vmem:[%s1570 + $0x14] sm:$0xf]
      %v1577 = vld [vmem:[%s1570 + $0x18] sm:$0xf]
      %v1578 = vld [vmem:[%s1570 + $0x1c] sm:$0xf]
      %v1579 = vld [vmem:[%s1570 + $0x20] sm:$0xf]
      %v1580 = vld [vmem:[%s1570 + $0x24] sm:$0xf]
      %v1581 = vld [vmem:[%s1570 + $0x28] sm:$0xf]
      %v1582 = vld [vmem:[%s1570 + $0x2c] sm:$0xf]
      %v1583 = vld [vmem:[%s1570 + $0x30] sm:$0xf]
      %v1584 = vld [vmem:[%s1570 + $0x34] sm:$0xf]
      %v1585 = vld [vmem:[%s1570 + $0x38] sm:$0xf]
      %v1586 = vld [vmem:[%s1570 + $0x3c] sm:$0xf]
      %v1588 = vunpack.c.l.b16 %v496
      %v1589 = vpack.c.b16 %v1588, %v1127
      %v1607 = vunpack.c.l.b16 %v1571
      %v1608 = vunpack.c.l.b16 %v1572
      %v1609 = vunpack.c.l.b16 %v1573
      %v1610 = vunpack.c.l.b16 %v1574
      %v1611 = vunpack.c.l.b16 %v1575
      %v1612 = vunpack.c.l.b16 %v1576
      %v1613 = vunpack.c.l.b16 %v1577
      %v1614 = vunpack.c.l.b16 %v1578
      %v1615 = vunpack.c.l.b16 %v1579
      %v1616 = vunpack.c.l.b16 %v1580
      %v1617 = vunpack.c.l.b16 %v1581
      %v1618 = vunpack.c.l.b16 %v1582
      %v1619 = vunpack.c.l.b16 %v1583
      %v1620 = vunpack.c.l.b16 %v1584
      %v1621 = vunpack.c.l.b16 %v1585
      %v1622 = vunpack.c.l.b16 %v1586
      %v1623 = vpack.c.b16 %v1608, %v1607
      %v1624 = vpack.c.b16 %v1610, %v1609
      %v1625 = vpack.c.b16 %v1612, %v1611
      %v1626 = vpack.c.b16 %v1614, %v1613
      %v1627 = vpack.c.b16 %v1616, %v1615
      %v1628 = vpack.c.b16 %v1618, %v1617
      %v1629 = vpack.c.b16 %v1620, %v1619
      %v1630 = vpack.c.b16 %v1622, %v1621
      %1639 = vmatprep.subr.bf16.mxu0 0
      %1640 = vmatpush1.bf16.msra.mxu0 %v1630
      %1641 = vmatprep.subr.bf16.mxu0 0
      %1642 = vmatpush1.bf16.msra.mxu0 %v1629
      %1643 = vmatprep.subr.bf16.mxu0 0
      %1644 = vmatpush1.bf16.msra.mxu0 %v1628
      %1645 = vmatprep.subr.bf16.mxu0 0
      %1646 = vmatpush1.bf16.msra.mxu0 %v1627
      %1647 = vmatprep.subr.bf16.mxu0 0
      %1648 = vmatpush1.bf16.msra.mxu0 %v1626
      %1649 = vmatprep.subr.bf16.mxu0 0
      %1650 = vmatpush1.bf16.msra.mxu0 %v1625
      %1651 = vmatprep.subr.bf16.mxu0 0
      %1652 = vmatpush1.bf16.msra.mxu0 %v1624
      %1653 = vmatprep.subr.bf16.mxu0 0
      %1654 = vmatpush1.bf16.msra.mxu0 %v1623
      %1655 = vmatprep.subr.bf16.mxu0 0
      %1656 = vmatpush2.bf16.msra.mxu0 0
      %1657 = vmatprep.subr.bf16.mxu0 0
      %1658 = vmatpush2.bf16.msra.mxu0 0
      %1659 = vmatprep.subr.bf16.mxu0 0
      %1660 = vmatpush2.bf16.msra.mxu0 0
      %1661 = vmatprep.subr.bf16.mxu0 0
      %1662 = vmatpush2.bf16.msra.mxu0 0
      %1663 = vmatprep.subr.bf16.mxu0 0
      %1664 = vmatpush2.bf16.msra.mxu0 0
      %1665 = vmatprep.subr.bf16.mxu0 0
      %1666 = vmatpush2.bf16.msra.mxu0 0
      %1667 = vmatprep.subr.bf16.mxu0 0
      %1668 = vmatpush2.bf16.msra.mxu0 0
      %1669 = vmatprep.subr.bf16.mxu0 0
      %1670 = vmatpush2.bf16.msra.mxu0 0
      %1671 = vmatprep.mubr.bf16.mxu0 0
      %1672 = vmatmul.mubr.bf16.gmra.mxu0 %v792
      %v1673 = vpop.f32.mrf.mxu0
      %v1674 = vadd.f32 0.0, %v1673
      %v1675 = vpop.f32.mrf.mxu0
      %v1676 = vpop.f32.mrf.mxu0
      %v1677 = vadd.f32 0.0, %v1676
      %v1678 = vpop.f32.mrf.mxu0
      %1679 = vmatprep.mubr.bf16.mxu0 0
      %1680 = vmatmul.mubr.bf16.gmra.mxu0 %v793
      %v1681 = vpop.f32.mrf.mxu0
      %v1682 = vadd.f32 0.0, %v1681
      %v1683 = vpop.f32.mrf.mxu0
      %v1684 = vpop.f32.mrf.mxu0
      %v1685 = vadd.f32 0.0, %v1684
      %v1686 = vpop.f32.mrf.mxu0
      %1687 = vmatprep.mubr.bf16.mxu0 0
      %1688 = vmatmul.mubr.bf16.gmra.mxu0 %v794
      %v1689 = vpop.f32.mrf.mxu0
      %v1690 = vadd.f32 0.0, %v1689
      %v1691 = vpop.f32.mrf.mxu0
      %v1692 = vpop.f32.mrf.mxu0
      %v1693 = vadd.f32 0.0, %v1692
      %v1694 = vpop.f32.mrf.mxu0
      %1695 = vmatprep.mubr.bf16.mxu0 0
      %1696 = vmatmul.mubr.bf16.gmra.mxu0 %v1589
      %v1697 = vpop.f32.mrf.mxu0
      %v1698 = vadd.f32 0.0, %v1697
      %v1699 = vpop.f32.mrf.mxu0
      %v1700 = vpop.f32.mrf.mxu0
      %v1701 = vadd.f32 0.0, %v1700
      %v1702 = vpop.f32.mrf.mxu0
      %1703 = vdwg.mxu0
      %v1704 = vadd.f32 %v1562, %v1674
      %v1705 = vadd.f32 %v1563, %v1677
      %v1706 = vadd.f32 %v1564, %v1682
      %v1707 = vadd.f32 %v1565, %v1685
      %v1708 = vadd.f32 %v1566, %v1690
      %v1709 = vadd.f32 %v1567, %v1693
      %v1710 = vadd.f32 %v1568, %v1698
      %v1711 = vadd.f32 %v1569, %v1701
      %v1713 = vshrl.u32 %v496, 16
      %v1715 = vrot.slane %v1713, 4
      %v1716 = vshll.u32 %v496, 16
      %v1718 = vrot.slane %v1716, 5
      %v1719 = vor.u32 %v1715, %v1718
      %v1720 = vrot.slane %v1719, 4
      %v1722 = vshll.u32 %v497, 16
      %v1724 = vrot.slane %v1722, 5
      %v1725 = vsel %vm516, %v1720, %v1724
      %s1726 = scalar_lea.vmem %s1, 448
      %v1727 = vld [vmem:[%s1726] sm:$0xf]
      %v1728 = vld [vmem:[%s1726 + $0x4] sm:$0xf]
      %v1729 = vld [vmem:[%s1726 + $0x8] sm:$0xf]
      %v1730 = vld [vmem:[%s1726 + $0xc] sm:$0xf]
      %v1731 = vld [vmem:[%s1726 + $0x10] sm:$0xf]
      %v1732 = vld [vmem:[%s1726 + $0x14] sm:$0xf]
      %v1733 = vld [vmem:[%s1726 + $0x18] sm:$0xf]
      %v1734 = vld [vmem:[%s1726 + $0x1c] sm:$0xf]
      %v1735 = vld [vmem:[%s1726 + $0x20] sm:$0xf]
      %v1736 = vld [vmem:[%s1726 + $0x24] sm:$0xf]
      %v1737 = vld [vmem:[%s1726 + $0x28] sm:$0xf]
      %v1738 = vld [vmem:[%s1726 + $0x2c] sm:$0xf]
      %v1739 = vld [vmem:[%s1726 + $0x30] sm:$0xf]
      %v1740 = vld [vmem:[%s1726 + $0x34] sm:$0xf]
      %v1741 = vld [vmem:[%s1726 + $0x38] sm:$0xf]
      %v1742 = vld [vmem:[%s1726 + $0x3c] sm:$0xf]
      %v1743 = vunpack.c.l.b16 %v1725
      %v1744 = vpack.c.b16 %v1743, %v1288
      %v1762 = vunpack.c.l.b16 %v1727
      %v1763 = vunpack.c.l.b16 %v1728
      %v1764 = vunpack.c.l.b16 %v1729
      %v1765 = vunpack.c.l.b16 %v1730
      %v1766 = vunpack.c.l.b16 %v1731
      %v1767 = vunpack.c.l.b16 %v1732
      %v1768 = vunpack.c.l.b16 %v1733
      %v1769 = vunpack.c.l.b16 %v1734
      %v1770 = vunpack.c.l.b16 %v1735
      %v1771 = vunpack.c.l.b16 %v1736
      %v1772 = vunpack.c.l.b16 %v1737
      %v1773 = vunpack.c.l.b16 %v1738
      %v1774 = vunpack.c.l.b16 %v1739
      %v1775 = vunpack.c.l.b16 %v1740
      %v1776 = vunpack.c.l.b16 %v1741
      %v1777 = vunpack.c.l.b16 %v1742
      %v1778 = vpack.c.b16 %v1763, %v1762
      %v1779 = vpack.c.b16 %v1765, %v1764
      %v1780 = vpack.c.b16 %v1767, %v1766
      %v1781 = vpack.c.b16 %v1769, %v1768
      %v1782 = vpack.c.b16 %v1771, %v1770
      %v1783 = vpack.c.b16 %v1773, %v1772
      %v1784 = vpack.c.b16 %v1775, %v1774
      %v1785 = vpack.c.b16 %v1777, %v1776
      %1794 = vmatprep.subr.bf16.mxu0 0
      %1795 = vmatpush1.bf16.msra.mxu0 %v1785
      %1796 = vmatprep.subr.bf16.mxu0 0
      %1797 = vmatpush1.bf16.msra.mxu0 %v1784
      %1798 = vmatprep.subr.bf16.mxu0 0
      %1799 = vmatpush1.bf16.msra.mxu0 %v1783
      %1800 = vmatprep.subr.bf16.mxu0 0
      %1801 = vmatpush1.bf16.msra.mxu0 %v1782
      %1802 = vmatprep.subr.bf16.mxu0 0
      %1803 = vmatpush1.bf16.msra.mxu0 %v1781
      %1804 = vmatprep.subr.bf16.mxu0 0
      %1805 = vmatpush1.bf16.msra.mxu0 %v1780
      %1806 = vmatprep.subr.bf16.mxu0 0
      %1807 = vmatpush1.bf16.msra.mxu0 %v1779
      %1808 = vmatprep.subr.bf16.mxu0 0
      %1809 = vmatpush1.bf16.msra.mxu0 %v1778
      %1810 = vmatprep.subr.bf16.mxu0 0
      %1811 = vmatpush2.bf16.msra.mxu0 0
      %1812 = vmatprep.subr.bf16.mxu0 0
      %1813 = vmatpush2.bf16.msra.mxu0 0
      %1814 = vmatprep.subr.bf16.mxu0 0
      %1815 = vmatpush2.bf16.msra.mxu0 0
      %1816 = vmatprep.subr.bf16.mxu0 0
      %1817 = vmatpush2.bf16.msra.mxu0 0
      %1818 = vmatprep.subr.bf16.mxu0 0
      %1819 = vmatpush2.bf16.msra.mxu0 0
      %1820 = vmatprep.subr.bf16.mxu0 0
      %1821 = vmatpush2.bf16.msra.mxu0 0
      %1822 = vmatprep.subr.bf16.mxu0 0
      %1823 = vmatpush2.bf16.msra.mxu0 0
      %1824 = vmatprep.subr.bf16.mxu0 0
      %1825 = vmatpush2.bf16.msra.mxu0 0
      %1826 = vmatprep.mubr.bf16.mxu0 0
      %1827 = vmatmul.mubr.bf16.gmra.mxu0 %v655
      %v1828 = vpop.f32.mrf.mxu0
      %v1829 = vadd.f32 0.0, %v1828
      %v1830 = vpop.f32.mrf.mxu0
      %v1831 = vpop.f32.mrf.mxu0
      %v1832 = vadd.f32 0.0, %v1831
      %v1833 = vpop.f32.mrf.mxu0
      %1834 = vmatprep.mubr.bf16.mxu0 0
      %1835 = vmatmul.mubr.bf16.gmra.mxu0 %v656
      %v1836 = vpop.f32.mrf.mxu0
      %v1837 = vadd.f32 0.0, %v1836
      %v1838 = vpop.f32.mrf.mxu0
      %v1839 = vpop.f32.mrf.mxu0
      %v1840 = vadd.f32 0.0, %v1839
      %v1841 = vpop.f32.mrf.mxu0
      %1842 = vmatprep.mubr.bf16.mxu0 0
      %1843 = vmatmul.mubr.bf16.gmra.mxu0 %v657
      %v1844 = vpop.f32.mrf.mxu0
      %v1845 = vadd.f32 0.0, %v1844
      %v1846 = vpop.f32.mrf.mxu0
      %v1847 = vpop.f32.mrf.mxu0
      %v1848 = vadd.f32 0.0, %v1847
      %v1849 = vpop.f32.mrf.mxu0
      %1850 = vmatprep.mubr.bf16.mxu0 0
      %1851 = vmatmul.mubr.bf16.gmra.mxu0 %v1744
      %v1852 = vpop.f32.mrf.mxu0
      %v1853 = vadd.f32 0.0, %v1852
      %v1854 = vpop.f32.mrf.mxu0
      %v1855 = vpop.f32.mrf.mxu0
      %v1856 = vadd.f32 0.0, %v1855
      %v1857 = vpop.f32.mrf.mxu0
      %1858 = vdwg.mxu0
      %v1859 = vadd.f32 %v1704, %v1829
      %v1860 = vadd.f32 %v1705, %v1832
      %v1861 = vadd.f32 %v1706, %v1837
      %v1862 = vadd.f32 %v1707, %v1840
      %v1863 = vadd.f32 %v1708, %v1845
      %v1864 = vadd.f32 %v1709, %v1848
      %v1865 = vadd.f32 %v1710, %v1853
      %v1866 = vadd.f32 %v1711, %v1856
      %v1868 = vrot.slane %v496, 5
      %v1869 = vrot.slane %v1868, 4
      %v1870 = vrot.slane %v497, 5
      %v1871 = vsel %vm922, %v1869, %v1870
      %s1872 = scalar_lea.vmem %s1, 512
      %v1873 = vld [vmem:[%s1872] sm:$0xf]
      %v1874 = vld [vmem:[%s1872 + $0x4] sm:$0xf]
      %v1875 = vld [vmem:[%s1872 + $0x8] sm:$0xf]
      %v1876 = vld [vmem:[%s1872 + $0xc] sm:$0xf]
      %v1877 = vld [vmem:[%s1872 + $0x10] sm:$0xf]
      %v1878 = vld [vmem:[%s1872 + $0x14] sm:$0xf]
      %v1879 = vld [vmem:[%s1872 + $0x18] sm:$0xf]
      %v1880 = vld [vmem:[%s1872 + $0x1c] sm:$0xf]
      %v1881 = vld [vmem:[%s1872 + $0x20] sm:$0xf]
      %v1882 = vld [vmem:[%s1872 + $0x24] sm:$0xf]
      %v1883 = vld [vmem:[%s1872 + $0x28] sm:$0xf]
      %v1884 = vld [vmem:[%s1872 + $0x2c] sm:$0xf]
      %v1885 = vld [vmem:[%s1872 + $0x30] sm:$0xf]
      %v1886 = vld [vmem:[%s1872 + $0x34] sm:$0xf]
      %v1887 = vld [vmem:[%s1872 + $0x38] sm:$0xf]
      %v1888 = vld [vmem:[%s1872 + $0x3c] sm:$0xf]
      %v1889 = vunpack.c.l.b16 %v1871
      %v1890 = vpack.c.b16 %v1889, %v1440
      %v1908 = vunpack.c.l.b16 %v1873
      %v1909 = vunpack.c.l.b16 %v1874
      %v1910 = vunpack.c.l.b16 %v1875
      %v1911 = vunpack.c.l.b16 %v1876
      %v1912 = vunpack.c.l.b16 %v1877
      %v1913 = vunpack.c.l.b16 %v1878
      %v1914 = vunpack.c.l.b16 %v1879
      %v1915 = vunpack.c.l.b16 %v1880
      %v1916 = vunpack.c.l.b16 %v1881
      %v1917 = vunpack.c.l.b16 %v1882
      %v1918 = vunpack.c.l.b16 %v1883
      %v1919 = vunpack.c.l.b16 %v1884
      %v1920 = vunpack.c.l.b16 %v1885
      %v1921 = vunpack.c.l.b16 %v1886
      %v1922 = vunpack.c.l.b16 %v1887
      %v1923 = vunpack.c.l.b16 %v1888
      %v1924 = vpack.c.b16 %v1909, %v1908
      %v1925 = vpack.c.b16 %v1911, %v1910
      %v1926 = vpack.c.b16 %v1913, %v1912
      %v1927 = vpack.c.b16 %v1915, %v1914
      %v1928 = vpack.c.b16 %v1917, %v1916
      %v1929 = vpack.c.b16 %v1919, %v1918
      %v1930 = vpack.c.b16 %v1921, %v1920
      %v1931 = vpack.c.b16 %v1923, %v1922
      %1940 = vmatprep.subr.bf16.mxu0 0
      %1941 = vmatpush1.bf16.msra.mxu0 %v1931
      %1942 = vmatprep.subr.bf16.mxu0 0
      %1943 = vmatpush1.bf16.msra.mxu0 %v1930
      %1944 = vmatprep.subr.bf16.mxu0 0
      %1945 = vmatpush1.bf16.msra.mxu0 %v1929
      %1946 = vmatprep.subr.bf16.mxu0 0
      %1947 = vmatpush1.bf16.msra.mxu0 %v1928
      %1948 = vmatprep.subr.bf16.mxu0 0
      %1949 = vmatpush1.bf16.msra.mxu0 %v1927
      %1950 = vmatprep.subr.bf16.mxu0 0
      %1951 = vmatpush1.bf16.msra.mxu0 %v1926
      %1952 = vmatprep.subr.bf16.mxu0 0
      %1953 = vmatpush1.bf16.msra.mxu0 %v1925
      %1954 = vmatprep.subr.bf16.mxu0 0
      %1955 = vmatpush1.bf16.msra.mxu0 %v1924
      %1956 = vmatprep.subr.bf16.mxu0 0
      %1957 = vmatpush2.bf16.msra.mxu0 0
      %1958 = vmatprep.subr.bf16.mxu0 0
      %1959 = vmatpush2.bf16.msra.mxu0 0
      %1960 = vmatprep.subr.bf16.mxu0 0
      %1961 = vmatpush2.bf16.msra.mxu0 0
      %1962 = vmatprep.subr.bf16.mxu0 0
      %1963 = vmatpush2.bf16.msra.mxu0 0
      %1964 = vmatprep.subr.bf16.mxu0 0
      %1965 = vmatpush2.bf16.msra.mxu0 0
      %1966 = vmatprep.subr.bf16.mxu0 0
      %1967 = vmatpush2.bf16.msra.mxu0 0
      %1968 = vmatprep.subr.bf16.mxu0 0
      %1969 = vmatpush2.bf16.msra.mxu0 0
      %1970 = vmatprep.subr.bf16.mxu0 0
      %1971 = vmatpush2.bf16.msra.mxu0 0
      %1972 = vmatprep.mubr.bf16.mxu0 0
      %1973 = vmatmul.mubr.bf16.gmra.mxu0 %v981
      %v1974 = vpop.f32.mrf.mxu0
      %v1975 = vadd.f32 0.0, %v1974
      %v1976 = vpop.f32.mrf.mxu0
      %v1977 = vpop.f32.mrf.mxu0
      %v1978 = vadd.f32 0.0, %v1977
      %v1979 = vpop.f32.mrf.mxu0
      %1980 = vmatprep.mubr.bf16.mxu0 0
      %1981 = vmatmul.mubr.bf16.gmra.mxu0 %v982
      %v1982 = vpop.f32.mrf.mxu0
      %v1983 = vadd.f32 0.0, %v1982
      %v1984 = vpop.f32.mrf.mxu0
      %v1985 = vpop.f32.mrf.mxu0
      %v1986 = vadd.f32 0.0, %v1985
      %v1987 = vpop.f32.mrf.mxu0
      %1988 = vmatprep.mubr.bf16.mxu0 0
      %1989 = vmatmul.mubr.bf16.gmra.mxu0 %v983
      %v1990 = vpop.f32.mrf.mxu0
      %v1991 = vadd.f32 0.0, %v1990
      %v1992 = vpop.f32.mrf.mxu0
      %v1993 = vpop.f32.mrf.mxu0
      %v1994 = vadd.f32 0.0, %v1993
      %v1995 = vpop.f32.mrf.mxu0
      %1996 = vmatprep.mubr.bf16.mxu0 0
      %1997 = vmatmul.mubr.bf16.gmra.mxu0 %v1890
      %v1998 = vpop.f32.mrf.mxu0
      %v1999 = vadd.f32 0.0, %v1998
      %v2000 = vpop.f32.mrf.mxu0
      %v2001 = vpop.f32.mrf.mxu0
      %v2002 = vadd.f32 0.0, %v2001
      %v2003 = vpop.f32.mrf.mxu0
      %2004 = vdwg.mxu0
      %v2005 = vadd.f32 %v1859, %v1975
      %v2006 = vadd.f32 %v1860, %v1978
      %v2007 = vadd.f32 %v1861, %v1983
      %v2008 = vadd.f32 %v1862, %v1986
      %v2009 = vadd.f32 %v1863, %v1991
      %v2010 = vadd.f32 %v1864, %v1994
      %v2011 = vadd.f32 %v1865, %v1999
      %v2012 = vadd.f32 %v1866, %v2002
      %v2013 = vpack.c.bf16 %v2006, %v2005
      %v2014 = vpack.c.bf16 %v2008, %v2007
      %v2015 = vpack.c.bf16 %v2010, %v2009
      %v2016 = vpack.c.bf16 %v2012, %v2011
      %v2021 = vunpack.c.l.b16 %v2013
      %v2022 = vunpack.c.h.b16 %v2013
      %v2023 = vunpack.c.l.b16 %v2014
      %v2024 = vunpack.c.h.b16 %v2014
      %v2025 = vunpack.c.l.b16 %v2015
      %v2026 = vunpack.c.h.b16 %v2015
      %v2027 = vunpack.c.l.b16 %v2016
      %v2028 = vunpack.c.h.b16 %v2016
      %v2029 = vpack.c.b16 %v2021, %v2021
      %v2030 = vpack.c.b16 %v2022, %v2022
      %v2031 = vpack.c.b16 %v2023, %v2023
      %v2032 = vpack.c.b16 %v2024, %v2024
      %v2033 = vpack.c.b16 %v2025, %v2025
      %v2034 = vpack.c.b16 %v2026, %v2026
      %v2035 = vpack.c.b16 %v2027, %v2027
      %v2036 = vpack.c.b16 %v2028, %v2028
      %2045 = vst [vmem:[%s231] sm:$0xf] %v2029
      %2046 = vst [vmem:[%s231 + $0x4] sm:$0xf] %v2030
      %2047 = vst [vmem:[%s231 + $0x8] sm:$0xf] %v2031
      %2048 = vst [vmem:[%s231 + $0xc] sm:$0xf] %v2032
      %2049 = vst [vmem:[%s231 + $0x10] sm:$0xf] %v2033
      %2050 = vst [vmem:[%s231 + $0x14] sm:$0xf] %v2034
      %2051 = vst [vmem:[%s231 + $0x18] sm:$0xf] %v2035
      %2052 = vst [vmem:[%s231 + $0x1c] sm:$0xf] %v2036
      %v2053 = vadd.f32 %v2005, %v2006
      %v2054 = vadd.f32 %v2053, %v2007
      %v2055 = vadd.f32 %v2054, %v2008
      %v2056 = vadd.f32 %v2055, %v2009
      %v2057 = vadd.f32 %v2056, %v2010
      %v2058 = vadd.f32 %v2057, %v2011
      %v2059 = vadd.f32 %v2058, %v2012
      %v2060 = vrot.slane %v2059, 4
      %v2061 = vadd.f32 %v2059, %v2060
      %v2062 = vrot.slane %v2061, 2
      %v2063 = vadd.f32 %v2061, %v2062
      %v2064 = vrot.slane %v2063, 1
      %v2065 = vadd.f32 %v2063, %v2064
      %2066 = vst [vmem:[%s235] sm:$0x1] %v2065
      %v2067 = vmul.f32 %v2005, %v2005
      %v2068 = vmul.f32 %v2006, %v2006
      %v2069 = vmul.f32 %v2007, %v2007
      %v2070 = vmul.f32 %v2008, %v2008
      %v2071 = vmul.f32 %v2009, %v2009
      %v2072 = vmul.f32 %v2010, %v2010
      %v2073 = vmul.f32 %v2011, %v2011
      %v2074 = vmul.f32 %v2012, %v2012
      %v2075 = vadd.f32 %v2067, %v2068
      %v2076 = vadd.f32 %v2075, %v2069
      %v2077 = vadd.f32 %v2076, %v2070
      %v2078 = vadd.f32 %v2077, %v2071
      %v2079 = vadd.f32 %v2078, %v2072
      %v2080 = vadd.f32 %v2079, %v2073
      %v2081 = vadd.f32 %v2080, %v2074
      %v2082 = vrot.slane %v2081, 4
      %v2083 = vadd.f32 %v2081, %v2082
      %v2084 = vrot.slane %v2083, 2
      %v2085 = vadd.f32 %v2083, %v2084
      %v2086 = vrot.slane %v2085, 1
      %v2087 = vadd.f32 %v2085, %v2086
      %2088 = vst [vmem:[%s235 + $0x1] sm:$0x1] %v2087
      %p2089 = scmp.lt.s32.totalorder %s17, 1
      %s2090 = scalar_select %p2089, %s17, 1
      %s2091 = smul.addr %s2090, 8
      %s2092 = smul.addr %s2091, 4
      %s2093 = scalar_lea.vmem %s4, %s2092
      %p2094 = scmp.lt.s32.totalorder %s17, 1
      %s2095 = scalar_select %p2094, %s17, 1
      %s2096 = smul.addr %s2095, 2
      %s2097 = scalar_lea.vmem %s5, %s2096
      // Predicated region
      $region37: #{basic_block_forward.5} parent=35 // pred_check
        %p2098 = pneg %p124
      $region38: #{basic_block_forward.5} parent=35 // pred_check_branch
        %2100 = sbr.rel (%p2098) target = $region40
      $region39: #{basic_block_forward.5} parent=35 // pred_region
        _
      $region40: #{basic_block_forward.5} parent=35 // pred_fallthru
        _
      // Predicated region
      $region41: #{basic_block_forward.5} parent=35 // pred_check
        %p2101 = pneg %p150
      $region42: #{basic_block_forward.5} parent=35 // pred_check_branch
        %2103 = sbr.rel (%p2101) target = $region44
      $region43: #{basic_block_forward.5} parent=35 // pred_region
        _
      $region44: #{basic_block_forward.5} parent=35 // pred_fallthru
        _
    $region36: #{basic_block_forward.5} parent=5 // pred_fallthru
      _
    %p2104 = scmp.le.s32.totalorder 2, %s12
    // Predicated region
    $region45: #{basic_block_forward.5} parent=5 // pred_check
      %p2105 = pneg %p2104
    $region46: #{basic_block_forward.5} parent=5 // pred_check_branch
      %2107 = sbr.rel (%p2105) target = $region48
    $region47: #{basic_block_forward.5} parent=5 // pred_region
      %s2108 = ssub.s32 %s12, 2
      // Predicated region
      $region49: #{basic_block_forward.5} parent=47 // pred_check
        %p2109 = pneg %p130
      $region50: #{basic_block_forward.5} parent=47 // pred_check_branch
        %2111 = sbr.rel (%p2109) target = $region52
      $region51: #{basic_block_forward.5} parent=47 // pred_region
        %p2112 = scmp.lt.s32.totalorder %s18, 1
        %s2113 = scalar_select %p2112, %s18, 1
        %s2114 = smul.addr %s2113, 8
        %s2115 = smul.addr %s2114, 4
        %s2116 = scalar_lea.vmem %s4, %s2115
      $region52: #{basic_block_forward.5} parent=47 // pred_fallthru
        _
      // Predicated region
      $region53: #{basic_block_forward.5} parent=47 // pred_check
        %p2117 = pneg %p156
      $region54: #{basic_block_forward.5} parent=47 // pred_check_branch
        %2119 = sbr.rel (%p2117) target = $region56
      $region55: #{basic_block_forward.5} parent=47 // pred_region
        %p2120 = scmp.lt.s32.totalorder %s18, 1
        %s2121 = scalar_select %p2120, %s18, 1
        %s2122 = smul.addr %s2121, 2
        %s2123 = scalar_lea.vmem %s5, %s2122
      $region56: #{basic_block_forward.5} parent=47 // pred_fallthru
        _
    $region48: #{basic_block_forward.5} parent=5 // pred_fallthru
      _
  $region6: #{basic_block_forward.5} parent=0 // loop_footer
    %s16 = sadd.s32 1, %s12
  $region7: #{basic_block_forward.5} parent=0 // loop_footer_branch
    %11 = sbr.rel target = $region3
  $region8: #{basic_block_forward.5} parent=0 // loop_exit
    _

</llo_original>
